<compile_context>
chip_gen: v5e
topology: v5e:2x2
jax: 0.10.0
libtpu: 0.0.40
codegen_flags: <defaults>
</compile_context>

<pallas_src>
import functools

import jax
import jax.numpy as jnp
from jax import lax
from jax.experimental import pallas as pl
from jax.experimental.pallas import tpu as pltpu

NUM_CLASSES = 101
_LANE = 128
_SUBLANE = 8


def _round_up(n, m):
    return ((n + m - 1) // m) * m


# ----------------------------------------------------------------------------
# Fused kernel: all LSTM layers + classifier head, grid over time blocks.
# ----------------------------------------------------------------------------
def _fused_rnn_kernel(*refs, num_layers, hidden_pad, time_block, batch_pad):
    x_ref = refs[0]
    lstm_refs = refs[1:1 + 3 * num_layers]            # (wx, wh, bias) per layer
    (w1_ref, b1_ref, w2_ref, b2_ref, mask_ref,
     out_ref, h_scr, c_scr, seq_scr, xproj_scr) = refs[1 + 3 * num_layers:]

    tb = pl.program_id(0)
    G = 4 * hidden_pad

    @pl.when(tb == 0)
    def _():
        h_scr[...] = jnp.zeros_like(h_scr)
        c_scr[...] = jnp.zeros_like(c_scr)

    for layer in range(num_layers):                   # static Python loop over layers
        wx = lstm_refs[3 * layer][...]                # (d_in_pad, 4H_pad) bf16
        wh = lstm_refs[3 * layer + 1][...]            # (H_pad,   4H_pad) bf16
        # Hoisted: one bias broadcast per (layer, block), not one per time step.
        bias = jnp.broadcast_to(lstm_refs[3 * layer + 2][...], (batch_pad, G))

        # ---- Batched input projection for the whole time block: one large MXU
        # ---- matmul off the recurrent critical path -> time-major scratch.
        if layer == 0:
            x_blk = x_ref[...]                                       # (B, tb, D_pad) f32
            xp = jnp.dot(
                x_blk.reshape(batch_pad * time_block, -1).astype(jnp.bfloat16),
                wx, preferred_element_type=jnp.float32)              # (B*tb, 4H)
            xp = xp.reshape(batch_pad, time_block, G)
            for t in range(time_block):       # batch-major -> time-major, once per block
                xproj_scr[t] = xp[:, t, :]
        else:
            inp = seq_scr[...].reshape(time_block * batch_pad, hidden_pad)
            xp = jnp.dot(inp.astype(jnp.bfloat16), wx,
                         preferred_element_type=jnp.float32)
            xproj_scr[...] = xp.reshape(time_block, batch_pad, G)

        is_top = layer == num_layers - 1

        def step(t, carry, _wh=wh, _bias=bias, _is_top=is_top):
            h, c = carry
            # Only the (B, H) @ (H, 4H) recurrent GEMM stays on the critical path.
            gates = (jnp.dot(h.astype(jnp.bfloat16), _wh,
                             preferred_element_type=jnp.float32)
                     + xproj_scr[t] + _bias)
            # Gate slices are lane-aligned 128-wide tiles (H padded to 128).
            i_g = jax.nn.sigmoid(gates[:, 0:hidden_pad])
            f_g = jax.nn.sigmoid(gates[:, hidden_pad:2 * hidden_pad])
            g_g = jnp.tanh(gates[:, 2 * hidden_pad:3 * hidden_pad])
            o_g = jax.nn.sigmoid(gates[:, 3 * hidden_pad:4 * hidden_pad])
            c_new = f_g * c + i_g * g_g
            h_new = o_g * jnp.tanh(c_new)
            if not _is_top:                    # only lower layers feed a next layer
                seq_scr[t] = h_new
            return h_new, c_new

        h_fin, c_fin = lax.fori_loop(0, time_block, step,
                                     (h_scr[layer], c_scr[layer]),
                                     unroll=min(time_block, 8))
        h_scr[layer] = h_fin
        c_scr[layer] = c_fin

    # Head runs once, on the last time block: fc1 -> relu -> dropout -> fc2.
    @pl.when(tb == pl.num_programs(0) - 1)
    def _():
        h_last = h_scr[num_layers - 1]         # == LSTM_output[:, -1, :]
        z = jnp.dot(h_last.astype(jnp.bfloat16), w1_ref[...],
                    preferred_element_type=jnp.float32) + b1_ref[...]
        z = jnp.maximum(z, 0.0) * mask_ref[...]        # relu + precomputed dropout mask
        out_ref[...] = (jnp.dot(z.astype(jnp.bfloat16), w2_ref[...],
                                preferred_element_type=jnp.float32)
                        + b2_ref[...])                 # (B_pad, C_pad) lane-dense


# ----------------------------------------------------------------------------
# Parameter construction (PyTorch-equivalent init, padded / bf16 kernel layouts).
# ----------------------------------------------------------------------------
def _pad_gate_w(w, in_dim_pad, hidden, hidden_pad):
    """PyTorch (4H, in_dim) gate weight -> transposed, gate-padded (in_dim_pad, 4*H_pad)."""
    in_dim = w.shape[1]
    out = jnp.zeros((in_dim_pad, 4 * hidden_pad), jnp.float32)
    for g in range(4):
        blk = w[g * hidden:(g + 1) * hidden, :].T               # (in_dim, H)
        out = out.at[:in_dim, g * hidden_pad:g * hidden_pad + hidden].set(blk)
    return out


def _pad_gate_b(b, hidden, hidden_pad):
    out = jnp.zeros((1, 4 * hidden_pad), jnp.float32)
    for g in range(4):
        out = out.at[0, g * hidden_pad:g * hidden_pad + hidden].set(
            b[g * hidden:(g + 1) * hidden])
    return out


def init_params(key, cnn_embed_dim, h_rnn_layers, h_rnn, h_fc_dim):
    D_pad = _round_up(cnn_embed_dim, _LANE)
    H_pad = _round_up(h_rnn, _LANE)
    F_pad = _round_up(h_fc_dim, _LANE)
    C_pad = _round_up(NUM_CLASSES, _LANE)
    params = {"lstm": [],
              "dims": (cnn_embed_dim, h_rnn, h_fc_dim, D_pad, H_pad, F_pad, C_pad)}

    k_lstm = 1.0 / (h_rnn ** 0.5)
    for layer in range(h_rnn_layers):
        in_dim = cnn_embed_dim if layer == 0 else h_rnn
        in_pad = D_pad if layer == 0 else H_pad
        key, k1, k2, k3, k4 = jax.random.split(key, 5)
        w_ih = jax.random.uniform(k1, (4 * h_rnn, in_dim), jnp.float32, -k_lstm, k_lstm)
        w_hh = jax.random.uniform(k2, (4 * h_rnn, h_rnn), jnp.float32, -k_lstm, k_lstm)
        b_ih = jax.random.uniform(k3, (4 * h_rnn,), jnp.float32, -k_lstm, k_lstm)
        b_hh = jax.random.uniform(k4, (4 * h_rnn,), jnp.float32, -k_lstm, k_lstm)
        params["lstm"].append({
            "wx": _pad_gate_w(w_ih, in_pad, h_rnn, H_pad).astype(jnp.bfloat16),
            "wh": _pad_gate_w(w_hh, H_pad, h_rnn, H_pad).astype(jnp.bfloat16),
            "b": _pad_gate_b(b_ih + b_hh, h_rnn, H_pad),          # f32 (1, 4H_pad)
        })

    k_fc1 = 1.0 / (h_rnn ** 0.5)
    key, k1, k2 = jax.random.split(key, 3)
    w1 = jax.random.uniform(k1, (h_fc_dim, h_rnn), jnp.float32, -k_fc1, k_fc1)
    b1 = jax.random.uniform(k2, (h_fc_dim,), jnp.float32, -k_fc1, k_fc1)
    params["fc1_w"] = (jnp.zeros((H_pad, F_pad), jnp.float32)
                       .at[:h_rnn, :h_fc_dim].set(w1.T)).astype(jnp.bfloat16)
    params["fc1_b"] = jnp.zeros((1, F_pad), jnp.float32).at[0, :h_fc_dim].set(b1)

    k_fc2 = 1.0 / (h_fc_dim ** 0.5)
    key, k1, k2 = jax.random.split(key, 3)
    w2 = jax.random.uniform(k1, (NUM_CLASSES, h_fc_dim), jnp.float32, -k_fc2, k_fc2)
    b2 = jax.random.uniform(k2, (NUM_CLASSES,), jnp.float32, -k_fc2, k_fc2)
    params["fc2_w"] = (jnp.zeros((F_pad, C_pad), jnp.float32)
                       .at[:h_fc_dim, :NUM_CLASSES].set(w2.T)).astype(jnp.bfloat16)
    params["fc2_b"] = jnp.zeros((1, C_pad), jnp.float32).at[0, :NUM_CLASSES].set(b2)
    return params


# ----------------------------------------------------------------------------
# Forward pass wrapper.
# ----------------------------------------------------------------------------
def rnn_forward(params, x_btd, dropout_key, drop_p, time_block=8):
    """x_btd: (B, T, CNN_embed_dim) f32 -> logits (B, NUM_CLASSES) f32."""
    B, T, D = x_btd.shape
    cnn_dim, h_rnn, h_fc, D_pad, H_pad, F_pad, C_pad = params["dims"]
    assert D == cnn_dim
    num_layers = len(params["lstm"])

    if time_block > T:
        time_block = T
    assert T % time_block == 0, "time_block must divide T"
    # (time_block multiples of 8 keep all in-kernel reshapes sublane-aligned.)
    num_blocks = T // time_block
    B_pad = max(_SUBLANE, _round_up(B, _SUBLANE))

    # Pad batch to sublane height, embed dim to lane width (no host transpose of x).
    x_pad = jnp.zeros((B_pad, T, D_pad), jnp.float32).at[:B, :, :D].set(x_btd)

    # Dropout mask (training=True), jax.random outside the kernel:
    # keep prob = 1 - p, scale 1/(1-p); padded region uses inert 1.0.
    if drop_p > 0.0:
        u = jax.random.uniform(dropout_key, (B, h_fc), jnp.float32)
        m = (u >= drop_p).astype(jnp.float32) * (1.0 / (1.0 - drop_p))
    else:
        m = jnp.ones((B, h_fc), jnp.float32)
    mask = jnp.ones((B_pad, F_pad), jnp.float32).at[:B, :h_fc].set(m)

    def const_spec(shape):
        n = len(shape)
        return pl.BlockSpec(shape, lambda i, _n=n: (0,) * _n)

    in_specs = [pl.BlockSpec((B_pad, time_block, D_pad), lambda i: (0, i, 0))]
    inputs = [x_pad]
    for lp in params["lstm"]:
        for name in ("wx", "wh", "b"):
            in_specs.append(const_spec(lp[name].shape))
            inputs.append(lp[name])
    for name in ("fc1_w", "fc1_b", "fc2_w", "fc2_b"):
        in_specs.append(const_spec(params[name].shape))
        inputs.append(params[name])
    in_specs.append(const_spec(mask.shape))
    inputs.append(mask)

    kernel = functools.partial(
        _fused_rnn_kernel, num_layers=num_layers, hidden_pad=H_pad,
        time_block=time_block, batch_pad=B_pad)

    logits_pad = pl.pallas_call(
        kernel,
        out_shape=jax.ShapeDtypeStruct((B_pad, C_pad), jnp.float32),
        grid_spec=pltpu.PrefetchScalarGridSpec(
            num_scalar_prefetch=0,
            grid=(num_blocks,),
            in_specs=in_specs,
            out_specs=pl.BlockSpec((B_pad, C_pad), lambda i: (0, 0)),
            scratch_shapes=[
                pltpu.VMEM((num_layers, B_pad, H_pad), jnp.float32),      # h carry
                pltpu.VMEM((num_layers, B_pad, H_pad), jnp.float32),      # c carry
                pltpu.VMEM((time_block, B_pad, H_pad), jnp.float32),      # inter-layer acts
                pltpu.VMEM((time_block, B_pad, 4 * H_pad), jnp.float32),  # x-projection
            ],
        ),
        compiler_params=pltpu.CompilerParams(
            dimension_semantics=("arbitrary",),     # time axis carries h/c state
            vmem_limit_bytes=64 * 1024 * 1024,      # raise above default scoped limit
        ),
    )(*inputs)
    return logits_pad[:B, :NUM_CLASSES]


if __name__ == "__main__":
    # Small shapes consistent with the module's forward.
    B, T = 2, 16
    CNN_embed_dim = 32
    h_RNN_layers = 2
    h_RNN = 32
    h_FC_dim = 32
    drop_p = 0.2

    key = jax.random.PRNGKey(0)
    key, k_in, k_param, k_drop = jax.random.split(key, 4)
    x = jax.random.normal(k_in, (B, T, CNN_embed_dim), jnp.float32)
    params = init_params(k_param, CNN_embed_dim, h_RNN_layers, h_RNN, h_FC_dim)

    # time_block=8 -> grid=(2,): exercises the h/c carry across time blocks.
    out = rnn_forward(params, x, k_drop, drop_p, time_block=8)
    out = jax.block_until_ready(out)
    assert out.shape == (B, NUM_CLASSES), out.shape
    assert bool(jnp.all(jnp.isfinite(out)))
    print("KERNEL_OK")
</pallas_src>

<mosaic_0001>
module attributes {stable_mosaic.version = 11 : i64} {
  func.func @_fused_rnn_kernel(%arg0: i32, %arg1: memref<8x8x128xf32, #tpu.memory_space<vmem>>, %arg2: memref<128x512xbf16, #tpu.memory_space<vmem>>, %arg3: memref<128x512xbf16, #tpu.memory_space<vmem>>, %arg4: memref<1x512xf32, #tpu.memory_space<vmem>>, %arg5: memref<128x512xbf16, #tpu.memory_space<vmem>>, %arg6: memref<128x512xbf16, #tpu.memory_space<vmem>>, %arg7: memref<1x512xf32, #tpu.memory_space<vmem>>, %arg8: memref<128x128xbf16, #tpu.memory_space<vmem>>, %arg9: memref<1x128xf32, #tpu.memory_space<vmem>>, %arg10: memref<128x128xbf16, #tpu.memory_space<vmem>>, %arg11: memref<1x128xf32, #tpu.memory_space<vmem>>, %arg12: memref<8x128xf32, #tpu.memory_space<vmem>>, %arg13: memref<8x128xf32, #tpu.memory_space<vmem>>, %arg14: memref<2x8x128xf32, #tpu.memory_space<vmem>>, %arg15: memref<2x8x128xf32, #tpu.memory_space<vmem>>, %arg16: memref<8x8x128xf32, #tpu.memory_space<vmem>>, %arg17: memref<8x8x512xf32, #tpu.memory_space<vmem>>) attributes {dimension_semantics = [#tpu.dimension_semantics<arbitrary>], iteration_bounds = array<i64: 2>, scalar_prefetch = 0 : i64, scratch_operands = 4 : i64, tpu.core_type = #tpu.core_type<tc>, window_params = [{transform_indices = @transform_0, window_bounds = array<i64: 8, 8, 128>}, {pipeline_mode = #tpu.pipeline_mode<synchronous>, transform_indices = @transform_1, window_bounds = array<i64: 128, 512>}, {pipeline_mode = #tpu.pipeline_mode<synchronous>, transform_indices = @transform_2, window_bounds = array<i64: 128, 512>}, {pipeline_mode = #tpu.pipeline_mode<synchronous>, transform_indices = @transform_3, window_bounds = array<i64: 1, 512>}, {pipeline_mode = #tpu.pipeline_mode<synchronous>, transform_indices = @transform_4, window_bounds = array<i64: 128, 512>}, {pipeline_mode = #tpu.pipeline_mode<synchronous>, transform_indices = @transform_5, window_bounds = array<i64: 128, 512>}, {pipeline_mode = #tpu.pipeline_mode<synchronous>, transform_indices = @transform_6, window_bounds = array<i64: 1, 512>}, {pipeline_mode = #tpu.pipeline_mode<synchronous>, transform_indices = @transform_7, window_bounds = array<i64: 128, 128>}, {pipeline_mode = #tpu.pipeline_mode<synchronous>, transform_indices = @transform_8, window_bounds = array<i64: 1, 128>}, {pipeline_mode = #tpu.pipeline_mode<synchronous>, transform_indices = @transform_9, window_bounds = array<i64: 128, 128>}, {pipeline_mode = #tpu.pipeline_mode<synchronous>, transform_indices = @transform_10, window_bounds = array<i64: 1, 128>}, {pipeline_mode = #tpu.pipeline_mode<synchronous>, transform_indices = @transform_11, window_bounds = array<i64: 8, 128>}, {pipeline_mode = #tpu.pipeline_mode<synchronous>, transform_indices = @transform_12, window_bounds = array<i64: 8, 128>}]} {
    %c0_i32 = arith.constant 0 : i32
    %0 = arith.cmpi eq, %arg0, %c0_i32 : i32
    %1 = arith.extui %0 : i1 to i32
    %c0_i32_0 = arith.constant 0 : i32
    %2 = arith.cmpi ne, %1, %c0_i32_0 : i32
    scf.if %2 {
      %cst_187 = arith.constant 0.000000e+00 : f32
      %631 = vector.broadcast %cst_187 : f32 to vector<2x8x128xf32>
      %c0_188 = arith.constant 0 : index
      %c0_189 = arith.constant 0 : index
      %c0_190 = arith.constant 0 : index
      %632 = vector.load %arg14[%c0_188, %c0_189, %c0_190] : memref<2x8x128xf32, #tpu.memory_space<vmem>>, vector<2x8x128xf32>
      tpu.vector_store %arg14[%c0_188, %c0_189, %c0_190], %631 {strides = array<i32>} : memref<2x8x128xf32, #tpu.memory_space<vmem>>, vector<2x8x128xf32>,
      %cst_191 = arith.constant 0.000000e+00 : f32
      %633 = vector.broadcast %cst_191 : f32 to vector<2x8x128xf32>
      %c0_192 = arith.constant 0 : index
      %c0_193 = arith.constant 0 : index
      %c0_194 = arith.constant 0 : index
      %634 = vector.load %arg15[%c0_192, %c0_193, %c0_194] : memref<2x8x128xf32, #tpu.memory_space<vmem>>, vector<2x8x128xf32>
      tpu.vector_store %arg15[%c0_192, %c0_193, %c0_194], %633 {strides = array<i32>} : memref<2x8x128xf32, #tpu.memory_space<vmem>>, vector<2x8x128xf32>,
    } else {
    }
    %c0 = arith.constant 0 : index
    %c0_1 = arith.constant 0 : index
    %3 = vector.load %arg2[%c0, %c0_1] : memref<128x512xbf16, #tpu.memory_space<vmem>>, vector<128x512xbf16>
    %c0_2 = arith.constant 0 : index
    %c0_3 = arith.constant 0 : index
    %4 = vector.load %arg3[%c0_2, %c0_3] : memref<128x512xbf16, #tpu.memory_space<vmem>>, vector<128x512xbf16>
    %c0_4 = arith.constant 0 : index
    %c0_5 = arith.constant 0 : index
    %5 = vector.load %arg4[%c0_4, %c0_5] : memref<1x512xf32, #tpu.memory_space<vmem>>, vector<1x512xf32>
    %6 = vector.shape_cast %5 : vector<1x512xf32> to vector<1x512xf32>
    %7 = vector.broadcast %6 : vector<1x512xf32> to vector<8x512xf32>
    %c0_6 = arith.constant 0 : index
    %c0_7 = arith.constant 0 : index
    %c0_8 = arith.constant 0 : index
    %8 = vector.load %arg1[%c0_6, %c0_7, %c0_8] : memref<8x8x128xf32, #tpu.memory_space<vmem>>, vector<8x8x128xf32>
    %9 = vector.shape_cast %8 : vector<8x8x128xf32> to vector<64x128xf32>
    %10 = arith.truncf %9 : vector<64x128xf32> to vector<64x128xbf16>
    %cst = arith.constant dense<0.000000e+00> : vector<64x512xf32>
    %11 = tpu.matmul %10, %3, %cst {dimension_numbers = #tpu.dot_dimension_numbers<[1], [0], [0], [1], [0, 0, 1, 1], [], []>} : vector<64x128xbf16>, vector<128x512xbf16>, vector<64x512xf32> -> vector<64x512xf32>
    %12 = vector.shape_cast %11 : vector<64x512xf32> to vector<8x8x512xf32>
    %13 = vector.extract_strided_slice %12 {offsets = [0, 0, 0], sizes = [8, 1, 512], strides = [1, 1, 1]} : vector<8x8x512xf32> to vector<8x1x512xf32>
    %14 = vector.shape_cast %13 : vector<8x1x512xf32> to vector<8x512xf32>
    %c0_9 = arith.constant 0 : index
    %c0_10 = arith.constant 0 : index
    %c0_11 = arith.constant 0 : index
    %15 = vector.load %arg17[%c0_9, %c0_10, %c0_11] : memref<8x8x512xf32, #tpu.memory_space<vmem>>, vector<1x8x512xf32>
    %16 = vector.shape_cast %15 : vector<1x8x512xf32> to vector<8x512xf32>
    %17 = vector.shape_cast %14 : vector<8x512xf32> to vector<1x8x512xf32>
    tpu.vector_store %arg17[%c0_9, %c0_10, %c0_11], %17 {strides = array<i32>} : memref<8x8x512xf32, #tpu.memory_space<vmem>>, vector<1x8x512xf32>,
    %18 = vector.extract_strided_slice %12 {offsets = [0, 1, 0], sizes = [8, 1, 512], strides = [1, 1, 1]} : vector<8x8x512xf32> to vector<8x1x512xf32>
    %19 = vector.shape_cast %18 : vector<8x1x512xf32> to vector<8x512xf32>
    %c1 = arith.constant 1 : index
    %c0_12 = arith.constant 0 : index
    %c0_13 = arith.constant 0 : index
    %20 = vector.load %arg17[%c1, %c0_12, %c0_13] : memref<8x8x512xf32, #tpu.memory_space<vmem>>, vector<1x8x512xf32>
    %21 = vector.shape_cast %20 : vector<1x8x512xf32> to vector<8x512xf32>
    %22 = vector.shape_cast %19 : vector<8x512xf32> to vector<1x8x512xf32>
    tpu.vector_store %arg17[%c1, %c0_12, %c0_13], %22 {strides = array<i32>} : memref<8x8x512xf32, #tpu.memory_space<vmem>>, vector<1x8x512xf32>,
    %23 = vector.extract_strided_slice %12 {offsets = [0, 2, 0], sizes = [8, 1, 512], strides = [1, 1, 1]} : vector<8x8x512xf32> to vector<8x1x512xf32>
    %24 = vector.shape_cast %23 : vector<8x1x512xf32> to vector<8x512xf32>
    %c2 = arith.constant 2 : index
    %c0_14 = arith.constant 0 : index
    %c0_15 = arith.constant 0 : index
    %25 = vector.load %arg17[%c2, %c0_14, %c0_15] : memref<8x8x512xf32, #tpu.memory_space<vmem>>, vector<1x8x512xf32>
    %26 = vector.shape_cast %25 : vector<1x8x512xf32> to vector<8x512xf32>
    %27 = vector.shape_cast %24 : vector<8x512xf32> to vector<1x8x512xf32>
    tpu.vector_store %arg17[%c2, %c0_14, %c0_15], %27 {strides = array<i32>} : memref<8x8x512xf32, #tpu.memory_space<vmem>>, vector<1x8x512xf32>,
    %28 = vector.extract_strided_slice %12 {offsets = [0, 3, 0], sizes = [8, 1, 512], strides = [1, 1, 1]} : vector<8x8x512xf32> to vector<8x1x512xf32>
    %29 = vector.shape_cast %28 : vector<8x1x512xf32> to vector<8x512xf32>
    %c3 = arith.constant 3 : index
    %c0_16 = arith.constant 0 : index
    %c0_17 = arith.constant 0 : index
    %30 = vector.load %arg17[%c3, %c0_16, %c0_17] : memref<8x8x512xf32, #tpu.memory_space<vmem>>, vector<1x8x512xf32>
    %31 = vector.shape_cast %30 : vector<1x8x512xf32> to vector<8x512xf32>
    %32 = vector.shape_cast %29 : vector<8x512xf32> to vector<1x8x512xf32>
    tpu.vector_store %arg17[%c3, %c0_16, %c0_17], %32 {strides = array<i32>} : memref<8x8x512xf32, #tpu.memory_space<vmem>>, vector<1x8x512xf32>,
    %33 = vector.extract_strided_slice %12 {offsets = [0, 4, 0], sizes = [8, 1, 512], strides = [1, 1, 1]} : vector<8x8x512xf32> to vector<8x1x512xf32>
    %34 = vector.shape_cast %33 : vector<8x1x512xf32> to vector<8x512xf32>
    %c4 = arith.constant 4 : index
    %c0_18 = arith.constant 0 : index
    %c0_19 = arith.constant 0 : index
    %35 = vector.load %arg17[%c4, %c0_18, %c0_19] : memref<8x8x512xf32, #tpu.memory_space<vmem>>, vector<1x8x512xf32>
    %36 = vector.shape_cast %35 : vector<1x8x512xf32> to vector<8x512xf32>
    %37 = vector.shape_cast %34 : vector<8x512xf32> to vector<1x8x512xf32>
    tpu.vector_store %arg17[%c4, %c0_18, %c0_19], %37 {strides = array<i32>} : memref<8x8x512xf32, #tpu.memory_space<vmem>>, vector<1x8x512xf32>,
    %38 = vector.extract_strided_slice %12 {offsets = [0, 5, 0], sizes = [8, 1, 512], strides = [1, 1, 1]} : vector<8x8x512xf32> to vector<8x1x512xf32>
    %39 = vector.shape_cast %38 : vector<8x1x512xf32> to vector<8x512xf32>
    %c5 = arith.constant 5 : index
    %c0_20 = arith.constant 0 : index
    %c0_21 = arith.constant 0 : index
    %40 = vector.load %arg17[%c5, %c0_20, %c0_21] : memref<8x8x512xf32, #tpu.memory_space<vmem>>, vector<1x8x512xf32>
    %41 = vector.shape_cast %40 : vector<1x8x512xf32> to vector<8x512xf32>
    %42 = vector.shape_cast %39 : vector<8x512xf32> to vector<1x8x512xf32>
    tpu.vector_store %arg17[%c5, %c0_20, %c0_21], %42 {strides = array<i32>} : memref<8x8x512xf32, #tpu.memory_space<vmem>>, vector<1x8x512xf32>,
    %43 = vector.extract_strided_slice %12 {offsets = [0, 6, 0], sizes = [8, 1, 512], strides = [1, 1, 1]} : vector<8x8x512xf32> to vector<8x1x512xf32>
    %44 = vector.shape_cast %43 : vector<8x1x512xf32> to vector<8x512xf32>
    %c6 = arith.constant 6 : index
    %c0_22 = arith.constant 0 : index
    %c0_23 = arith.constant 0 : index
    %45 = vector.load %arg17[%c6, %c0_22, %c0_23] : memref<8x8x512xf32, #tpu.memory_space<vmem>>, vector<1x8x512xf32>
    %46 = vector.shape_cast %45 : vector<1x8x512xf32> to vector<8x512xf32>
    %47 = vector.shape_cast %44 : vector<8x512xf32> to vector<1x8x512xf32>
    tpu.vector_store %arg17[%c6, %c0_22, %c0_23], %47 {strides = array<i32>} : memref<8x8x512xf32, #tpu.memory_space<vmem>>, vector<1x8x512xf32>,
    %48 = vector.extract_strided_slice %12 {offsets = [0, 7, 0], sizes = [8, 1, 512], strides = [1, 1, 1]} : vector<8x8x512xf32> to vector<8x1x512xf32>
    %49 = vector.shape_cast %48 : vector<8x1x512xf32> to vector<8x512xf32>
    %c7 = arith.constant 7 : index
    %c0_24 = arith.constant 0 : index
    %c0_25 = arith.constant 0 : index
    %50 = vector.load %arg17[%c7, %c0_24, %c0_25] : memref<8x8x512xf32, #tpu.memory_space<vmem>>, vector<1x8x512xf32>
    %51 = vector.shape_cast %50 : vector<1x8x512xf32> to vector<8x512xf32>
    %52 = vector.shape_cast %49 : vector<8x512xf32> to vector<1x8x512xf32>
    tpu.vector_store %arg17[%c7, %c0_24, %c0_25], %52 {strides = array<i32>} : memref<8x8x512xf32, #tpu.memory_space<vmem>>, vector<1x8x512xf32>,
    %c0_26 = arith.constant 0 : index
    %c0_27 = arith.constant 0 : index
    %c0_28 = arith.constant 0 : index
    %53 = vector.load %arg14[%c0_26, %c0_27, %c0_28] : memref<2x8x128xf32, #tpu.memory_space<vmem>>, vector<1x8x128xf32>
    %54 = vector.shape_cast %53 : vector<1x8x128xf32> to vector<8x128xf32>
    %c0_29 = arith.constant 0 : index
    %c0_30 = arith.constant 0 : index
    %c0_31 = arith.constant 0 : index
    %55 = vector.load %arg15[%c0_29, %c0_30, %c0_31] : memref<2x8x128xf32, #tpu.memory_space<vmem>>, vector<1x8x128xf32>
    %56 = vector.shape_cast %55 : vector<1x8x128xf32> to vector<8x128xf32>
    %c0_i32_32 = arith.constant 0 : i32
    %57 = arith.truncf %54 : vector<8x128xf32> to vector<8x128xbf16>
    %cst_33 = arith.constant dense<0.000000e+00> : vector<8x512xf32>
    %58 = tpu.matmul %57, %4, %cst_33 {dimension_numbers = #tpu.dot_dimension_numbers<[1], [0], [0], [1], [0, 0, 1, 1], [], []>} : vector<8x128xbf16>, vector<128x512xbf16>, vector<8x512xf32> -> vector<8x512xf32>
    %59 = arith.index_cast %c0_i32_32 : i32 to index
    %c0_34 = arith.constant 0 : index
    %c0_35 = arith.constant 0 : index
    %60 = vector.load %arg17[%59, %c0_34, %c0_35] : memref<8x8x512xf32, #tpu.memory_space<vmem>>, vector<1x8x512xf32>
    %61 = vector.shape_cast %60 : vector<1x8x512xf32> to vector<8x512xf32>
    %62 = arith.addf %58, %61 : vector<8x512xf32>
    %63 = arith.addf %62, %7 : vector<8x512xf32>
    %64 = vector.extract_strided_slice %63 {offsets = [0, 0], sizes = [8, 128], strides = [1, 1]} : vector<8x512xf32> to vector<8x128xf32>
    %65 = arith.negf %64 : vector<8x128xf32>
    %66 = math.exp %65 : vector<8x128xf32>
    %cst_36 = arith.constant 1.000000e+00 : f32
    %67 = vector.broadcast %cst_36 : f32 to vector<8x128xf32>
    %68 = arith.addf %67, %66 : vector<8x128xf32>
    %69 = arith.divf %67, %68 : vector<8x128xf32>
    %70 = vector.extract_strided_slice %63 {offsets = [0, 128], sizes = [8, 128], strides = [1, 1]} : vector<8x512xf32> to vector<8x128xf32>
    %71 = arith.negf %70 : vector<8x128xf32>
    %72 = math.exp %71 : vector<8x128xf32>
    %cst_37 = arith.constant 1.000000e+00 : f32
    %73 = vector.broadcast %cst_37 : f32 to vector<8x128xf32>
    %74 = arith.addf %73, %72 : vector<8x128xf32>
    %75 = arith.divf %73, %74 : vector<8x128xf32>
    %76 = vector.extract_strided_slice %63 {offsets = [0, 256], sizes = [8, 128], strides = [1, 1]} : vector<8x512xf32> to vector<8x128xf32>
    %77 = math.tanh %76 : vector<8x128xf32>
    %78 = vector.extract_strided_slice %63 {offsets = [0, 384], sizes = [8, 128], strides = [1, 1]} : vector<8x512xf32> to vector<8x128xf32>
    %79 = arith.negf %78 : vector<8x128xf32>
    %80 = math.exp %79 : vector<8x128xf32>
    %cst_38 = arith.constant 1.000000e+00 : f32
    %81 = vector.broadcast %cst_38 : f32 to vector<8x128xf32>
    %82 = arith.addf %81, %80 : vector<8x128xf32>
    %83 = arith.divf %81, %82 : vector<8x128xf32>
    %84 = arith.mulf %75, %56 : vector<8x128xf32>
    %85 = arith.mulf %69, %77 : vector<8x128xf32>
    %86 = arith.addf %84, %85 : vector<8x128xf32>
    %87 = math.tanh %86 : vector<8x128xf32>
    %88 = arith.mulf %83, %87 : vector<8x128xf32>
    %89 = arith.index_cast %c0_i32_32 : i32 to index
    %c0_39 = arith.constant 0 : index
    %c0_40 = arith.constant 0 : index
    %90 = vector.load %arg16[%89, %c0_39, %c0_40] : memref<8x8x128xf32, #tpu.memory_space<vmem>>, vector<1x8x128xf32>
    %91 = vector.shape_cast %90 : vector<1x8x128xf32> to vector<8x128xf32>
    %92 = vector.shape_cast %88 : vector<8x128xf32> to vector<1x8x128xf32>
    tpu.vector_store %arg16[%89, %c0_39, %c0_40], %92 {strides = array<i32>} : memref<8x8x128xf32, #tpu.memory_space<vmem>>, vector<1x8x128xf32>,
    %c1_i32 = arith.constant 1 : i32
    %93 = arith.truncf %88 : vector<8x128xf32> to vector<8x128xbf16>
    %cst_41 = arith.constant dense<0.000000e+00> : vector<8x512xf32>
    %94 = tpu.matmul %93, %4, %cst_41 {dimension_numbers = #tpu.dot_dimension_numbers<[1], [0], [0], [1], [0, 0, 1, 1], [], []>} : vector<8x128xbf16>, vector<128x512xbf16>, vector<8x512xf32> -> vector<8x512xf32>
    %95 = arith.index_cast %c1_i32 : i32 to index
    %c0_42 = arith.constant 0 : index
    %c0_43 = arith.constant 0 : index
    %96 = vector.load %arg17[%95, %c0_42, %c0_43] : memref<8x8x512xf32, #tpu.memory_space<vmem>>, vector<1x8x512xf32>
    %97 = vector.shape_cast %96 : vector<1x8x512xf32> to vector<8x512xf32>
    %98 = arith.addf %94, %97 : vector<8x512xf32>
    %99 = arith.addf %98, %7 : vector<8x512xf32>
    %100 = vector.extract_strided_slice %99 {offsets = [0, 0], sizes = [8, 128], strides = [1, 1]} : vector<8x512xf32> to vector<8x128xf32>
    %101 = arith.negf %100 : vector<8x128xf32>
    %102 = math.exp %101 : vector<8x128xf32>
    %cst_44 = arith.constant 1.000000e+00 : f32
    %103 = vector.broadcast %cst_44 : f32 to vector<8x128xf32>
    %104 = arith.addf %103, %102 : vector<8x128xf32>
    %105 = arith.divf %103, %104 : vector<8x128xf32>
    %106 = vector.extract_strided_slice %99 {offsets = [0, 128], sizes = [8, 128], strides = [1, 1]} : vector<8x512xf32> to vector<8x128xf32>
    %107 = arith.negf %106 : vector<8x128xf32>
    %108 = math.exp %107 : vector<8x128xf32>
    %cst_45 = arith.constant 1.000000e+00 : f32
    %109 = vector.broadcast %cst_45 : f32 to vector<8x128xf32>
    %110 = arith.addf %109, %108 : vector<8x128xf32>
    %111 = arith.divf %109, %110 : vector<8x128xf32>
    %112 = vector.extract_strided_slice %99 {offsets = [0, 256], sizes = [8, 128], strides = [1, 1]} : vector<8x512xf32> to vector<8x128xf32>
    %113 = math.tanh %112 : vector<8x128xf32>
    %114 = vector.extract_strided_slice %99 {offsets = [0, 384], sizes = [8, 128], strides = [1, 1]} : vector<8x512xf32> to vector<8x128xf32>
    %115 = arith.negf %114 : vector<8x128xf32>
    %116 = math.exp %115 : vector<8x128xf32>
    %cst_46 = arith.constant 1.000000e+00 : f32
    %117 = vector.broadcast %cst_46 : f32 to vector<8x128xf32>
    %118 = arith.addf %117, %116 : vector<8x128xf32>
    %119 = arith.divf %117, %118 : vector<8x128xf32>
    %120 = arith.mulf %111, %86 : vector<8x128xf32>
    %121 = arith.mulf %105, %113 : vector<8x128xf32>
    %122 = arith.addf %120, %121 : vector<8x128xf32>
    %123 = math.tanh %122 : vector<8x128xf32>
    %124 = arith.mulf %119, %123 : vector<8x128xf32>
    %125 = arith.index_cast %c1_i32 : i32 to index
    %c0_47 = arith.constant 0 : index
    %c0_48 = arith.constant 0 : index
    %126 = vector.load %arg16[%125, %c0_47, %c0_48] : memref<8x8x128xf32, #tpu.memory_space<vmem>>, vector<1x8x128xf32>
    %127 = vector.shape_cast %126 : vector<1x8x128xf32> to vector<8x128xf32>
    %128 = vector.shape_cast %124 : vector<8x128xf32> to vector<1x8x128xf32>
    tpu.vector_store %arg16[%125, %c0_47, %c0_48], %128 {strides = array<i32>} : memref<8x8x128xf32, #tpu.memory_space<vmem>>, vector<1x8x128xf32>,
    %c2_i32 = arith.constant 2 : i32
    %129 = arith.truncf %124 : vector<8x128xf32> to vector<8x128xbf16>
    %cst_49 = arith.constant dense<0.000000e+00> : vector<8x512xf32>
    %130 = tpu.matmul %129, %4, %cst_49 {dimension_numbers = #tpu.dot_dimension_numbers<[1], [0], [0], [1], [0, 0, 1, 1], [], []>} : vector<8x128xbf16>, vector<128x512xbf16>, vector<8x512xf32> -> vector<8x512xf32>
    %131 = arith.index_cast %c2_i32 : i32 to index
    %c0_50 = arith.constant 0 : index
    %c0_51 = arith.constant 0 : index
    %132 = vector.load %arg17[%131, %c0_50, %c0_51] : memref<8x8x512xf32, #tpu.memory_space<vmem>>, vector<1x8x512xf32>
    %133 = vector.shape_cast %132 : vector<1x8x512xf32> to vector<8x512xf32>
    %134 = arith.addf %130, %133 : vector<8x512xf32>
    %135 = arith.addf %134, %7 : vector<8x512xf32>
    %136 = vector.extract_strided_slice %135 {offsets = [0, 0], sizes = [8, 128], strides = [1, 1]} : vector<8x512xf32> to vector<8x128xf32>
    %137 = arith.negf %136 : vector<8x128xf32>
    %138 = math.exp %137 : vector<8x128xf32>
    %cst_52 = arith.constant 1.000000e+00 : f32
    %139 = vector.broadcast %cst_52 : f32 to vector<8x128xf32>
    %140 = arith.addf %139, %138 : vector<8x128xf32>
    %141 = arith.divf %139, %140 : vector<8x128xf32>
    %142 = vector.extract_strided_slice %135 {offsets = [0, 128], sizes = [8, 128], strides = [1, 1]} : vector<8x512xf32> to vector<8x128xf32>
    %143 = arith.negf %142 : vector<8x128xf32>
    %144 = math.exp %143 : vector<8x128xf32>
    %cst_53 = arith.constant 1.000000e+00 : f32
    %145 = vector.broadcast %cst_53 : f32 to vector<8x128xf32>
    %146 = arith.addf %145, %144 : vector<8x128xf32>
    %147 = arith.divf %145, %146 : vector<8x128xf32>
    %148 = vector.extract_strided_slice %135 {offsets = [0, 256], sizes = [8, 128], strides = [1, 1]} : vector<8x512xf32> to vector<8x128xf32>
    %149 = math.tanh %148 : vector<8x128xf32>
    %150 = vector.extract_strided_slice %135 {offsets = [0, 384], sizes = [8, 128], strides = [1, 1]} : vector<8x512xf32> to vector<8x128xf32>
    %151 = arith.negf %150 : vector<8x128xf32>
    %152 = math.exp %151 : vector<8x128xf32>
    %cst_54 = arith.constant 1.000000e+00 : f32
    %153 = vector.broadcast %cst_54 : f32 to vector<8x128xf32>
    %154 = arith.addf %153, %152 : vector<8x128xf32>
    %155 = arith.divf %153, %154 : vector<8x128xf32>
    %156 = arith.mulf %147, %122 : vector<8x128xf32>
    %157 = arith.mulf %141, %149 : vector<8x128xf32>
    %158 = arith.addf %156, %157 : vector<8x128xf32>
    %159 = math.tanh %158 : vector<8x128xf32>
    %160 = arith.mulf %155, %159 : vector<8x128xf32>
    %161 = arith.index_cast %c2_i32 : i32 to index
    %c0_55 = arith.constant 0 : index
    %c0_56 = arith.constant 0 : index
    %162 = vector.load %arg16[%161, %c0_55, %c0_56] : memref<8x8x128xf32, #tpu.memory_space<vmem>>, vector<1x8x128xf32>
    %163 = vector.shape_cast %162 : vector<1x8x128xf32> to vector<8x128xf32>
    %164 = vector.shape_cast %160 : vector<8x128xf32> to vector<1x8x128xf32>
    tpu.vector_store %arg16[%161, %c0_55, %c0_56], %164 {strides = array<i32>} : memref<8x8x128xf32, #tpu.memory_space<vmem>>, vector<1x8x128xf32>,
    %c3_i32 = arith.constant 3 : i32
    %165 = arith.truncf %160 : vector<8x128xf32> to vector<8x128xbf16>
    %cst_57 = arith.constant dense<0.000000e+00> : vector<8x512xf32>
    %166 = tpu.matmul %165, %4, %cst_57 {dimension_numbers = #tpu.dot_dimension_numbers<[1], [0], [0], [1], [0, 0, 1, 1], [], []>} : vector<8x128xbf16>, vector<128x512xbf16>, vector<8x512xf32> -> vector<8x512xf32>
    %167 = arith.index_cast %c3_i32 : i32 to index
    %c0_58 = arith.constant 0 : index
    %c0_59 = arith.constant 0 : index
    %168 = vector.load %arg17[%167, %c0_58, %c0_59] : memref<8x8x512xf32, #tpu.memory_space<vmem>>, vector<1x8x512xf32>
    %169 = vector.shape_cast %168 : vector<1x8x512xf32> to vector<8x512xf32>
    %170 = arith.addf %166, %169 : vector<8x512xf32>
    %171 = arith.addf %170, %7 : vector<8x512xf32>
    %172 = vector.extract_strided_slice %171 {offsets = [0, 0], sizes = [8, 128], strides = [1, 1]} : vector<8x512xf32> to vector<8x128xf32>
    %173 = arith.negf %172 : vector<8x128xf32>
    %174 = math.exp %173 : vector<8x128xf32>
    %cst_60 = arith.constant 1.000000e+00 : f32
    %175 = vector.broadcast %cst_60 : f32 to vector<8x128xf32>
    %176 = arith.addf %175, %174 : vector<8x128xf32>
    %177 = arith.divf %175, %176 : vector<8x128xf32>
    %178 = vector.extract_strided_slice %171 {offsets = [0, 128], sizes = [8, 128], strides = [1, 1]} : vector<8x512xf32> to vector<8x128xf32>
    %179 = arith.negf %178 : vector<8x128xf32>
    %180 = math.exp %179 : vector<8x128xf32>
    %cst_61 = arith.constant 1.000000e+00 : f32
    %181 = vector.broadcast %cst_61 : f32 to vector<8x128xf32>
    %182 = arith.addf %181, %180 : vector<8x128xf32>
    %183 = arith.divf %181, %182 : vector<8x128xf32>
    %184 = vector.extract_strided_slice %171 {offsets = [0, 256], sizes = [8, 128], strides = [1, 1]} : vector<8x512xf32> to vector<8x128xf32>
    %185 = math.tanh %184 : vector<8x128xf32>
    %186 = vector.extract_strided_slice %171 {offsets = [0, 384], sizes = [8, 128], strides = [1, 1]} : vector<8x512xf32> to vector<8x128xf32>
    %187 = arith.negf %186 : vector<8x128xf32>
    %188 = math.exp %187 : vector<8x128xf32>
    %cst_62 = arith.constant 1.000000e+00 : f32
    %189 = vector.broadcast %cst_62 : f32 to vector<8x128xf32>
    %190 = arith.addf %189, %188 : vector<8x128xf32>
    %191 = arith.divf %189, %190 : vector<8x128xf32>
    %192 = arith.mulf %183, %158 : vector<8x128xf32>
    %193 = arith.mulf %177, %185 : vector<8x128xf32>
    %194 = arith.addf %192, %193 : vector<8x128xf32>
    %195 = math.tanh %194 : vector<8x128xf32>
    %196 = arith.mulf %191, %195 : vector<8x128xf32>
    %197 = arith.index_cast %c3_i32 : i32 to index
    %c0_63 = arith.constant 0 : index
    %c0_64 = arith.constant 0 : index
    %198 = vector.load %arg16[%197, %c0_63, %c0_64] : memref<8x8x128xf32, #tpu.memory_space<vmem>>, vector<1x8x128xf32>
    %199 = vector.shape_cast %198 : vector<1x8x128xf32> to vector<8x128xf32>
    %200 = vector.shape_cast %196 : vector<8x128xf32> to vector<1x8x128xf32>
    tpu.vector_store %arg16[%197, %c0_63, %c0_64], %200 {strides = array<i32>} : memref<8x8x128xf32, #tpu.memory_space<vmem>>, vector<1x8x128xf32>,
    %c4_i32 = arith.constant 4 : i32
    %201 = arith.truncf %196 : vector<8x128xf32> to vector<8x128xbf16>
    %cst_65 = arith.constant dense<0.000000e+00> : vector<8x512xf32>
    %202 = tpu.matmul %201, %4, %cst_65 {dimension_numbers = #tpu.dot_dimension_numbers<[1], [0], [0], [1], [0, 0, 1, 1], [], []>} : vector<8x128xbf16>, vector<128x512xbf16>, vector<8x512xf32> -> vector<8x512xf32>
    %203 = arith.index_cast %c4_i32 : i32 to index
    %c0_66 = arith.constant 0 : index
    %c0_67 = arith.constant 0 : index
    %204 = vector.load %arg17[%203, %c0_66, %c0_67] : memref<8x8x512xf32, #tpu.memory_space<vmem>>, vector<1x8x512xf32>
    %205 = vector.shape_cast %204 : vector<1x8x512xf32> to vector<8x512xf32>
    %206 = arith.addf %202, %205 : vector<8x512xf32>
    %207 = arith.addf %206, %7 : vector<8x512xf32>
    %208 = vector.extract_strided_slice %207 {offsets = [0, 0], sizes = [8, 128], strides = [1, 1]} : vector<8x512xf32> to vector<8x128xf32>
    %209 = arith.negf %208 : vector<8x128xf32>
    %210 = math.exp %209 : vector<8x128xf32>
    %cst_68 = arith.constant 1.000000e+00 : f32
    %211 = vector.broadcast %cst_68 : f32 to vector<8x128xf32>
    %212 = arith.addf %211, %210 : vector<8x128xf32>
    %213 = arith.divf %211, %212 : vector<8x128xf32>
    %214 = vector.extract_strided_slice %207 {offsets = [0, 128], sizes = [8, 128], strides = [1, 1]} : vector<8x512xf32> to vector<8x128xf32>
    %215 = arith.negf %214 : vector<8x128xf32>
    %216 = math.exp %215 : vector<8x128xf32>
    %cst_69 = arith.constant 1.000000e+00 : f32
    %217 = vector.broadcast %cst_69 : f32 to vector<8x128xf32>
    %218 = arith.addf %217, %216 : vector<8x128xf32>
    %219 = arith.divf %217, %218 : vector<8x128xf32>
    %220 = vector.extract_strided_slice %207 {offsets = [0, 256], sizes = [8, 128], strides = [1, 1]} : vector<8x512xf32> to vector<8x128xf32>
    %221 = math.tanh %220 : vector<8x128xf32>
    %222 = vector.extract_strided_slice %207 {offsets = [0, 384], sizes = [8, 128], strides = [1, 1]} : vector<8x512xf32> to vector<8x128xf32>
    %223 = arith.negf %222 : vector<8x128xf32>
    %224 = math.exp %223 : vector<8x128xf32>
    %cst_70 = arith.constant 1.000000e+00 : f32
    %225 = vector.broadcast %cst_70 : f32 to vector<8x128xf32>
    %226 = arith.addf %225, %224 : vector<8x128xf32>
    %227 = arith.divf %225, %226 : vector<8x128xf32>
    %228 = arith.mulf %219, %194 : vector<8x128xf32>
    %229 = arith.mulf %213, %221 : vector<8x128xf32>
    %230 = arith.addf %228, %229 : vector<8x128xf32>
    %231 = math.tanh %230 : vector<8x128xf32>
    %232 = arith.mulf %227, %231 : vector<8x128xf32>
    %233 = arith.index_cast %c4_i32 : i32 to index
    %c0_71 = arith.constant 0 : index
    %c0_72 = arith.constant 0 : index
    %234 = vector.load %arg16[%233, %c0_71, %c0_72] : memref<8x8x128xf32, #tpu.memory_space<vmem>>, vector<1x8x128xf32>
    %235 = vector.shape_cast %234 : vector<1x8x128xf32> to vector<8x128xf32>
    %236 = vector.shape_cast %232 : vector<8x128xf32> to vector<1x8x128xf32>
    tpu.vector_store %arg16[%233, %c0_71, %c0_72], %236 {strides = array<i32>} : memref<8x8x128xf32, #tpu.memory_space<vmem>>, vector<1x8x128xf32>,
    %c5_i32 = arith.constant 5 : i32
    %237 = arith.truncf %232 : vector<8x128xf32> to vector<8x128xbf16>
    %cst_73 = arith.constant dense<0.000000e+00> : vector<8x512xf32>
    %238 = tpu.matmul %237, %4, %cst_73 {dimension_numbers = #tpu.dot_dimension_numbers<[1], [0], [0], [1], [0, 0, 1, 1], [], []>} : vector<8x128xbf16>, vector<128x512xbf16>, vector<8x512xf32> -> vector<8x512xf32>
    %239 = arith.index_cast %c5_i32 : i32 to index
    %c0_74 = arith.constant 0 : index
    %c0_75 = arith.constant 0 : index
    %240 = vector.load %arg17[%239, %c0_74, %c0_75] : memref<8x8x512xf32, #tpu.memory_space<vmem>>, vector<1x8x512xf32>
    %241 = vector.shape_cast %240 : vector<1x8x512xf32> to vector<8x512xf32>
    %242 = arith.addf %238, %241 : vector<8x512xf32>
    %243 = arith.addf %242, %7 : vector<8x512xf32>
    %244 = vector.extract_strided_slice %243 {offsets = [0, 0], sizes = [8, 128], strides = [1, 1]} : vector<8x512xf32> to vector<8x128xf32>
    %245 = arith.negf %244 : vector<8x128xf32>
    %246 = math.exp %245 : vector<8x128xf32>
    %cst_76 = arith.constant 1.000000e+00 : f32
    %247 = vector.broadcast %cst_76 : f32 to vector<8x128xf32>
    %248 = arith.addf %247, %246 : vector<8x128xf32>
    %249 = arith.divf %247, %248 : vector<8x128xf32>
    %250 = vector.extract_strided_slice %243 {offsets = [0, 128], sizes = [8, 128], strides = [1, 1]} : vector<8x512xf32> to vector<8x128xf32>
    %251 = arith.negf %250 : vector<8x128xf32>
    %252 = math.exp %251 : vector<8x128xf32>
    %cst_77 = arith.constant 1.000000e+00 : f32
    %253 = vector.broadcast %cst_77 : f32 to vector<8x128xf32>
    %254 = arith.addf %253, %252 : vector<8x128xf32>
    %255 = arith.divf %253, %254 : vector<8x128xf32>
    %256 = vector.extract_strided_slice %243 {offsets = [0, 256], sizes = [8, 128], strides = [1, 1]} : vector<8x512xf32> to vector<8x128xf32>
    %257 = math.tanh %256 : vector<8x128xf32>
    %258 = vector.extract_strided_slice %243 {offsets = [0, 384], sizes = [8, 128], strides = [1, 1]} : vector<8x512xf32> to vector<8x128xf32>
    %259 = arith.negf %258 : vector<8x128xf32>
    %260 = math.exp %259 : vector<8x128xf32>
    %cst_78 = arith.constant 1.000000e+00 : f32
    %261 = vector.broadcast %cst_78 : f32 to vector<8x128xf32>
    %262 = arith.addf %261, %260 : vector<8x128xf32>
    %263 = arith.divf %261, %262 : vector<8x128xf32>
    %264 = arith.mulf %255, %230 : vector<8x128xf32>
    %265 = arith.mulf %249, %257 : vector<8x128xf32>
    %266 = arith.addf %264, %265 : vector<8x128xf32>
    %267 = math.tanh %266 : vector<8x128xf32>
    %268 = arith.mulf %263, %267 : vector<8x128xf32>
    %269 = arith.index_cast %c5_i32 : i32 to index
    %c0_79 = arith.constant 0 : index
    %c0_80 = arith.constant 0 : index
    %270 = vector.load %arg16[%269, %c0_79, %c0_80] : memref<8x8x128xf32, #tpu.memory_space<vmem>>, vector<1x8x128xf32>
    %271 = vector.shape_cast %270 : vector<1x8x128xf32> to vector<8x128xf32>
    %272 = vector.shape_cast %268 : vector<8x128xf32> to vector<1x8x128xf32>
    tpu.vector_store %arg16[%269, %c0_79, %c0_80], %272 {strides = array<i32>} : memref<8x8x128xf32, #tpu.memory_space<vmem>>, vector<1x8x128xf32>,
    %c6_i32 = arith.constant 6 : i32
    %273 = arith.truncf %268 : vector<8x128xf32> to vector<8x128xbf16>
    %cst_81 = arith.constant dense<0.000000e+00> : vector<8x512xf32>
    %274 = tpu.matmul %273, %4, %cst_81 {dimension_numbers = #tpu.dot_dimension_numbers<[1], [0], [0], [1], [0, 0, 1, 1], [], []>} : vector<8x128xbf16>, vector<128x512xbf16>, vector<8x512xf32> -> vector<8x512xf32>
    %275 = arith.index_cast %c6_i32 : i32 to index
    %c0_82 = arith.constant 0 : index
    %c0_83 = arith.constant 0 : index
    %276 = vector.load %arg17[%275, %c0_82, %c0_83] : memref<8x8x512xf32, #tpu.memory_space<vmem>>, vector<1x8x512xf32>
    %277 = vector.shape_cast %276 : vector<1x8x512xf32> to vector<8x512xf32>
    %278 = arith.addf %274, %277 : vector<8x512xf32>
    %279 = arith.addf %278, %7 : vector<8x512xf32>
    %280 = vector.extract_strided_slice %279 {offsets = [0, 0], sizes = [8, 128], strides = [1, 1]} : vector<8x512xf32> to vector<8x128xf32>
    %281 = arith.negf %280 : vector<8x128xf32>
    %282 = math.exp %281 : vector<8x128xf32>
    %cst_84 = arith.constant 1.000000e+00 : f32
    %283 = vector.broadcast %cst_84 : f32 to vector<8x128xf32>
    %284 = arith.addf %283, %282 : vector<8x128xf32>
    %285 = arith.divf %283, %284 : vector<8x128xf32>
    %286 = vector.extract_strided_slice %279 {offsets = [0, 128], sizes = [8, 128], strides = [1, 1]} : vector<8x512xf32> to vector<8x128xf32>
    %287 = arith.negf %286 : vector<8x128xf32>
    %288 = math.exp %287 : vector<8x128xf32>
    %cst_85 = arith.constant 1.000000e+00 : f32
    %289 = vector.broadcast %cst_85 : f32 to vector<8x128xf32>
    %290 = arith.addf %289, %288 : vector<8x128xf32>
    %291 = arith.divf %289, %290 : vector<8x128xf32>
    %292 = vector.extract_strided_slice %279 {offsets = [0, 256], sizes = [8, 128], strides = [1, 1]} : vector<8x512xf32> to vector<8x128xf32>
    %293 = math.tanh %292 : vector<8x128xf32>
    %294 = vector.extract_strided_slice %279 {offsets = [0, 384], sizes = [8, 128], strides = [1, 1]} : vector<8x512xf32> to vector<8x128xf32>
    %295 = arith.negf %294 : vector<8x128xf32>
    %296 = math.exp %295 : vector<8x128xf32>
    %cst_86 = arith.constant 1.000000e+00 : f32
    %297 = vector.broadcast %cst_86 : f32 to vector<8x128xf32>
    %298 = arith.addf %297, %296 : vector<8x128xf32>
    %299 = arith.divf %297, %298 : vector<8x128xf32>
    %300 = arith.mulf %291, %266 : vector<8x128xf32>
    %301 = arith.mulf %285, %293 : vector<8x128xf32>
    %302 = arith.addf %300, %301 : vector<8x128xf32>
    %303 = math.tanh %302 : vector<8x128xf32>
    %304 = arith.mulf %299, %303 : vector<8x128xf32>
    %305 = arith.index_cast %c6_i32 : i32 to index
    %c0_87 = arith.constant 0 : index
    %c0_88 = arith.constant 0 : index
    %306 = vector.load %arg16[%305, %c0_87, %c0_88] : memref<8x8x128xf32, #tpu.memory_space<vmem>>, vector<1x8x128xf32>
    %307 = vector.shape_cast %306 : vector<1x8x128xf32> to vector<8x128xf32>
    %308 = vector.shape_cast %304 : vector<8x128xf32> to vector<1x8x128xf32>
    tpu.vector_store %arg16[%305, %c0_87, %c0_88], %308 {strides = array<i32>} : memref<8x8x128xf32, #tpu.memory_space<vmem>>, vector<1x8x128xf32>,
    %c7_i32 = arith.constant 7 : i32
    %309 = arith.truncf %304 : vector<8x128xf32> to vector<8x128xbf16>
    %cst_89 = arith.constant dense<0.000000e+00> : vector<8x512xf32>
    %310 = tpu.matmul %309, %4, %cst_89 {dimension_numbers = #tpu.dot_dimension_numbers<[1], [0], [0], [1], [0, 0, 1, 1], [], []>} : vector<8x128xbf16>, vector<128x512xbf16>, vector<8x512xf32> -> vector<8x512xf32>
    %311 = arith.index_cast %c7_i32 : i32 to index
    %c0_90 = arith.constant 0 : index
    %c0_91 = arith.constant 0 : index
    %312 = vector.load %arg17[%311, %c0_90, %c0_91] : memref<8x8x512xf32, #tpu.memory_space<vmem>>, vector<1x8x512xf32>
    %313 = vector.shape_cast %312 : vector<1x8x512xf32> to vector<8x512xf32>
    %314 = arith.addf %310, %313 : vector<8x512xf32>
    %315 = arith.addf %314, %7 : vector<8x512xf32>
    %316 = vector.extract_strided_slice %315 {offsets = [0, 0], sizes = [8, 128], strides = [1, 1]} : vector<8x512xf32> to vector<8x128xf32>
    %317 = arith.negf %316 : vector<8x128xf32>
    %318 = math.exp %317 : vector<8x128xf32>
    %cst_92 = arith.constant 1.000000e+00 : f32
    %319 = vector.broadcast %cst_92 : f32 to vector<8x128xf32>
    %320 = arith.addf %319, %318 : vector<8x128xf32>
    %321 = arith.divf %319, %320 : vector<8x128xf32>
    %322 = vector.extract_strided_slice %315 {offsets = [0, 128], sizes = [8, 128], strides = [1, 1]} : vector<8x512xf32> to vector<8x128xf32>
    %323 = arith.negf %322 : vector<8x128xf32>
    %324 = math.exp %323 : vector<8x128xf32>
    %cst_93 = arith.constant 1.000000e+00 : f32
    %325 = vector.broadcast %cst_93 : f32 to vector<8x128xf32>
    %326 = arith.addf %325, %324 : vector<8x128xf32>
    %327 = arith.divf %325, %326 : vector<8x128xf32>
    %328 = vector.extract_strided_slice %315 {offsets = [0, 256], sizes = [8, 128], strides = [1, 1]} : vector<8x512xf32> to vector<8x128xf32>
    %329 = math.tanh %328 : vector<8x128xf32>
    %330 = vector.extract_strided_slice %315 {offsets = [0, 384], sizes = [8, 128], strides = [1, 1]} : vector<8x512xf32> to vector<8x128xf32>
    %331 = arith.negf %330 : vector<8x128xf32>
    %332 = math.exp %331 : vector<8x128xf32>
    %cst_94 = arith.constant 1.000000e+00 : f32
    %333 = vector.broadcast %cst_94 : f32 to vector<8x128xf32>
    %334 = arith.addf %333, %332 : vector<8x128xf32>
    %335 = arith.divf %333, %334 : vector<8x128xf32>
    %336 = arith.mulf %327, %302 : vector<8x128xf32>
    %337 = arith.mulf %321, %329 : vector<8x128xf32>
    %338 = arith.addf %336, %337 : vector<8x128xf32>
    %339 = math.tanh %338 : vector<8x128xf32>
    %340 = arith.mulf %335, %339 : vector<8x128xf32>
    %341 = arith.index_cast %c7_i32 : i32 to index
    %c0_95 = arith.constant 0 : index
    %c0_96 = arith.constant 0 : index
    %342 = vector.load %arg16[%341, %c0_95, %c0_96] : memref<8x8x128xf32, #tpu.memory_space<vmem>>, vector<1x8x128xf32>
    %343 = vector.shape_cast %342 : vector<1x8x128xf32> to vector<8x128xf32>
    %344 = vector.shape_cast %340 : vector<8x128xf32> to vector<1x8x128xf32>
    tpu.vector_store %arg16[%341, %c0_95, %c0_96], %344 {strides = array<i32>} : memref<8x8x128xf32, #tpu.memory_space<vmem>>, vector<1x8x128xf32>,
    %c8_i32 = arith.constant 8 : i32
    %c0_97 = arith.constant 0 : index
    %c0_98 = arith.constant 0 : index
    %c0_99 = arith.constant 0 : index
    %345 = vector.load %arg14[%c0_97, %c0_98, %c0_99] : memref<2x8x128xf32, #tpu.memory_space<vmem>>, vector<1x8x128xf32>
    %346 = vector.shape_cast %345 : vector<1x8x128xf32> to vector<8x128xf32>
    %347 = vector.shape_cast %340 : vector<8x128xf32> to vector<1x8x128xf32>
    tpu.vector_store %arg14[%c0_97, %c0_98, %c0_99], %347 {strides = array<i32>} : memref<2x8x128xf32, #tpu.memory_space<vmem>>, vector<1x8x128xf32>,
    %c0_100 = arith.constant 0 : index
    %c0_101 = arith.constant 0 : index
    %c0_102 = arith.constant 0 : index
    %348 = vector.load %arg15[%c0_100, %c0_101, %c0_102] : memref<2x8x128xf32, #tpu.memory_space<vmem>>, vector<1x8x128xf32>
    %349 = vector.shape_cast %348 : vector<1x8x128xf32> to vector<8x128xf32>
    %350 = vector.shape_cast %338 : vector<8x128xf32> to vector<1x8x128xf32>
    tpu.vector_store %arg15[%c0_100, %c0_101, %c0_102], %350 {strides = array<i32>} : memref<2x8x128xf32, #tpu.memory_space<vmem>>, vector<1x8x128xf32>,
    %c0_103 = arith.constant 0 : index
    %c0_104 = arith.constant 0 : index
    %351 = vector.load %arg5[%c0_103, %c0_104] : memref<128x512xbf16, #tpu.memory_space<vmem>>, vector<128x512xbf16>
    %c0_105 = arith.constant 0 : index
    %c0_106 = arith.constant 0 : index
    %352 = vector.load %arg6[%c0_105, %c0_106] : memref<128x512xbf16, #tpu.memory_space<vmem>>, vector<128x512xbf16>
    %c0_107 = arith.constant 0 : index
    %c0_108 = arith.constant 0 : index
    %353 = vector.load %arg7[%c0_107, %c0_108] : memref<1x512xf32, #tpu.memory_space<vmem>>, vector<1x512xf32>
    %354 = vector.shape_cast %353 : vector<1x512xf32> to vector<1x512xf32>
    %355 = vector.broadcast %354 : vector<1x512xf32> to vector<8x512xf32>
    %c0_109 = arith.constant 0 : index
    %c0_110 = arith.constant 0 : index
    %c0_111 = arith.constant 0 : index
    %356 = vector.load %arg16[%c0_109, %c0_110, %c0_111] : memref<8x8x128xf32, #tpu.memory_space<vmem>>, vector<8x8x128xf32>
    %357 = vector.shape_cast %356 : vector<8x8x128xf32> to vector<64x128xf32>
    %358 = arith.truncf %357 : vector<64x128xf32> to vector<64x128xbf16>
    %cst_112 = arith.constant dense<0.000000e+00> : vector<64x512xf32>
    %359 = tpu.matmul %358, %351, %cst_112 {dimension_numbers = #tpu.dot_dimension_numbers<[1], [0], [0], [1], [0, 0, 1, 1], [], []>} : vector<64x128xbf16>, vector<128x512xbf16>, vector<64x512xf32> -> vector<64x512xf32>
    %360 = vector.shape_cast %359 : vector<64x512xf32> to vector<8x8x512xf32>
    %c0_113 = arith.constant 0 : index
    %c0_114 = arith.constant 0 : index
    %c0_115 = arith.constant 0 : index
    %361 = vector.load %arg17[%c0_113, %c0_114, %c0_115] : memref<8x8x512xf32, #tpu.memory_space<vmem>>, vector<8x8x512xf32>
    tpu.vector_store %arg17[%c0_113, %c0_114, %c0_115], %360 {strides = array<i32>} : memref<8x8x512xf32, #tpu.memory_space<vmem>>, vector<8x8x512xf32>,
    %c1_116 = arith.constant 1 : index
    %c0_117 = arith.constant 0 : index
    %c0_118 = arith.constant 0 : index
    %362 = vector.load %arg14[%c1_116, %c0_117, %c0_118] : memref<2x8x128xf32, #tpu.memory_space<vmem>>, vector<1x8x128xf32>
    %363 = vector.shape_cast %362 : vector<1x8x128xf32> to vector<8x128xf32>
    %c1_119 = arith.constant 1 : index
    %c0_120 = arith.constant 0 : index
    %c0_121 = arith.constant 0 : index
    %364 = vector.load %arg15[%c1_119, %c0_120, %c0_121] : memref<2x8x128xf32, #tpu.memory_space<vmem>>, vector<1x8x128xf32>
    %365 = vector.shape_cast %364 : vector<1x8x128xf32> to vector<8x128xf32>
    %c0_i32_122 = arith.constant 0 : i32
    %366 = arith.truncf %363 : vector<8x128xf32> to vector<8x128xbf16>
    %cst_123 = arith.constant dense<0.000000e+00> : vector<8x512xf32>
    %367 = tpu.matmul %366, %352, %cst_123 {dimension_numbers = #tpu.dot_dimension_numbers<[1], [0], [0], [1], [0, 0, 1, 1], [], []>} : vector<8x128xbf16>, vector<128x512xbf16>, vector<8x512xf32> -> vector<8x512xf32>
    %368 = arith.index_cast %c0_i32_122 : i32 to index
    %c0_124 = arith.constant 0 : index
    %c0_125 = arith.constant 0 : index
    %369 = vector.load %arg17[%368, %c0_124, %c0_125] : memref<8x8x512xf32, #tpu.memory_space<vmem>>, vector<1x8x512xf32>
    %370 = vector.shape_cast %369 : vector<1x8x512xf32> to vector<8x512xf32>
    %371 = arith.addf %367, %370 : vector<8x512xf32>
    %372 = arith.addf %371, %355 : vector<8x512xf32>
    %373 = vector.extract_strided_slice %372 {offsets = [0, 0], sizes = [8, 128], strides = [1, 1]} : vector<8x512xf32> to vector<8x128xf32>
    %374 = arith.negf %373 : vector<8x128xf32>
    %375 = math.exp %374 : vector<8x128xf32>
    %cst_126 = arith.constant 1.000000e+00 : f32
    %376 = vector.broadcast %cst_126 : f32 to vector<8x128xf32>
    %377 = arith.addf %376, %375 : vector<8x128xf32>
    %378 = arith.divf %376, %377 : vector<8x128xf32>
    %379 = vector.extract_strided_slice %372 {offsets = [0, 128], sizes = [8, 128], strides = [1, 1]} : vector<8x512xf32> to vector<8x128xf32>
    %380 = arith.negf %379 : vector<8x128xf32>
    %381 = math.exp %380 : vector<8x128xf32>
    %cst_127 = arith.constant 1.000000e+00 : f32
    %382 = vector.broadcast %cst_127 : f32 to vector<8x128xf32>
    %383 = arith.addf %382, %381 : vector<8x128xf32>
    %384 = arith.divf %382, %383 : vector<8x128xf32>
    %385 = vector.extract_strided_slice %372 {offsets = [0, 256], sizes = [8, 128], strides = [1, 1]} : vector<8x512xf32> to vector<8x128xf32>
    %386 = math.tanh %385 : vector<8x128xf32>
    %387 = vector.extract_strided_slice %372 {offsets = [0, 384], sizes = [8, 128], strides = [1, 1]} : vector<8x512xf32> to vector<8x128xf32>
    %388 = arith.negf %387 : vector<8x128xf32>
    %389 = math.exp %388 : vector<8x128xf32>
    %cst_128 = arith.constant 1.000000e+00 : f32
    %390 = vector.broadcast %cst_128 : f32 to vector<8x128xf32>
    %391 = arith.addf %390, %389 : vector<8x128xf32>
    %392 = arith.divf %390, %391 : vector<8x128xf32>
    %393 = arith.mulf %384, %365 : vector<8x128xf32>
    %394 = arith.mulf %378, %386 : vector<8x128xf32>
    %395 = arith.addf %393, %394 : vector<8x128xf32>
    %396 = math.tanh %395 : vector<8x128xf32>
    %397 = arith.mulf %392, %396 : vector<8x128xf32>
    %c1_i32_129 = arith.constant 1 : i32
    %398 = arith.truncf %397 : vector<8x128xf32> to vector<8x128xbf16>
    %cst_130 = arith.constant dense<0.000000e+00> : vector<8x512xf32>
    %399 = tpu.matmul %398, %352, %cst_130 {dimension_numbers = #tpu.dot_dimension_numbers<[1], [0], [0], [1], [0, 0, 1, 1], [], []>} : vector<8x128xbf16>, vector<128x512xbf16>, vector<8x512xf32> -> vector<8x512xf32>
    %400 = arith.index_cast %c1_i32_129 : i32 to index
    %c0_131 = arith.constant 0 : index
    %c0_132 = arith.constant 0 : index
    %401 = vector.load %arg17[%400, %c0_131, %c0_132] : memref<8x8x512xf32, #tpu.memory_space<vmem>>, vector<1x8x512xf32>
    %402 = vector.shape_cast %401 : vector<1x8x512xf32> to vector<8x512xf32>
    %403 = arith.addf %399, %402 : vector<8x512xf32>
    %404 = arith.addf %403, %355 : vector<8x512xf32>
    %405 = vector.extract_strided_slice %404 {offsets = [0, 0], sizes = [8, 128], strides = [1, 1]} : vector<8x512xf32> to vector<8x128xf32>
    %406 = arith.negf %405 : vector<8x128xf32>
    %407 = math.exp %406 : vector<8x128xf32>
    %cst_133 = arith.constant 1.000000e+00 : f32
    %408 = vector.broadcast %cst_133 : f32 to vector<8x128xf32>
    %409 = arith.addf %408, %407 : vector<8x128xf32>
    %410 = arith.divf %408, %409 : vector<8x128xf32>
    %411 = vector.extract_strided_slice %404 {offsets = [0, 128], sizes = [8, 128], strides = [1, 1]} : vector<8x512xf32> to vector<8x128xf32>
    %412 = arith.negf %411 : vector<8x128xf32>
    %413 = math.exp %412 : vector<8x128xf32>
    %cst_134 = arith.constant 1.000000e+00 : f32
    %414 = vector.broadcast %cst_134 : f32 to vector<8x128xf32>
    %415 = arith.addf %414, %413 : vector<8x128xf32>
    %416 = arith.divf %414, %415 : vector<8x128xf32>
    %417 = vector.extract_strided_slice %404 {offsets = [0, 256], sizes = [8, 128], strides = [1, 1]} : vector<8x512xf32> to vector<8x128xf32>
    %418 = math.tanh %417 : vector<8x128xf32>
    %419 = vector.extract_strided_slice %404 {offsets = [0, 384], sizes = [8, 128], strides = [1, 1]} : vector<8x512xf32> to vector<8x128xf32>
    %420 = arith.negf %419 : vector<8x128xf32>
    %421 = math.exp %420 : vector<8x128xf32>
    %cst_135 = arith.constant 1.000000e+00 : f32
    %422 = vector.broadcast %cst_135 : f32 to vector<8x128xf32>
    %423 = arith.addf %422, %421 : vector<8x128xf32>
    %424 = arith.divf %422, %423 : vector<8x128xf32>
    %425 = arith.mulf %416, %395 : vector<8x128xf32>
    %426 = arith.mulf %410, %418 : vector<8x128xf32>
    %427 = arith.addf %425, %426 : vector<8x128xf32>
    %428 = math.tanh %427 : vector<8x128xf32>
    %429 = arith.mulf %424, %428 : vector<8x128xf32>
    %c2_i32_136 = arith.constant 2 : i32
    %430 = arith.truncf %429 : vector<8x128xf32> to vector<8x128xbf16>
    %cst_137 = arith.constant dense<0.000000e+00> : vector<8x512xf32>
    %431 = tpu.matmul %430, %352, %cst_137 {dimension_numbers = #tpu.dot_dimension_numbers<[1], [0], [0], [1], [0, 0, 1, 1], [], []>} : vector<8x128xbf16>, vector<128x512xbf16>, vector<8x512xf32> -> vector<8x512xf32>
    %432 = arith.index_cast %c2_i32_136 : i32 to index
    %c0_138 = arith.constant 0 : index
    %c0_139 = arith.constant 0 : index
    %433 = vector.load %arg17[%432, %c0_138, %c0_139] : memref<8x8x512xf32, #tpu.memory_space<vmem>>, vector<1x8x512xf32>
    %434 = vector.shape_cast %433 : vector<1x8x512xf32> to vector<8x512xf32>
    %435 = arith.addf %431, %434 : vector<8x512xf32>
    %436 = arith.addf %435, %355 : vector<8x512xf32>
    %437 = vector.extract_strided_slice %436 {offsets = [0, 0], sizes = [8, 128], strides = [1, 1]} : vector<8x512xf32> to vector<8x128xf32>
    %438 = arith.negf %437 : vector<8x128xf32>
    %439 = math.exp %438 : vector<8x128xf32>
    %cst_140 = arith.constant 1.000000e+00 : f32
    %440 = vector.broadcast %cst_140 : f32 to vector<8x128xf32>
    %441 = arith.addf %440, %439 : vector<8x128xf32>
    %442 = arith.divf %440, %441 : vector<8x128xf32>
    %443 = vector.extract_strided_slice %436 {offsets = [0, 128], sizes = [8, 128], strides = [1, 1]} : vector<8x512xf32> to vector<8x128xf32>
    %444 = arith.negf %443 : vector<8x128xf32>
    %445 = math.exp %444 : vector<8x128xf32>
    %cst_141 = arith.constant 1.000000e+00 : f32
    %446 = vector.broadcast %cst_141 : f32 to vector<8x128xf32>
    %447 = arith.addf %446, %445 : vector<8x128xf32>
    %448 = arith.divf %446, %447 : vector<8x128xf32>
    %449 = vector.extract_strided_slice %436 {offsets = [0, 256], sizes = [8, 128], strides = [1, 1]} : vector<8x512xf32> to vector<8x128xf32>
    %450 = math.tanh %449 : vector<8x128xf32>
    %451 = vector.extract_strided_slice %436 {offsets = [0, 384], sizes = [8, 128], strides = [1, 1]} : vector<8x512xf32> to vector<8x128xf32>
    %452 = arith.negf %451 : vector<8x128xf32>
    %453 = math.exp %452 : vector<8x128xf32>
    %cst_142 = arith.constant 1.000000e+00 : f32
    %454 = vector.broadcast %cst_142 : f32 to vector<8x128xf32>
    %455 = arith.addf %454, %453 : vector<8x128xf32>
    %456 = arith.divf %454, %455 : vector<8x128xf32>
    %457 = arith.mulf %448, %427 : vector<8x128xf32>
    %458 = arith.mulf %442, %450 : vector<8x128xf32>
    %459 = arith.addf %457, %458 : vector<8x128xf32>
    %460 = math.tanh %459 : vector<8x128xf32>
    %461 = arith.mulf %456, %460 : vector<8x128xf32>
    %c3_i32_143 = arith.constant 3 : i32
    %462 = arith.truncf %461 : vector<8x128xf32> to vector<8x128xbf16>
    %cst_144 = arith.constant dense<0.000000e+00> : vector<8x512xf32>
    %463 = tpu.matmul %462, %352, %cst_144 {dimension_numbers = #tpu.dot_dimension_numbers<[1], [0], [0], [1], [0, 0, 1, 1], [], []>} : vector<8x128xbf16>, vector<128x512xbf16>, vector<8x512xf32> -> vector<8x512xf32>
    %464 = arith.index_cast %c3_i32_143 : i32 to index
    %c0_145 = arith.constant 0 : index
    %c0_146 = arith.constant 0 : index
    %465 = vector.load %arg17[%464, %c0_145, %c0_146] : memref<8x8x512xf32, #tpu.memory_space<vmem>>, vector<1x8x512xf32>
    %466 = vector.shape_cast %465 : vector<1x8x512xf32> to vector<8x512xf32>
    %467 = arith.addf %463, %466 : vector<8x512xf32>
    %468 = arith.addf %467, %355 : vector<8x512xf32>
    %469 = vector.extract_strided_slice %468 {offsets = [0, 0], sizes = [8, 128], strides = [1, 1]} : vector<8x512xf32> to vector<8x128xf32>
    %470 = arith.negf %469 : vector<8x128xf32>
    %471 = math.exp %470 : vector<8x128xf32>
    %cst_147 = arith.constant 1.000000e+00 : f32
    %472 = vector.broadcast %cst_147 : f32 to vector<8x128xf32>
    %473 = arith.addf %472, %471 : vector<8x128xf32>
    %474 = arith.divf %472, %473 : vector<8x128xf32>
    %475 = vector.extract_strided_slice %468 {offsets = [0, 128], sizes = [8, 128], strides = [1, 1]} : vector<8x512xf32> to vector<8x128xf32>
    %476 = arith.negf %475 : vector<8x128xf32>
    %477 = math.exp %476 : vector<8x128xf32>
    %cst_148 = arith.constant 1.000000e+00 : f32
    %478 = vector.broadcast %cst_148 : f32 to vector<8x128xf32>
    %479 = arith.addf %478, %477 : vector<8x128xf32>
    %480 = arith.divf %478, %479 : vector<8x128xf32>
    %481 = vector.extract_strided_slice %468 {offsets = [0, 256], sizes = [8, 128], strides = [1, 1]} : vector<8x512xf32> to vector<8x128xf32>
    %482 = math.tanh %481 : vector<8x128xf32>
    %483 = vector.extract_strided_slice %468 {offsets = [0, 384], sizes = [8, 128], strides = [1, 1]} : vector<8x512xf32> to vector<8x128xf32>
    %484 = arith.negf %483 : vector<8x128xf32>
    %485 = math.exp %484 : vector<8x128xf32>
    %cst_149 = arith.constant 1.000000e+00 : f32
    %486 = vector.broadcast %cst_149 : f32 to vector<8x128xf32>
    %487 = arith.addf %486, %485 : vector<8x128xf32>
    %488 = arith.divf %486, %487 : vector<8x128xf32>
    %489 = arith.mulf %480, %459 : vector<8x128xf32>
    %490 = arith.mulf %474, %482 : vector<8x128xf32>
    %491 = arith.addf %489, %490 : vector<8x128xf32>
    %492 = math.tanh %491 : vector<8x128xf32>
    %493 = arith.mulf %488, %492 : vector<8x128xf32>
    %c4_i32_150 = arith.constant 4 : i32
    %494 = arith.truncf %493 : vector<8x128xf32> to vector<8x128xbf16>
    %cst_151 = arith.constant dense<0.000000e+00> : vector<8x512xf32>
    %495 = tpu.matmul %494, %352, %cst_151 {dimension_numbers = #tpu.dot_dimension_numbers<[1], [0], [0], [1], [0, 0, 1, 1], [], []>} : vector<8x128xbf16>, vector<128x512xbf16>, vector<8x512xf32> -> vector<8x512xf32>
    %496 = arith.index_cast %c4_i32_150 : i32 to index
    %c0_152 = arith.constant 0 : index
    %c0_153 = arith.constant 0 : index
    %497 = vector.load %arg17[%496, %c0_152, %c0_153] : memref<8x8x512xf32, #tpu.memory_space<vmem>>, vector<1x8x512xf32>
    %498 = vector.shape_cast %497 : vector<1x8x512xf32> to vector<8x512xf32>
    %499 = arith.addf %495, %498 : vector<8x512xf32>
    %500 = arith.addf %499, %355 : vector<8x512xf32>
    %501 = vector.extract_strided_slice %500 {offsets = [0, 0], sizes = [8, 128], strides = [1, 1]} : vector<8x512xf32> to vector<8x128xf32>
    %502 = arith.negf %501 : vector<8x128xf32>
    %503 = math.exp %502 : vector<8x128xf32>
    %cst_154 = arith.constant 1.000000e+00 : f32
    %504 = vector.broadcast %cst_154 : f32 to vector<8x128xf32>
    %505 = arith.addf %504, %503 : vector<8x128xf32>
    %506 = arith.divf %504, %505 : vector<8x128xf32>
    %507 = vector.extract_strided_slice %500 {offsets = [0, 128], sizes = [8, 128], strides = [1, 1]} : vector<8x512xf32> to vector<8x128xf32>
    %508 = arith.negf %507 : vector<8x128xf32>
    %509 = math.exp %508 : vector<8x128xf32>
    %cst_155 = arith.constant 1.000000e+00 : f32
    %510 = vector.broadcast %cst_155 : f32 to vector<8x128xf32>
    %511 = arith.addf %510, %509 : vector<8x128xf32>
    %512 = arith.divf %510, %511 : vector<8x128xf32>
    %513 = vector.extract_strided_slice %500 {offsets = [0, 256], sizes = [8, 128], strides = [1, 1]} : vector<8x512xf32> to vector<8x128xf32>
    %514 = math.tanh %513 : vector<8x128xf32>
    %515 = vector.extract_strided_slice %500 {offsets = [0, 384], sizes = [8, 128], strides = [1, 1]} : vector<8x512xf32> to vector<8x128xf32>
    %516 = arith.negf %515 : vector<8x128xf32>
    %517 = math.exp %516 : vector<8x128xf32>
    %cst_156 = arith.constant 1.000000e+00 : f32
    %518 = vector.broadcast %cst_156 : f32 to vector<8x128xf32>
    %519 = arith.addf %518, %517 : vector<8x128xf32>
    %520 = arith.divf %518, %519 : vector<8x128xf32>
    %521 = arith.mulf %512, %491 : vector<8x128xf32>
    %522 = arith.mulf %506, %514 : vector<8x128xf32>
    %523 = arith.addf %521, %522 : vector<8x128xf32>
    %524 = math.tanh %523 : vector<8x128xf32>
    %525 = arith.mulf %520, %524 : vector<8x128xf32>
    %c5_i32_157 = arith.constant 5 : i32
    %526 = arith.truncf %525 : vector<8x128xf32> to vector<8x128xbf16>
    %cst_158 = arith.constant dense<0.000000e+00> : vector<8x512xf32>
    %527 = tpu.matmul %526, %352, %cst_158 {dimension_numbers = #tpu.dot_dimension_numbers<[1], [0], [0], [1], [0, 0, 1, 1], [], []>} : vector<8x128xbf16>, vector<128x512xbf16>, vector<8x512xf32> -> vector<8x512xf32>
    %528 = arith.index_cast %c5_i32_157 : i32 to index
    %c0_159 = arith.constant 0 : index
    %c0_160 = arith.constant 0 : index
    %529 = vector.load %arg17[%528, %c0_159, %c0_160] : memref<8x8x512xf32, #tpu.memory_space<vmem>>, vector<1x8x512xf32>
    %530 = vector.shape_cast %529 : vector<1x8x512xf32> to vector<8x512xf32>
    %531 = arith.addf %527, %530 : vector<8x512xf32>
    %532 = arith.addf %531, %355 : vector<8x512xf32>
    %533 = vector.extract_strided_slice %532 {offsets = [0, 0], sizes = [8, 128], strides = [1, 1]} : vector<8x512xf32> to vector<8x128xf32>
    %534 = arith.negf %533 : vector<8x128xf32>
    %535 = math.exp %534 : vector<8x128xf32>
    %cst_161 = arith.constant 1.000000e+00 : f32
    %536 = vector.broadcast %cst_161 : f32 to vector<8x128xf32>
    %537 = arith.addf %536, %535 : vector<8x128xf32>
    %538 = arith.divf %536, %537 : vector<8x128xf32>
    %539 = vector.extract_strided_slice %532 {offsets = [0, 128], sizes = [8, 128], strides = [1, 1]} : vector<8x512xf32> to vector<8x128xf32>
    %540 = arith.negf %539 : vector<8x128xf32>
    %541 = math.exp %540 : vector<8x128xf32>
    %cst_162 = arith.constant 1.000000e+00 : f32
    %542 = vector.broadcast %cst_162 : f32 to vector<8x128xf32>
    %543 = arith.addf %542, %541 : vector<8x128xf32>
    %544 = arith.divf %542, %543 : vector<8x128xf32>
    %545 = vector.extract_strided_slice %532 {offsets = [0, 256], sizes = [8, 128], strides = [1, 1]} : vector<8x512xf32> to vector<8x128xf32>
    %546 = math.tanh %545 : vector<8x128xf32>
    %547 = vector.extract_strided_slice %532 {offsets = [0, 384], sizes = [8, 128], strides = [1, 1]} : vector<8x512xf32> to vector<8x128xf32>
    %548 = arith.negf %547 : vector<8x128xf32>
    %549 = math.exp %548 : vector<8x128xf32>
    %cst_163 = arith.constant 1.000000e+00 : f32
    %550 = vector.broadcast %cst_163 : f32 to vector<8x128xf32>
    %551 = arith.addf %550, %549 : vector<8x128xf32>
    %552 = arith.divf %550, %551 : vector<8x128xf32>
    %553 = arith.mulf %544, %523 : vector<8x128xf32>
    %554 = arith.mulf %538, %546 : vector<8x128xf32>
    %555 = arith.addf %553, %554 : vector<8x128xf32>
    %556 = math.tanh %555 : vector<8x128xf32>
    %557 = arith.mulf %552, %556 : vector<8x128xf32>
    %c6_i32_164 = arith.constant 6 : i32
    %558 = arith.truncf %557 : vector<8x128xf32> to vector<8x128xbf16>
    %cst_165 = arith.constant dense<0.000000e+00> : vector<8x512xf32>
    %559 = tpu.matmul %558, %352, %cst_165 {dimension_numbers = #tpu.dot_dimension_numbers<[1], [0], [0], [1], [0, 0, 1, 1], [], []>} : vector<8x128xbf16>, vector<128x512xbf16>, vector<8x512xf32> -> vector<8x512xf32>
    %560 = arith.index_cast %c6_i32_164 : i32 to index
    %c0_166 = arith.constant 0 : index
    %c0_167 = arith.constant 0 : index
    %561 = vector.load %arg17[%560, %c0_166, %c0_167] : memref<8x8x512xf32, #tpu.memory_space<vmem>>, vector<1x8x512xf32>
    %562 = vector.shape_cast %561 : vector<1x8x512xf32> to vector<8x512xf32>
    %563 = arith.addf %559, %562 : vector<8x512xf32>
    %564 = arith.addf %563, %355 : vector<8x512xf32>
    %565 = vector.extract_strided_slice %564 {offsets = [0, 0], sizes = [8, 128], strides = [1, 1]} : vector<8x512xf32> to vector<8x128xf32>
    %566 = arith.negf %565 : vector<8x128xf32>
    %567 = math.exp %566 : vector<8x128xf32>
    %cst_168 = arith.constant 1.000000e+00 : f32
    %568 = vector.broadcast %cst_168 : f32 to vector<8x128xf32>
    %569 = arith.addf %568, %567 : vector<8x128xf32>
    %570 = arith.divf %568, %569 : vector<8x128xf32>
    %571 = vector.extract_strided_slice %564 {offsets = [0, 128], sizes = [8, 128], strides = [1, 1]} : vector<8x512xf32> to vector<8x128xf32>
    %572 = arith.negf %571 : vector<8x128xf32>
    %573 = math.exp %572 : vector<8x128xf32>
    %cst_169 = arith.constant 1.000000e+00 : f32
    %574 = vector.broadcast %cst_169 : f32 to vector<8x128xf32>
    %575 = arith.addf %574, %573 : vector<8x128xf32>
    %576 = arith.divf %574, %575 : vector<8x128xf32>
    %577 = vector.extract_strided_slice %564 {offsets = [0, 256], sizes = [8, 128], strides = [1, 1]} : vector<8x512xf32> to vector<8x128xf32>
    %578 = math.tanh %577 : vector<8x128xf32>
    %579 = vector.extract_strided_slice %564 {offsets = [0, 384], sizes = [8, 128], strides = [1, 1]} : vector<8x512xf32> to vector<8x128xf32>
    %580 = arith.negf %579 : vector<8x128xf32>
    %581 = math.exp %580 : vector<8x128xf32>
    %cst_170 = arith.constant 1.000000e+00 : f32
    %582 = vector.broadcast %cst_170 : f32 to vector<8x128xf32>
    %583 = arith.addf %582, %581 : vector<8x128xf32>
    %584 = arith.divf %582, %583 : vector<8x128xf32>
    %585 = arith.mulf %576, %555 : vector<8x128xf32>
    %586 = arith.mulf %570, %578 : vector<8x128xf32>
    %587 = arith.addf %585, %586 : vector<8x128xf32>
    %588 = math.tanh %587 : vector<8x128xf32>
    %589 = arith.mulf %584, %588 : vector<8x128xf32>
    %c7_i32_171 = arith.constant 7 : i32
    %590 = arith.truncf %589 : vector<8x128xf32> to vector<8x128xbf16>
    %cst_172 = arith.constant dense<0.000000e+00> : vector<8x512xf32>
    %591 = tpu.matmul %590, %352, %cst_172 {dimension_numbers = #tpu.dot_dimension_numbers<[1], [0], [0], [1], [0, 0, 1, 1], [], []>} : vector<8x128xbf16>, vector<128x512xbf16>, vector<8x512xf32> -> vector<8x512xf32>
    %592 = arith.index_cast %c7_i32_171 : i32 to index
    %c0_173 = arith.constant 0 : index
    %c0_174 = arith.constant 0 : index
    %593 = vector.load %arg17[%592, %c0_173, %c0_174] : memref<8x8x512xf32, #tpu.memory_space<vmem>>, vector<1x8x512xf32>
    %594 = vector.shape_cast %593 : vector<1x8x512xf32> to vector<8x512xf32>
    %595 = arith.addf %591, %594 : vector<8x512xf32>
    %596 = arith.addf %595, %355 : vector<8x512xf32>
    %597 = vector.extract_strided_slice %596 {offsets = [0, 0], sizes = [8, 128], strides = [1, 1]} : vector<8x512xf32> to vector<8x128xf32>
    %598 = arith.negf %597 : vector<8x128xf32>
    %599 = math.exp %598 : vector<8x128xf32>
    %cst_175 = arith.constant 1.000000e+00 : f32
    %600 = vector.broadcast %cst_175 : f32 to vector<8x128xf32>
    %601 = arith.addf %600, %599 : vector<8x128xf32>
    %602 = arith.divf %600, %601 : vector<8x128xf32>
    %603 = vector.extract_strided_slice %596 {offsets = [0, 128], sizes = [8, 128], strides = [1, 1]} : vector<8x512xf32> to vector<8x128xf32>
    %604 = arith.negf %603 : vector<8x128xf32>
    %605 = math.exp %604 : vector<8x128xf32>
    %cst_176 = arith.constant 1.000000e+00 : f32
    %606 = vector.broadcast %cst_176 : f32 to vector<8x128xf32>
    %607 = arith.addf %606, %605 : vector<8x128xf32>
    %608 = arith.divf %606, %607 : vector<8x128xf32>
    %609 = vector.extract_strided_slice %596 {offsets = [0, 256], sizes = [8, 128], strides = [1, 1]} : vector<8x512xf32> to vector<8x128xf32>
    %610 = math.tanh %609 : vector<8x128xf32>
    %611 = vector.extract_strided_slice %596 {offsets = [0, 384], sizes = [8, 128], strides = [1, 1]} : vector<8x512xf32> to vector<8x128xf32>
    %612 = arith.negf %611 : vector<8x128xf32>
    %613 = math.exp %612 : vector<8x128xf32>
    %cst_177 = arith.constant 1.000000e+00 : f32
    %614 = vector.broadcast %cst_177 : f32 to vector<8x128xf32>
    %615 = arith.addf %614, %613 : vector<8x128xf32>
    %616 = arith.divf %614, %615 : vector<8x128xf32>
    %617 = arith.mulf %608, %587 : vector<8x128xf32>
    %618 = arith.mulf %602, %610 : vector<8x128xf32>
    %619 = arith.addf %617, %618 : vector<8x128xf32>
    %620 = math.tanh %619 : vector<8x128xf32>
    %621 = arith.mulf %616, %620 : vector<8x128xf32>
    %c8_i32_178 = arith.constant 8 : i32
    %c1_179 = arith.constant 1 : index
    %c0_180 = arith.constant 0 : index
    %c0_181 = arith.constant 0 : index
    %622 = vector.load %arg14[%c1_179, %c0_180, %c0_181] : memref<2x8x128xf32, #tpu.memory_space<vmem>>, vector<1x8x128xf32>
    %623 = vector.shape_cast %622 : vector<1x8x128xf32> to vector<8x128xf32>
    %624 = vector.shape_cast %621 : vector<8x128xf32> to vector<1x8x128xf32>
    tpu.vector_store %arg14[%c1_179, %c0_180, %c0_181], %624 {strides = array<i32>} : memref<2x8x128xf32, #tpu.memory_space<vmem>>, vector<1x8x128xf32>,
    %c1_182 = arith.constant 1 : index
    %c0_183 = arith.constant 0 : index
    %c0_184 = arith.constant 0 : index
    %625 = vector.load %arg15[%c1_182, %c0_183, %c0_184] : memref<2x8x128xf32, #tpu.memory_space<vmem>>, vector<1x8x128xf32>
    %626 = vector.shape_cast %625 : vector<1x8x128xf32> to vector<8x128xf32>
    %627 = vector.shape_cast %619 : vector<8x128xf32> to vector<1x8x128xf32>
    tpu.vector_store %arg15[%c1_182, %c0_183, %c0_184], %627 {strides = array<i32>} : memref<2x8x128xf32, #tpu.memory_space<vmem>>, vector<1x8x128xf32>,
    %c1_i32_185 = arith.constant 1 : i32
    %628 = arith.cmpi eq, %arg0, %c1_i32_185 : i32
    %629 = arith.extui %628 : i1 to i32
    %c0_i32_186 = arith.constant 0 : i32
    %630 = arith.cmpi ne, %629, %c0_i32_186 : i32
    scf.if %630 {
      %c1_187 = arith.constant 1 : index
      %c0_188 = arith.constant 0 : index
      %c0_189 = arith.constant 0 : index
      %631 = vector.load %arg14[%c1_187, %c0_188, %c0_189] : memref<2x8x128xf32, #tpu.memory_space<vmem>>, vector<1x8x128xf32>
      %632 = vector.shape_cast %631 : vector<1x8x128xf32> to vector<8x128xf32>
      %633 = arith.truncf %632 : vector<8x128xf32> to vector<8x128xbf16>
      %c0_190 = arith.constant 0 : index
      %c0_191 = arith.constant 0 : index
      %634 = vector.load %arg8[%c0_190, %c0_191] : memref<128x128xbf16, #tpu.memory_space<vmem>>, vector<128x128xbf16>
      %cst_192 = arith.constant dense<0.000000e+00> : vector<8x128xf32>
      %635 = tpu.matmul %633, %634, %cst_192 {dimension_numbers = #tpu.dot_dimension_numbers<[1], [0], [0], [1], [0, 0, 1, 1], [], []>} : vector<8x128xbf16>, vector<128x128xbf16>, vector<8x128xf32> -> vector<8x128xf32>
      %c0_193 = arith.constant 0 : index
      %c0_194 = arith.constant 0 : index
      %636 = vector.load %arg9[%c0_193, %c0_194] : memref<1x128xf32, #tpu.memory_space<vmem>>, vector<1x128xf32>
      %637 = vector.broadcast %636 : vector<1x128xf32> to vector<8x128xf32>
      %638 = arith.addf %635, %637 : vector<8x128xf32>
      %cst_195 = arith.constant 0.000000e+00 : f32
      %639 = vector.broadcast %cst_195 : f32 to vector<8x128xf32>
      %640 = arith.maximumf %638, %639 : vector<8x128xf32>
      %c0_196 = arith.constant 0 : index
      %c0_197 = arith.constant 0 : index
      %641 = vector.load %arg12[%c0_196, %c0_197] : memref<8x128xf32, #tpu.memory_space<vmem>>, vector<8x128xf32>
      %642 = arith.mulf %640, %641 : vector<8x128xf32>
      %643 = arith.truncf %642 : vector<8x128xf32> to vector<8x128xbf16>
      %c0_198 = arith.constant 0 : index
      %c0_199 = arith.constant 0 : index
      %644 = vector.load %arg10[%c0_198, %c0_199] : memref<128x128xbf16, #tpu.memory_space<vmem>>, vector<128x128xbf16>
      %cst_200 = arith.constant dense<0.000000e+00> : vector<8x128xf32>
      %645 = tpu.matmul %643, %644, %cst_200 {dimension_numbers = #tpu.dot_dimension_numbers<[1], [0], [0], [1], [0, 0, 1, 1], [], []>} : vector<8x128xbf16>, vector<128x128xbf16>, vector<8x128xf32> -> vector<8x128xf32>
      %c0_201 = arith.constant 0 : index
      %c0_202 = arith.constant 0 : index
      %646 = vector.load %arg11[%c0_201, %c0_202] : memref<1x128xf32, #tpu.memory_space<vmem>>, vector<1x128xf32>
      %647 = vector.broadcast %646 : vector<1x128xf32> to vector<8x128xf32>
      %648 = arith.addf %645, %647 : vector<8x128xf32>
      %c0_203 = arith.constant 0 : index
      %c0_204 = arith.constant 0 : index
      %649 = vector.load %arg13[%c0_203, %c0_204] : memref<8x128xf32, #tpu.memory_space<vmem>>, vector<8x128xf32>
      tpu.vector_store %arg13[%c0_203, %c0_204], %648 {strides = array<i32>} : memref<8x128xf32, #tpu.memory_space<vmem>>, vector<8x128xf32>,
    } else {
    }
    return
  }
  func.func @transform_0(%arg0: i32) -> (i32, i32, i32) {
    %c0_i32 = arith.constant 0 : i32
    %c0_i32_0 = arith.constant 0 : i32
    %c0_i32_1 = arith.constant 0 : i32
    return %c0_i32, %arg0, %c0_i32_0 : i32, i32, i32
  }
  func.func @transform_1(%arg0: i32) -> (i32, i32) {
    %c0_i32 = arith.constant 0 : i32
    %c0_i32_0 = arith.constant 0 : i32
    %c0_i32_1 = arith.constant 0 : i32
    return %c0_i32, %c0_i32_0 : i32, i32
  }
  func.func @transform_2(%arg0: i32) -> (i32, i32) {
    %c0_i32 = arith.constant 0 : i32
    %c0_i32_0 = arith.constant 0 : i32
    %c0_i32_1 = arith.constant 0 : i32
    return %c0_i32, %c0_i32_0 : i32, i32
  }
  func.func @transform_3(%arg0: i32) -> (i32, i32) {
    %c0_i32 = arith.constant 0 : i32
    %c0_i32_0 = arith.constant 0 : i32
    %c0_i32_1 = arith.constant 0 : i32
    return %c0_i32, %c0_i32_0 : i32, i32
  }
  func.func @transform_4(%arg0: i32) -> (i32, i32) {
    %c0_i32 = arith.constant 0 : i32
    %c0_i32_0 = arith.constant 0 : i32
    %c0_i32_1 = arith.constant 0 : i32
    return %c0_i32, %c0_i32_0 : i32, i32
  }
  func.func @transform_5(%arg0: i32) -> (i32, i32) {
    %c0_i32 = arith.constant 0 : i32
    %c0_i32_0 = arith.constant 0 : i32
    %c0_i32_1 = arith.constant 0 : i32
    return %c0_i32, %c0_i32_0 : i32, i32
  }
  func.func @transform_6(%arg0: i32) -> (i32, i32) {
    %c0_i32 = arith.constant 0 : i32
    %c0_i32_0 = arith.constant 0 : i32
    %c0_i32_1 = arith.constant 0 : i32
    return %c0_i32, %c0_i32_0 : i32, i32
  }
  func.func @transform_7(%arg0: i32) -> (i32, i32) {
    %c0_i32 = arith.constant 0 : i32
    %c0_i32_0 = arith.constant 0 : i32
    %c0_i32_1 = arith.constant 0 : i32
    return %c0_i32, %c0_i32_0 : i32, i32
  }
  func.func @transform_8(%arg0: i32) -> (i32, i32) {
    %c0_i32 = arith.constant 0 : i32
    %c0_i32_0 = arith.constant 0 : i32
    %c0_i32_1 = arith.constant 0 : i32
    return %c0_i32, %c0_i32_0 : i32, i32
  }
  func.func @transform_9(%arg0: i32) -> (i32, i32) {
    %c0_i32 = arith.constant 0 : i32
    %c0_i32_0 = arith.constant 0 : i32
    %c0_i32_1 = arith.constant 0 : i32
    return %c0_i32, %c0_i32_0 : i32, i32
  }
  func.func @transform_10(%arg0: i32) -> (i32, i32) {
    %c0_i32 = arith.constant 0 : i32
    %c0_i32_0 = arith.constant 0 : i32
    %c0_i32_1 = arith.constant 0 : i32
    return %c0_i32, %c0_i32_0 : i32, i32
  }
  func.func @transform_11(%arg0: i32) -> (i32, i32) {
    %c0_i32 = arith.constant 0 : i32
    %c0_i32_0 = arith.constant 0 : i32
    %c0_i32_1 = arith.constant 0 : i32
    return %c0_i32, %c0_i32_0 : i32, i32
  }
  func.func @transform_12(%arg0: i32) -> (i32, i32) {
    %c0_i32 = arith.constant 0 : i32
    %c0_i32_0 = arith.constant 0 : i32
    %c0_i32_1 = arith.constant 0 : i32
    return %c0_i32, %c0_i32_0 : i32, i32
  }
}

</mosaic_0001>

<llo_original>
// kernel: tpu_custom_call.1
$region0: #{tpu_custom_call.1}
  #allocation0 [shape = 'u32[]', space=smem, size = 0x4, offset = 0x4, fixed_abs, tag = 'smem constant byte address 0x4 - core index']
  #allocation1 [shape = 'u32[72,128]{1,0:T(1,128)}', space=vmem, size = 0x9000, scoped, tag = 'internal scratch']
  #allocation2 [shape = 'f32[2,8,128]{2,1,0:T(8,128)}', space=vmem, size = 0x2000, scoped, tag = 'scratch operand']
  #allocation3 [shape = 'f32[2,8,128]{2,1,0:T(8,128)}', space=vmem, size = 0x2000, scoped, tag = 'scratch operand']
  #allocation4 [shape = 'f32[8,8,128]{2,1,0:T(8,128)}', space=vmem, size = 0x8000, scoped, tag = 'scratch operand']
  #allocation5 [shape = 'f32[8,8,512]{2,1,0:T(8,128)}', space=vmem, size = 0x20000, scoped, tag = 'scratch operand']
  %s0 = inlined_call_operand.hbm [shape: f32[8,16,128], index: 0, kind: input, shape index: {}]
  %s1 = inlined_call_operand.hbm [shape: bf16[128,512], index: 1, kind: input, shape index: {}]
  %s2 = inlined_call_operand.hbm [shape: bf16[128,512], index: 2, kind: input, shape index: {}]
  %s3 = inlined_call_operand.hbm [shape: f32[1,512], index: 3, kind: input, shape index: {}]
  %s4 = inlined_call_operand.hbm [shape: bf16[128,512], index: 4, kind: input, shape index: {}]
  %s5 = inlined_call_operand.hbm [shape: bf16[128,512], index: 5, kind: input, shape index: {}]
  %s6 = inlined_call_operand.hbm [shape: f32[1,512], index: 6, kind: input, shape index: {}]
  %s7 = inlined_call_operand.hbm [shape: bf16[128,128], index: 7, kind: input, shape index: {}]
  %s8 = inlined_call_operand.vmem [shape: f32[1,128], index: 8, kind: input, shape index: {}]
  %s9 = inlined_call_operand.hbm [shape: bf16[128,128], index: 9, kind: input, shape index: {}]
  %s10 = inlined_call_operand.vmem [shape: f32[1,128], index: 10, kind: input, shape index: {}]
  %s11 = inlined_call_operand.vmem [shape: f32[8,128], index: 11, kind: input, shape index: {}]
  %s12 = inlined_call_operand.hbm [shape: f32[8,128], index: 12, kind: output, shape index: {}]
  %s13 = sld [smem:[#allocation0]]
  $region125: #{tpu_custom_call.1} parent=0
    _
  %s15 = ssub.s32 1, %s13
  %s16 = scalar_select 0, %s15, %s13
  $region1: #{tpu_custom_call.1} parent=0
    #allocation6 [shape = 'u8[65536]{0}', space=vmem, size = 0x10000, scoped, tag = 'input window, operand 0']
    #allocation7 [shape = 's32[2]{0}', space=sflag, size = 0x8, scoped, tag = 'scoped memory for tpu_custom_call.1']
    #allocation8 [shape = 's32[2]{0}', space=sflag, size = 0x8, scoped, tag = 'scoped memory for tpu_custom_call.1']
    #allocation9 [shape = 'u8[131072]{0}', space=vmem, size = 0x20000, scoped, tag = 'input window, operand 1, single buffered']
    #allocation10 [shape = 's32[1]{0}', space=sflag, size = 0x4, scoped, tag = 'scoped memory for tpu_custom_call.1']
    #allocation11 [shape = 'u8[131072]{0}', space=vmem, size = 0x20000, scoped, tag = 'input window, operand 2, single buffered']
    #allocation12 [shape = 'u8[2048]{0}', space=vmem, size = 0x800, scoped, tag = 'input window, operand 3, single buffered']
    #allocation13 [shape = 's32[1]{0}', space=sflag, size = 0x4, scoped, tag = 'scoped memory for tpu_custom_call.1']
    #allocation14 [shape = 'u8[131072]{0}', space=vmem, size = 0x20000, scoped, tag = 'input window, operand 4, single buffered']
    #allocation15 [shape = 'u8[131072]{0}', space=vmem, size = 0x20000, scoped, tag = 'input window, operand 5, single buffered']
    #allocation16 [shape = 's32[1]{0}', space=sflag, size = 0x4, scoped, tag = 'scoped memory for tpu_custom_call.1']
    #allocation17 [shape = 'u8[2048]{0}', space=vmem, size = 0x800, scoped, tag = 'input window, operand 6, single buffered']
    #allocation18 [shape = 'u8[32768]{0}', space=vmem, size = 0x8000, scoped, tag = 'input window, operand 7, single buffered']
    #allocation19 [shape = 's32[1]{0}', space=sflag, size = 0x4, scoped, tag = 'scoped memory for tpu_custom_call.1']
    #allocation20 [shape = 'u8[32768]{0}', space=vmem, size = 0x8000, scoped, tag = 'input window, operand 9, single buffered']
    #allocation21 [shape = 'u8[4096]{0}', space=vmem, size = 0x1000, scoped, tag = 'output window, operand 0, single buffered']
    %17 = vsyncpa [#allocation7], 0
    %s18 = scalar_lea.sflag [#allocation7], 1
    %19 = vsyncpa %s18, 0
    %20 = vsyncpa [#allocation10], 0
    %21 = vsyncpa [#allocation13], 0
    %22 = vsyncpa [#allocation16], 0
    %23 = vsyncpa [#allocation19], 0
    %24 = vsyncpa [#allocation8], 0
    loop: start=0, step=1, limit=4
    $region2: #{tpu_custom_call.1} parent=1 // loop_pre_header
      _
    $region3: #{tpu_custom_call.1} parent=1 // loop_header
      %s26 = sphi 0, %s30
      %p27 = scmp.ge.s32.totalorder %s26, 4
      %s36 = sphi 0, %s38
      %s39 = sphi 0, %s36
      %s40 = sphi 0, %s39
      %s56 = sphi 0, %s40
      %s60 = sphi 0, %s60
      %s62 = sphi 0, %s60
      %s63 = sphi 0, %s62
      %s77 = sphi 0, %s63
      %s81 = sphi 0, %s81
      %s83 = sphi 0, %s81
      %s84 = sphi 0, %s83
      %s98 = sphi 0, %s84
      %s102 = sphi 0, %s102
      %s104 = sphi 0, %s102
      %s105 = sphi 0, %s104
      %s119 = sphi 0, %s105
      %s123 = sphi 0, %s123
      %s125 = sphi 0, %s123
      %s126 = sphi 0, %s125
      %s140 = sphi 0, %s126
      %s144 = sphi 0, %s144
      %s146 = sphi 0, %s144
      %s147 = sphi 0, %s146
      %s161 = sphi 0, %s147
      %s165 = sphi 0, %s165
      %s167 = sphi 0, %s165
      %s168 = sphi 0, %s167
      %s182 = sphi 0, %s168
      %s186 = sphi 0, %s186
      %s188 = sphi 0, %s186
      %s189 = sphi 0, %s188
      %s203 = sphi 0, %s189
      %s207 = sphi 0, %s207
      %s209 = sphi 0, %s207
      %s210 = sphi 0, %s209
      %s224 = sphi 0, %s210
      %s228 = sphi 0, %s228
      %s230 = sphi 0, %s228
      %s231 = sphi 0, %s230
      %s245 = sphi 0, %s231
      %s249 = sphi 0, %s249
      %s251 = sphi 0, %s249
      %s252 = sphi 0, %s251
      %s266 = sphi 0, %s252
      %s270 = sphi 0, %s270
      %s272 = sphi 0, %s270
      %s273 = sphi 0, %s272
      %s287 = sphi 0, %s273
      %s291 = sphi 0, %s291
      %s293 = sphi 0, %s291
      %s294 = sphi 0, %s293
      %s308 = sphi 0, %s294
    $region4: #{tpu_custom_call.1} parent=1 // loop_header_branch
      %29 = sbr.rel (%p27) target = $region8
    $region5: #{tpu_custom_call.1} parent=1 // loop_body
      %s31 = ssub.s32 %s26, 1
      %s32 = ssub.s32 %s26, 2
      %s33 = sadd.s32 %s26, 1
      %s34 = ssub.s32 %s26, %s33
      %p35 = scmp.eq.s32.totalorder %s34, 0
      %s37 = sadd.s32 %s36, 1
      %s38 = scalar_select %p35, %s36, %s37
      %p41 = pneg %p35
      %p42 = scmp.eq.s32.totalorder %s26, 1
      %p43 = por %p41, %p42
      %p44 = scmp.ne.s32.totalorder %s36, %s39
      %p45 = scmp.eq.s32.totalorder %s26, 0
      %p46 = por %p44, %p45
      %p47 = scmp.ne.s32.totalorder %s36, %s39
      %p48 = scmp.eq.s32.totalorder %s31, 1
      %p49 = por %p47, %p48
      %p50 = scmp.ne.s32.totalorder %s39, %s40
      %p51 = scmp.eq.s32.totalorder %s31, 0
      %p52 = por %p50, %p51
      %p53 = scmp.ne.s32.totalorder %s39, %s40
      %p54 = scmp.eq.s32.totalorder %s32, 1
      %p55 = por %p53, %p54
      %p57 = scmp.ne.s32.totalorder %s40, %s56
      %p58 = scmp.eq.s32.totalorder %s32, 0
      %p59 = por %p57, %p58
      %s61 = sadd.s32 %s60, 1
      %p64 = scmp.eq.s32.totalorder %s26, 1
      %p65 = scmp.ne.s32.totalorder %s60, %s62
      %p66 = scmp.eq.s32.totalorder %s26, 0
      %p67 = por %p65, %p66
      %p68 = scmp.ne.s32.totalorder %s60, %s62
      %p69 = scmp.eq.s32.totalorder %s31, 1
      %p70 = por %p68, %p69
      %p71 = scmp.ne.s32.totalorder %s62, %s63
      %p72 = scmp.eq.s32.totalorder %s31, 0
      %p73 = por %p71, %p72
      %p74 = scmp.ne.s32.totalorder %s62, %s63
      %p75 = scmp.eq.s32.totalorder %s32, 1
      %p76 = por %p74, %p75
      %p78 = scmp.ne.s32.totalorder %s63, %s77
      %p79 = scmp.eq.s32.totalorder %s32, 0
      %p80 = por %p78, %p79
      %s82 = sadd.s32 %s81, 1
      %p85 = scmp.eq.s32.totalorder %s26, 1
      %p86 = scmp.ne.s32.totalorder %s81, %s83
      %p87 = scmp.eq.s32.totalorder %s26, 0
      %p88 = por %p86, %p87
      %p89 = scmp.ne.s32.totalorder %s81, %s83
      %p90 = scmp.eq.s32.totalorder %s31, 1
      %p91 = por %p89, %p90
      %p92 = scmp.ne.s32.totalorder %s83, %s84
      %p93 = scmp.eq.s32.totalorder %s31, 0
      %p94 = por %p92, %p93
      %p95 = scmp.ne.s32.totalorder %s83, %s84
      %p96 = scmp.eq.s32.totalorder %s32, 1
      %p97 = por %p95, %p96
      %p99 = scmp.ne.s32.totalorder %s84, %s98
      %p100 = scmp.eq.s32.totalorder %s32, 0
      %p101 = por %p99, %p100
      %s103 = sadd.s32 %s102, 1
      %p106 = scmp.eq.s32.totalorder %s26, 1
      %p107 = scmp.ne.s32.totalorder %s102, %s104
      %p108 = scmp.eq.s32.totalorder %s26, 0
      %p109 = por %p107, %p108
      %p110 = scmp.ne.s32.totalorder %s102, %s104
      %p111 = scmp.eq.s32.totalorder %s31, 1
      %p112 = por %p110, %p111
      %p113 = scmp.ne.s32.totalorder %s104, %s105
      %p114 = scmp.eq.s32.totalorder %s31, 0
      %p115 = por %p113, %p114
      %p116 = scmp.ne.s32.totalorder %s104, %s105
      %p117 = scmp.eq.s32.totalorder %s32, 1
      %p118 = por %p116, %p117
      %p120 = scmp.ne.s32.totalorder %s105, %s119
      %p121 = scmp.eq.s32.totalorder %s32, 0
      %p122 = por %p120, %p121
      %s124 = sadd.s32 %s123, 1
      %p127 = scmp.eq.s32.totalorder %s26, 1
      %p128 = scmp.ne.s32.totalorder %s123, %s125
      %p129 = scmp.eq.s32.totalorder %s26, 0
      %p130 = por %p128, %p129
      %p131 = scmp.ne.s32.totalorder %s123, %s125
      %p132 = scmp.eq.s32.totalorder %s31, 1
      %p133 = por %p131, %p132
      %p134 = scmp.ne.s32.totalorder %s125, %s126
      %p135 = scmp.eq.s32.totalorder %s31, 0
      %p136 = por %p134, %p135
      %p137 = scmp.ne.s32.totalorder %s125, %s126
      %p138 = scmp.eq.s32.totalorder %s32, 1
      %p139 = por %p137, %p138
      %p141 = scmp.ne.s32.totalorder %s126, %s140
      %p142 = scmp.eq.s32.totalorder %s32, 0
      %p143 = por %p141, %p142
      %s145 = sadd.s32 %s144, 1
      %p148 = scmp.eq.s32.totalorder %s26, 1
      %p149 = scmp.ne.s32.totalorder %s144, %s146
      %p150 = scmp.eq.s32.totalorder %s26, 0
      %p151 = por %p149, %p150
      %p152 = scmp.ne.s32.totalorder %s144, %s146
      %p153 = scmp.eq.s32.totalorder %s31, 1
      %p154 = por %p152, %p153
      %p155 = scmp.ne.s32.totalorder %s146, %s147
      %p156 = scmp.eq.s32.totalorder %s31, 0
      %p157 = por %p155, %p156
      %p158 = scmp.ne.s32.totalorder %s146, %s147
      %p159 = scmp.eq.s32.totalorder %s32, 1
      %p160 = por %p158, %p159
      %p162 = scmp.ne.s32.totalorder %s147, %s161
      %p163 = scmp.eq.s32.totalorder %s32, 0
      %p164 = por %p162, %p163
      %s166 = sadd.s32 %s165, 1
      %p169 = scmp.eq.s32.totalorder %s26, 1
      %p170 = scmp.ne.s32.totalorder %s165, %s167
      %p171 = scmp.eq.s32.totalorder %s26, 0
      %p172 = por %p170, %p171
      %p173 = scmp.ne.s32.totalorder %s165, %s167
      %p174 = scmp.eq.s32.totalorder %s31, 1
      %p175 = por %p173, %p174
      %p176 = scmp.ne.s32.totalorder %s167, %s168
      %p177 = scmp.eq.s32.totalorder %s31, 0
      %p178 = por %p176, %p177
      %p179 = scmp.ne.s32.totalorder %s167, %s168
      %p180 = scmp.eq.s32.totalorder %s32, 1
      %p181 = por %p179, %p180
      %p183 = scmp.ne.s32.totalorder %s168, %s182
      %p184 = scmp.eq.s32.totalorder %s32, 0
      %p185 = por %p183, %p184
      %s187 = sadd.s32 %s186, 1
      %p190 = scmp.eq.s32.totalorder %s26, 1
      %p191 = scmp.ne.s32.totalorder %s186, %s188
      %p192 = scmp.eq.s32.totalorder %s26, 0
      %p193 = por %p191, %p192
      %p194 = scmp.ne.s32.totalorder %s186, %s188
      %p195 = scmp.eq.s32.totalorder %s31, 1
      %p196 = por %p194, %p195
      %p197 = scmp.ne.s32.totalorder %s188, %s189
      %p198 = scmp.eq.s32.totalorder %s31, 0
      %p199 = por %p197, %p198
      %p200 = scmp.ne.s32.totalorder %s188, %s189
      %p201 = scmp.eq.s32.totalorder %s32, 1
      %p202 = por %p200, %p201
      %p204 = scmp.ne.s32.totalorder %s189, %s203
      %p205 = scmp.eq.s32.totalorder %s32, 0
      %p206 = por %p204, %p205
      %s208 = sadd.s32 %s207, 1
      %p211 = scmp.eq.s32.totalorder %s26, 1
      %p212 = scmp.ne.s32.totalorder %s207, %s209
      %p213 = scmp.eq.s32.totalorder %s26, 0
      %p214 = por %p212, %p213
      %p215 = scmp.ne.s32.totalorder %s207, %s209
      %p216 = scmp.eq.s32.totalorder %s31, 1
      %p217 = por %p215, %p216
      %p218 = scmp.ne.s32.totalorder %s209, %s210
      %p219 = scmp.eq.s32.totalorder %s31, 0
      %p220 = por %p218, %p219
      %p221 = scmp.ne.s32.totalorder %s209, %s210
      %p222 = scmp.eq.s32.totalorder %s32, 1
      %p223 = por %p221, %p222
      %p225 = scmp.ne.s32.totalorder %s210, %s224
      %p226 = scmp.eq.s32.totalorder %s32, 0
      %p227 = por %p225, %p226
      %s229 = sadd.s32 %s228, 1
      %p232 = scmp.eq.s32.totalorder %s26, 1
      %p233 = scmp.ne.s32.totalorder %s228, %s230
      %p234 = scmp.eq.s32.totalorder %s26, 0
      %p235 = por %p233, %p234
      %p236 = scmp.ne.s32.totalorder %s228, %s230
      %p237 = scmp.eq.s32.totalorder %s31, 1
      %p238 = por %p236, %p237
      %p239 = scmp.ne.s32.totalorder %s230, %s231
      %p240 = scmp.eq.s32.totalorder %s31, 0
      %p241 = por %p239, %p240
      %p242 = scmp.ne.s32.totalorder %s230, %s231
      %p243 = scmp.eq.s32.totalorder %s32, 1
      %p244 = por %p242, %p243
      %p246 = scmp.ne.s32.totalorder %s231, %s245
      %p247 = scmp.eq.s32.totalorder %s32, 0
      %p248 = por %p246, %p247
      %s250 = sadd.s32 %s249, 1
      %p253 = scmp.eq.s32.totalorder %s26, 1
      %p254 = scmp.ne.s32.totalorder %s249, %s251
      %p255 = scmp.eq.s32.totalorder %s26, 0
      %p256 = por %p254, %p255
      %p257 = scmp.ne.s32.totalorder %s249, %s251
      %p258 = scmp.eq.s32.totalorder %s31, 1
      %p259 = por %p257, %p258
      %p260 = scmp.ne.s32.totalorder %s251, %s252
      %p261 = scmp.eq.s32.totalorder %s31, 0
      %p262 = por %p260, %p261
      %p263 = scmp.ne.s32.totalorder %s251, %s252
      %p264 = scmp.eq.s32.totalorder %s32, 1
      %p265 = por %p263, %p264
      %p267 = scmp.ne.s32.totalorder %s252, %s266
      %p268 = scmp.eq.s32.totalorder %s32, 0
      %p269 = por %p267, %p268
      %s271 = sadd.s32 %s270, 1
      %p274 = scmp.eq.s32.totalorder %s26, 1
      %p275 = scmp.ne.s32.totalorder %s270, %s272
      %p276 = scmp.eq.s32.totalorder %s26, 0
      %p277 = por %p275, %p276
      %p278 = scmp.ne.s32.totalorder %s270, %s272
      %p279 = scmp.eq.s32.totalorder %s31, 1
      %p280 = por %p278, %p279
      %p281 = scmp.ne.s32.totalorder %s272, %s273
      %p282 = scmp.eq.s32.totalorder %s31, 0
      %p283 = por %p281, %p282
      %p284 = scmp.ne.s32.totalorder %s272, %s273
      %p285 = scmp.eq.s32.totalorder %s32, 1
      %p286 = por %p284, %p285
      %p288 = scmp.ne.s32.totalorder %s273, %s287
      %p289 = scmp.eq.s32.totalorder %s32, 0
      %p290 = por %p288, %p289
      %s292 = sadd.s32 %s291, 1
      %p295 = scmp.eq.s32.totalorder %s26, 1
      %p296 = scmp.ne.s32.totalorder %s291, %s293
      %p297 = scmp.eq.s32.totalorder %s26, 0
      %p298 = por %p296, %p297
      %p299 = scmp.ne.s32.totalorder %s291, %s293
      %p300 = scmp.eq.s32.totalorder %s31, 1
      %p301 = por %p299, %p300
      %p302 = scmp.ne.s32.totalorder %s293, %s294
      %p303 = scmp.eq.s32.totalorder %s31, 0
      %p304 = por %p302, %p303
      %p305 = scmp.ne.s32.totalorder %s293, %s294
      %p306 = scmp.eq.s32.totalorder %s32, 1
      %p307 = por %p305, %p306
      %p309 = scmp.ne.s32.totalorder %s294, %s308
      %p310 = scmp.eq.s32.totalorder %s32, 0
      %p311 = por %p309, %p310
      %p312 = scmp.le.s32.totalorder 1, %s26
      %p313 = scmp.lt.s32.totalorder %s26, 3
      %p314 = pnand %p312, %p313
      %p315 = pneg %p314
      // Predicated region
      $region9: #{tpu_custom_call.1} parent=5 // pred_check
        _
      $region10: #{tpu_custom_call.1} parent=5 // pred_check_branch
        %317 = sbr.rel (%p314) target = $region12
      $region11: #{tpu_custom_call.1} parent=5 // pred_region
        %s318 = ssub.s32 %s26, 1
        // Predicated region
        $region13: #{tpu_custom_call.1} parent=11 // pred_check
          %p319 = pneg %p73
        $region14: #{tpu_custom_call.1} parent=11 // pred_check_branch
          %321 = sbr.rel (%p319) target = $region16
        $region15: #{tpu_custom_call.1} parent=11 // pred_region
          %323 = vsyncadd [#allocation10], 0
          %s324 = sshll.u32 %s1, 4
          %s325 = int_to_ptr.hbm [resolvable:$true] %s324
          %s326 = sshll.u32 [#allocation9], 4
          %s327 = int_to_ptr.vmem [resolvable:$true] %s326
          %332 = dma.hbm_to_vmem [thread:$0]  %s325, 4096, %s327, [#allocation10], 256, 256, 16
        $region16: #{tpu_custom_call.1} parent=11 // pred_fallthru
          _
        // Predicated region
        $region17: #{tpu_custom_call.1} parent=11 // pred_check
          %p333 = pneg %p94
        $region18: #{tpu_custom_call.1} parent=11 // pred_check_branch
          %335 = sbr.rel (%p333) target = $region20
        $region19: #{tpu_custom_call.1} parent=11 // pred_region
          %337 = vsyncadd [#allocation10], 0
          %s338 = sshll.u32 %s2, 4
          %s339 = int_to_ptr.hbm [resolvable:$true] %s338
          %s340 = sshll.u32 [#allocation11], 4
          %s341 = int_to_ptr.vmem [resolvable:$true] %s340
          %346 = dma.hbm_to_vmem [thread:$0]  %s339, 4096, %s341, [#allocation10], 256, 256, 16
        $region20: #{tpu_custom_call.1} parent=11 // pred_fallthru
          _
        // Predicated region
        $region21: #{tpu_custom_call.1} parent=11 // pred_check
          %p347 = pneg %p115
        $region22: #{tpu_custom_call.1} parent=11 // pred_check_branch
          %349 = sbr.rel (%p347) target = $region24
        $region23: #{tpu_custom_call.1} parent=11 // pred_region
          %351 = vsyncadd [#allocation13], 0
          %s353 = sshll.u32 %s3, 4
          %s354 = int_to_ptr.hbm [resolvable:$true] %s353
          %s355 = sshll.u32 [#allocation12], 4
          %s356 = int_to_ptr.vmem [resolvable:$true] %s355
          %358 = dma.hbm_to_vmem [thread:$0]  %s354, 64, %s356, [#allocation13]
        $region24: #{tpu_custom_call.1} parent=11 // pred_fallthru
          _
        // Predicated region
        $region25: #{tpu_custom_call.1} parent=11 // pred_check
          %p359 = pneg %p136
        $region26: #{tpu_custom_call.1} parent=11 // pred_check_branch
          %361 = sbr.rel (%p359) target = $region28
        $region27: #{tpu_custom_call.1} parent=11 // pred_region
          %363 = vsyncadd [#allocation13], 0
          %s364 = sshll.u32 %s4, 4
          %s365 = int_to_ptr.hbm [resolvable:$true] %s364
          %s366 = sshll.u32 [#allocation14], 4
          %s367 = int_to_ptr.vmem [resolvable:$true] %s366
          %372 = dma.hbm_to_vmem [thread:$0]  %s365, 4096, %s367, [#allocation13], 256, 256, 16
        $region28: #{tpu_custom_call.1} parent=11 // pred_fallthru
          _
        // Predicated region
        $region29: #{tpu_custom_call.1} parent=11 // pred_check
          %p373 = pneg %p157
        $region30: #{tpu_custom_call.1} parent=11 // pred_check_branch
          %375 = sbr.rel (%p373) target = $region32
        $region31: #{tpu_custom_call.1} parent=11 // pred_region
          %377 = vsyncadd [#allocation16], 0
          %s378 = sshll.u32 %s5, 4
          %s379 = int_to_ptr.hbm [resolvable:$true] %s378
          %s380 = sshll.u32 [#allocation15], 4
          %s381 = int_to_ptr.vmem [resolvable:$true] %s380
          %386 = dma.hbm_to_vmem [thread:$0]  %s379, 4096, %s381, [#allocation16], 256, 256, 16
        $region32: #{tpu_custom_call.1} parent=11 // pred_fallthru
          _
        // Predicated region
        $region33: #{tpu_custom_call.1} parent=11 // pred_check
          %p387 = pneg %p178
        $region34: #{tpu_custom_call.1} parent=11 // pred_check_branch
          %389 = sbr.rel (%p387) target = $region36
        $region35: #{tpu_custom_call.1} parent=11 // pred_region
          %391 = vsyncadd [#allocation16], 0
          %s393 = sshll.u32 %s6, 4
          %s394 = int_to_ptr.hbm [resolvable:$true] %s393
          %s395 = sshll.u32 [#allocation17], 4
          %s396 = int_to_ptr.vmem [resolvable:$true] %s395
          %398 = dma.hbm_to_vmem [thread:$0]  %s394, 64, %s396, [#allocation16]
        $region36: #{tpu_custom_call.1} parent=11 // pred_fallthru
          _
        // Predicated region
        $region37: #{tpu_custom_call.1} parent=11 // pred_check
          %p399 = pneg %p199
        $region38: #{tpu_custom_call.1} parent=11 // pred_check_branch
          %401 = sbr.rel (%p399) target = $region40
        $region39: #{tpu_custom_call.1} parent=11 // pred_region
          %403 = vsyncadd [#allocation19], 0
          %s404 = sshll.u32 %s7, 4
          %s405 = int_to_ptr.hbm [resolvable:$true] %s404
          %s406 = sshll.u32 [#allocation18], 4
          %s407 = int_to_ptr.vmem [resolvable:$true] %s406
          %412 = dma.hbm_to_vmem [thread:$0]  %s405, 1024, %s407, [#allocation19], 64, 64, 4
        $region40: #{tpu_custom_call.1} parent=11 // pred_fallthru
          _
        // Predicated region
        $region41: #{tpu_custom_call.1} parent=11 // pred_check
          %p413 = pneg %p220
        $region42: #{tpu_custom_call.1} parent=11 // pred_check_branch
          %415 = sbr.rel (%p413) target = $region44
        $region43: #{tpu_custom_call.1} parent=11 // pred_region
          _
        $region44: #{tpu_custom_call.1} parent=11 // pred_fallthru
          _
        // Predicated region
        $region45: #{tpu_custom_call.1} parent=11 // pred_check
          %p416 = pneg %p241
        $region46: #{tpu_custom_call.1} parent=11 // pred_check_branch
          %418 = sbr.rel (%p416) target = $region48
        $region47: #{tpu_custom_call.1} parent=11 // pred_region
          %420 = vsyncadd [#allocation19], 0
          %s421 = sshll.u32 %s9, 4
          %s422 = int_to_ptr.hbm [resolvable:$true] %s421
          %s423 = sshll.u32 [#allocation20], 4
          %s424 = int_to_ptr.vmem [resolvable:$true] %s423
          %429 = dma.hbm_to_vmem [thread:$0]  %s422, 1024, %s424, [#allocation19], 64, 64, 4
        $region48: #{tpu_custom_call.1} parent=11 // pred_fallthru
          _
        // Predicated region
        $region49: #{tpu_custom_call.1} parent=11 // pred_check
          %p430 = pneg %p262
        $region50: #{tpu_custom_call.1} parent=11 // pred_check_branch
          %432 = sbr.rel (%p430) target = $region52
        $region51: #{tpu_custom_call.1} parent=11 // pred_region
          _
        $region52: #{tpu_custom_call.1} parent=11 // pred_fallthru
          _
        // Predicated region
        $region53: #{tpu_custom_call.1} parent=11 // pred_check
          %p433 = pneg %p283
        $region54: #{tpu_custom_call.1} parent=11 // pred_check_branch
          %435 = sbr.rel (%p433) target = $region56
        $region55: #{tpu_custom_call.1} parent=11 // pred_region
          _
        $region56: #{tpu_custom_call.1} parent=11 // pred_fallthru
          _
      $region12: #{tpu_custom_call.1} parent=5 // pred_fallthru
        _
      %p436 = scmp.lt.s32.totalorder %s26, 2
      // Predicated region
      $region57: #{tpu_custom_call.1} parent=5 // pred_check
        %p437 = pneg %p436
      $region58: #{tpu_custom_call.1} parent=5 // pred_check_branch
        %439 = sbr.rel (%p437) target = $region60
      $region59: #{tpu_custom_call.1} parent=5 // pred_region
        // Predicated region
        $region61: #{tpu_custom_call.1} parent=59 // pred_check
          %p440 = pneg %p46
        $region62: #{tpu_custom_call.1} parent=59 // pred_check_branch
          %442 = sbr.rel (%p440) target = $region64
        $region63: #{tpu_custom_call.1} parent=59 // pred_region
          %s443 = sand.u32 %s36, 1
          %s444 = scalar_lea.sflag [#allocation7], %s443
          %s445 = sand.u32 %s36, 1
          %s446 = smul.addr %s445, 64
          %s447 = scalar_lea.vmem [#allocation6], %s446
          %449 = vsyncadd %s444, 0
          %s450 = smul.addr %s26, 8
          %s451 = scalar_lea.hbm %s0, %s450
          %s452 = sshll.u32 %s451, 4
          %s453 = int_to_ptr.hbm [resolvable:$true] %s452
          %s454 = sshll.u32 %s447, 4
          %s455 = int_to_ptr.vmem [resolvable:$true] %s454
          %460 = dma.hbm_to_vmem [thread:$0]  %s453, 1024, %s455, %s444, 256, 128, 8
        $region64: #{tpu_custom_call.1} parent=59 // pred_fallthru
          _
      $region60: #{tpu_custom_call.1} parent=5 // pred_fallthru
        _
      %p461 = scmp.le.s32.totalorder 1, %s26
      %p462 = scmp.lt.s32.totalorder %s26, 3
      %p463 = pnand %p461, %p462
      %p464 = pneg %p463
      // Predicated region
      $region65: #{tpu_custom_call.1} parent=5 // pred_check
        _
      $region66: #{tpu_custom_call.1} parent=5 // pred_check_branch
        %466 = sbr.rel (%p463) target = $region68
      $region67: #{tpu_custom_call.1} parent=5 // pred_region
        %s467 = ssub.s32 %s26, 1
        %s468 = sand.u32 %s39, 1
        %s469 = scalar_lea.sflag [#allocation7], %s468
        %s470 = sand.u32 %s39, 1
        %s471 = smul.addr %s470, 64
        %s472 = scalar_lea.vmem [#allocation6], %s471
        // Predicated region
        $region69: #{tpu_custom_call.1} parent=67 // pred_check
          %p473 = pneg %p52
        $region70: #{tpu_custom_call.1} parent=67 // pred_check_branch
          %475 = sbr.rel (%p473) target = $region72
        $region71: #{tpu_custom_call.1} parent=67 // pred_region
          %477 = dma.done %s469, 1024
        $region72: #{tpu_custom_call.1} parent=67 // pred_fallthru
          _
        // Predicated region
        $region73: #{tpu_custom_call.1} parent=67 // pred_check
          %p478 = pneg %p73
        $region74: #{tpu_custom_call.1} parent=67 // pred_check_branch
          %480 = sbr.rel (%p478) target = $region76
        $region75: #{tpu_custom_call.1} parent=67 // pred_region
          %482 = dma.done [#allocation10], 4096
        $region76: #{tpu_custom_call.1} parent=67 // pred_fallthru
          _
        // Predicated region
        $region77: #{tpu_custom_call.1} parent=67 // pred_check
          %p483 = pneg %p94
        $region78: #{tpu_custom_call.1} parent=67 // pred_check_branch
          %485 = sbr.rel (%p483) target = $region80
        $region79: #{tpu_custom_call.1} parent=67 // pred_region
          %487 = dma.done [#allocation10], 4096
        $region80: #{tpu_custom_call.1} parent=67 // pred_fallthru
          _
        // Predicated region
        $region81: #{tpu_custom_call.1} parent=67 // pred_check
          %p488 = pneg %p115
        $region82: #{tpu_custom_call.1} parent=67 // pred_check_branch
          %490 = sbr.rel (%p488) target = $region84
        $region83: #{tpu_custom_call.1} parent=67 // pred_region
          %492 = dma.done [#allocation13], 64
        $region84: #{tpu_custom_call.1} parent=67 // pred_fallthru
          _
        // Predicated region
        $region85: #{tpu_custom_call.1} parent=67 // pred_check
          %p493 = pneg %p136
        $region86: #{tpu_custom_call.1} parent=67 // pred_check_branch
          %495 = sbr.rel (%p493) target = $region88
        $region87: #{tpu_custom_call.1} parent=67 // pred_region
          %497 = dma.done [#allocation13], 4096
        $region88: #{tpu_custom_call.1} parent=67 // pred_fallthru
          _
        // Predicated region
        $region89: #{tpu_custom_call.1} parent=67 // pred_check
          %p498 = pneg %p157
        $region90: #{tpu_custom_call.1} parent=67 // pred_check_branch
          %500 = sbr.rel (%p498) target = $region92
        $region91: #{tpu_custom_call.1} parent=67 // pred_region
          %502 = dma.done [#allocation16], 4096
        $region92: #{tpu_custom_call.1} parent=67 // pred_fallthru
          _
        // Predicated region
        $region93: #{tpu_custom_call.1} parent=67 // pred_check
          %p503 = pneg %p178
        $region94: #{tpu_custom_call.1} parent=67 // pred_check_branch
          %505 = sbr.rel (%p503) target = $region96
        $region95: #{tpu_custom_call.1} parent=67 // pred_region
          %507 = dma.done [#allocation16], 64
        $region96: #{tpu_custom_call.1} parent=67 // pred_fallthru
          _
        // Predicated region
        $region97: #{tpu_custom_call.1} parent=67 // pred_check
          %p508 = pneg %p199
        $region98: #{tpu_custom_call.1} parent=67 // pred_check_branch
          %510 = sbr.rel (%p508) target = $region100
        $region99: #{tpu_custom_call.1} parent=67 // pred_region
          %512 = dma.done [#allocation19], 1024
        $region100: #{tpu_custom_call.1} parent=67 // pred_fallthru
          _
        // Predicated region
        $region101: #{tpu_custom_call.1} parent=67 // pred_check
          %p513 = pneg %p241
        $region102: #{tpu_custom_call.1} parent=67 // pred_check_branch
          %515 = sbr.rel (%p513) target = $region104
        $region103: #{tpu_custom_call.1} parent=67 // pred_region
          %517 = dma.done [#allocation19], 1024
        $region104: #{tpu_custom_call.1} parent=67 // pred_fallthru
          _
        %s518 = sand.u32 %s39, 1
        %s519 = scalar_lea.sflag [#allocation7], %s518
        %s520 = sand.u32 %s39, 1
        %s521 = smul.addr %s520, 64
        %s522 = scalar_lea.vmem [#allocation6], %s521
        %p523 = pneg %p52
        %p524 = pneg %p49
        %p525 = pneg %p73
        %p526 = pneg %p70
        %p527 = pneg %p94
        %p528 = pneg %p91
        %p529 = pneg %p115
        %p530 = pneg %p112
        %p531 = pneg %p136
        %p532 = pneg %p133
        %p533 = pneg %p157
        %p534 = pneg %p154
        %p535 = pneg %p178
        %p536 = pneg %p175
        %p537 = pneg %p199
        %p538 = pneg %p196
        %p539 = pneg %p220
        %p540 = pneg %p217
        %p541 = pneg %p241
        %p542 = pneg %p238
        %p543 = pneg %p262
        %p544 = pneg %p259
        %p545 = pneg %p283
        %p546 = pneg %p280
        %p547 = pneg %p304
        %p548 = pneg %p301
        %p549 = scmp.eq.s32.totalorder %s31, 0
        // Predicated region
        $region105: #{tpu_custom_call.1} parent=67 // pred_check
          %p550 = pneg %p549
        $region106: #{tpu_custom_call.1} parent=67 // pred_check_branch
          %552 = sbr.rel (%p550) target = $region108
        $region107: #{tpu_custom_call.1} parent=67 // pred_region
          %553 = vst [vmem:[#allocation2] sm:$0xff] 0.0
          %554 = vst [vmem:[#allocation2 + $0x8] sm:$0xff] 0.0
          %555 = vst [vmem:[#allocation3] sm:$0xff] 0.0
          %556 = vst [vmem:[#allocation3 + $0x8] sm:$0xff] 0.0
        $region108: #{tpu_custom_call.1} parent=67 // pred_fallthru
          _
        %v557 = vld [vmem:[#allocation9] sm:$0xff]
        %v558 = vld [vmem:[#allocation9 + $0x8] sm:$0xff]
        %v559 = vld [vmem:[#allocation9 + $0x10] sm:$0xff]
        %v560 = vld [vmem:[#allocation9 + $0x18] sm:$0xff]
        %v561 = vld [vmem:[#allocation9 + $0x20] sm:$0xff]
        %v562 = vld [vmem:[#allocation9 + $0x28] sm:$0xff]
        %v563 = vld [vmem:[#allocation9 + $0x30] sm:$0xff]
        %v564 = vld [vmem:[#allocation9 + $0x38] sm:$0xff]
        %v565 = vld [vmem:[#allocation9 + $0x40] sm:$0xff]
        %v566 = vld [vmem:[#allocation9 + $0x48] sm:$0xff]
        %v567 = vld [vmem:[#allocation9 + $0x50] sm:$0xff]
        %v568 = vld [vmem:[#allocation9 + $0x58] sm:$0xff]
        %v569 = vld [vmem:[#allocation9 + $0x60] sm:$0xff]
        %v570 = vld [vmem:[#allocation9 + $0x68] sm:$0xff]
        %v571 = vld [vmem:[#allocation9 + $0x70] sm:$0xff]
        %v572 = vld [vmem:[#allocation9 + $0x78] sm:$0xff]
        %v573 = vld [vmem:[#allocation9 + $0x80] sm:$0xff]
        %v574 = vld [vmem:[#allocation9 + $0x88] sm:$0xff]
        %v575 = vld [vmem:[#allocation9 + $0x90] sm:$0xff]
        %v576 = vld [vmem:[#allocation9 + $0x98] sm:$0xff]
        %v577 = vld [vmem:[#allocation9 + $0xa0] sm:$0xff]
        %v578 = vld [vmem:[#allocation9 + $0xa8] sm:$0xff]
        %v579 = vld [vmem:[#allocation9 + $0xb0] sm:$0xff]
        %v580 = vld [vmem:[#allocation9 + $0xb8] sm:$0xff]
        %v581 = vld [vmem:[#allocation9 + $0xc0] sm:$0xff]
        %v582 = vld [vmem:[#allocation9 + $0xc8] sm:$0xff]
        %v583 = vld [vmem:[#allocation9 + $0xd0] sm:$0xff]
        %v584 = vld [vmem:[#allocation9 + $0xd8] sm:$0xff]
        %v585 = vld [vmem:[#allocation9 + $0xe0] sm:$0xff]
        %v586 = vld [vmem:[#allocation9 + $0xe8] sm:$0xff]
        %v587 = vld [vmem:[#allocation9 + $0xf0] sm:$0xff]
        %v588 = vld [vmem:[#allocation9 + $0xf8] sm:$0xff]
        %v589 = vld [vmem:[#allocation11] sm:$0xff]
        %v590 = vld [vmem:[#allocation11 + $0x8] sm:$0xff]
        %v591 = vld [vmem:[#allocation11 + $0x10] sm:$0xff]
        %v592 = vld [vmem:[#allocation11 + $0x18] sm:$0xff]
        %v593 = vld [vmem:[#allocation11 + $0x20] sm:$0xff]
        %v594 = vld [vmem:[#allocation11 + $0x28] sm:$0xff]
        %v595 = vld [vmem:[#allocation11 + $0x30] sm:$0xff]
        %v596 = vld [vmem:[#allocation11 + $0x38] sm:$0xff]
        %v597 = vld [vmem:[#allocation11 + $0x40] sm:$0xff]
        %v598 = vld [vmem:[#allocation11 + $0x48] sm:$0xff]
        %v599 = vld [vmem:[#allocation11 + $0x50] sm:$0xff]
        %v600 = vld [vmem:[#allocation11 + $0x58] sm:$0xff]
        %v601 = vld [vmem:[#allocation11 + $0x60] sm:$0xff]
        %v602 = vld [vmem:[#allocation11 + $0x68] sm:$0xff]
        %v603 = vld [vmem:[#allocation11 + $0x70] sm:$0xff]
        %v604 = vld [vmem:[#allocation11 + $0x78] sm:$0xff]
        %v605 = vld [vmem:[#allocation11 + $0x80] sm:$0xff]
        %v606 = vld [vmem:[#allocation11 + $0x88] sm:$0xff]
        %v607 = vld [vmem:[#allocation11 + $0x90] sm:$0xff]
        %v608 = vld [vmem:[#allocation11 + $0x98] sm:$0xff]
        %v609 = vld [vmem:[#allocation11 + $0xa0] sm:$0xff]
        %v610 = vld [vmem:[#allocation11 + $0xa8] sm:$0xff]
        %v611 = vld [vmem:[#allocation11 + $0xb0] sm:$0xff]
        %v612 = vld [vmem:[#allocation11 + $0xb8] sm:$0xff]
        %v613 = vld [vmem:[#allocation11 + $0xc0] sm:$0xff]
        %v614 = vld [vmem:[#allocation11 + $0xc8] sm:$0xff]
        %v615 = vld [vmem:[#allocation11 + $0xd0] sm:$0xff]
        %v616 = vld [vmem:[#allocation11 + $0xd8] sm:$0xff]
        %v617 = vld [vmem:[#allocation11 + $0xe0] sm:$0xff]
        %v618 = vld [vmem:[#allocation11 + $0xe8] sm:$0xff]
        %v619 = vld [vmem:[#allocation11 + $0xf0] sm:$0xff]
        %v620 = vld [vmem:[#allocation11 + $0xf8] sm:$0xff]
        %v621 = vld [vmem:[#allocation12] sm:$0xf]
        %v623 = vperm.slane %v621, 0
        %v624 = vperm.slane %v621, 1
        %v625 = vperm.slane %v621, 2
        %v626 = vperm.slane %v621, 3
        %v631 = vld [vmem:[%s472] sm:$0xff]
        %v632 = vld [vmem:[%s472 + $0x8] sm:$0xff]
        %v633 = vld [vmem:[%s472 + $0x10] sm:$0xff]
        %v634 = vld [vmem:[%s472 + $0x18] sm:$0xff]
        %v635 = vld [vmem:[%s472 + $0x20] sm:$0xff]
        %v636 = vld [vmem:[%s472 + $0x28] sm:$0xff]
        %v637 = vld [vmem:[%s472 + $0x30] sm:$0xff]
        %v638 = vld [vmem:[%s472 + $0x38] sm:$0xff]
        %v639 = vpack.c.bf16 %v632, %v631
        %v640 = vpack.c.bf16 %v634, %v633
        %v641 = vpack.c.bf16 %v636, %v635
        %v642 = vpack.c.bf16 %v638, %v637
        %v675 = vunpack.c.l.b16 %v557
        %v676 = vunpack.c.h.b16 %v557
        %v677 = vunpack.c.l.b16 %v558
        %v678 = vunpack.c.h.b16 %v558
        %v679 = vunpack.c.l.b16 %v559
        %v680 = vunpack.c.h.b16 %v559
        %v681 = vunpack.c.l.b16 %v560
        %v682 = vunpack.c.h.b16 %v560
        %v683 = vunpack.c.l.b16 %v561
        %v684 = vunpack.c.h.b16 %v561
        %v685 = vunpack.c.l.b16 %v562
        %v686 = vunpack.c.h.b16 %v562
        %v687 = vunpack.c.l.b16 %v563
        %v688 = vunpack.c.h.b16 %v563
        %v689 = vunpack.c.l.b16 %v564
        %v690 = vunpack.c.h.b16 %v564
        %v691 = vunpack.c.l.b16 %v565
        %v692 = vunpack.c.h.b16 %v565
        %v693 = vunpack.c.l.b16 %v566
        %v694 = vunpack.c.h.b16 %v566
        %v695 = vunpack.c.l.b16 %v567
        %v696 = vunpack.c.h.b16 %v567
        %v697 = vunpack.c.l.b16 %v568
        %v698 = vunpack.c.h.b16 %v568
        %v699 = vunpack.c.l.b16 %v569
        %v700 = vunpack.c.h.b16 %v569
        %v701 = vunpack.c.l.b16 %v570
        %v702 = vunpack.c.h.b16 %v570
        %v703 = vunpack.c.l.b16 %v571
        %v704 = vunpack.c.h.b16 %v571
        %v705 = vunpack.c.l.b16 %v572
        %v706 = vunpack.c.h.b16 %v572
        %v707 = vunpack.c.l.b16 %v573
        %v708 = vunpack.c.h.b16 %v573
        %v709 = vunpack.c.l.b16 %v574
        %v710 = vunpack.c.h.b16 %v574
        %v711 = vunpack.c.l.b16 %v575
        %v712 = vunpack.c.h.b16 %v575
        %v713 = vunpack.c.l.b16 %v576
        %v714 = vunpack.c.h.b16 %v576
        %v715 = vunpack.c.l.b16 %v577
        %v716 = vunpack.c.h.b16 %v577
        %v717 = vunpack.c.l.b16 %v578
        %v718 = vunpack.c.h.b16 %v578
        %v719 = vunpack.c.l.b16 %v579
        %v720 = vunpack.c.h.b16 %v579
        %v721 = vunpack.c.l.b16 %v580
        %v722 = vunpack.c.h.b16 %v580
        %v723 = vunpack.c.l.b16 %v581
        %v724 = vunpack.c.h.b16 %v581
        %v725 = vunpack.c.l.b16 %v582
        %v726 = vunpack.c.h.b16 %v582
        %v727 = vunpack.c.l.b16 %v583
        %v728 = vunpack.c.h.b16 %v583
        %v729 = vunpack.c.l.b16 %v584
        %v730 = vunpack.c.h.b16 %v584
        %v731 = vunpack.c.l.b16 %v585
        %v732 = vunpack.c.h.b16 %v585
        %v733 = vunpack.c.l.b16 %v586
        %v734 = vunpack.c.h.b16 %v586
        %v735 = vunpack.c.l.b16 %v587
        %v736 = vunpack.c.h.b16 %v587
        %v737 = vunpack.c.l.b16 %v588
        %v738 = vunpack.c.h.b16 %v588
        %v739 = vpack.c.b16 %v679, %v675
        %v740 = vpack.c.b16 %v680, %v676
        %v741 = vpack.c.b16 %v681, %v677
        %v742 = vpack.c.b16 %v682, %v678
        %v743 = vpack.c.b16 %v687, %v683
        %v744 = vpack.c.b16 %v688, %v684
        %v745 = vpack.c.b16 %v689, %v685
        %v746 = vpack.c.b16 %v690, %v686
        %v747 = vpack.c.b16 %v695, %v691
        %v748 = vpack.c.b16 %v696, %v692
        %v749 = vpack.c.b16 %v697, %v693
        %v750 = vpack.c.b16 %v698, %v694
        %v751 = vpack.c.b16 %v703, %v699
        %v752 = vpack.c.b16 %v704, %v700
        %v753 = vpack.c.b16 %v705, %v701
        %v754 = vpack.c.b16 %v706, %v702
        %v755 = vpack.c.b16 %v711, %v707
        %v756 = vpack.c.b16 %v712, %v708
        %v757 = vpack.c.b16 %v713, %v709
        %v758 = vpack.c.b16 %v714, %v710
        %v759 = vpack.c.b16 %v719, %v715
        %v760 = vpack.c.b16 %v720, %v716
        %v761 = vpack.c.b16 %v721, %v717
        %v762 = vpack.c.b16 %v722, %v718
        %v763 = vpack.c.b16 %v727, %v723
        %v764 = vpack.c.b16 %v728, %v724
        %v765 = vpack.c.b16 %v729, %v725
        %v766 = vpack.c.b16 %v730, %v726
        %v767 = vpack.c.b16 %v735, %v731
        %v768 = vpack.c.b16 %v736, %v732
        %v769 = vpack.c.b16 %v737, %v733
        %v770 = vpack.c.b16 %v738, %v734
        %803 = vmatpush.bf16.msra.mxu0 %v767
        %804 = vmatpush.bf16.msra.mxu0 %v763
        %805 = vmatpush.bf16.msra.mxu0 %v759
        %806 = vmatpush.bf16.msra.mxu0 %v755
        %807 = vmatpush.bf16.msra.mxu0 %v751
        %808 = vmatpush.bf16.msra.mxu0 %v747
        %809 = vmatpush.bf16.msra.mxu0 %v743
        %810 = vmatpush.bf16.msra.mxu0 %v739
        %811 = vmatmul.bf16.gmra.mxu0 %v639
        %v812 = vpop.f32.mrf.mxu0
        %v813 = vadd.f32 0.0, %v812
        %v814 = vpop.f32.mrf.mxu0
        %v815 = vadd.f32 0.0, %v814
        %816 = vmatmul.bf16.gmra.mxu0 %v640
        %v817 = vpop.f32.mrf.mxu0
        %v818 = vadd.f32 0.0, %v817
        %v819 = vpop.f32.mrf.mxu0
        %v820 = vadd.f32 0.0, %v819
        %821 = vmatmul.bf16.gmra.mxu0 %v641
        %v822 = vpop.f32.mrf.mxu0
        %v823 = vadd.f32 0.0, %v822
        %v824 = vpop.f32.mrf.mxu0
        %v825 = vadd.f32 0.0, %v824
        %826 = vmatmul.bf16.gmra.mxu0 %v642
        %v827 = vpop.f32.mrf.mxu0
        %v828 = vadd.f32 0.0, %v827
        %v829 = vpop.f32.mrf.mxu0
        %v830 = vadd.f32 0.0, %v829
        %831 = vdwg.mxu0
        %832 = vmatpush.bf16.msra.mxu0 %v768
        %833 = vmatpush.bf16.msra.mxu0 %v764
        %834 = vmatpush.bf16.msra.mxu0 %v760
        %835 = vmatpush.bf16.msra.mxu0 %v756
        %836 = vmatpush.bf16.msra.mxu0 %v752
        %837 = vmatpush.bf16.msra.mxu0 %v748
        %838 = vmatpush.bf16.msra.mxu0 %v744
        %839 = vmatpush.bf16.msra.mxu0 %v740
        %840 = vmatmul.bf16.gmra.mxu0 %v639
        %v841 = vpop.f32.mrf.mxu0
        %v842 = vadd.f32 0.0, %v841
        %v843 = vpop.f32.mrf.mxu0
        %v844 = vadd.f32 0.0, %v843
        %845 = vmatmul.bf16.gmra.mxu0 %v640
        %v846 = vpop.f32.mrf.mxu0
        %v847 = vadd.f32 0.0, %v846
        %v848 = vpop.f32.mrf.mxu0
        %v849 = vadd.f32 0.0, %v848
        %850 = vmatmul.bf16.gmra.mxu0 %v641
        %v851 = vpop.f32.mrf.mxu0
        %v852 = vadd.f32 0.0, %v851
        %v853 = vpop.f32.mrf.mxu0
        %v854 = vadd.f32 0.0, %v853
        %855 = vmatmul.bf16.gmra.mxu0 %v642
        %v856 = vpop.f32.mrf.mxu0
        %v857 = vadd.f32 0.0, %v856
        %v858 = vpop.f32.mrf.mxu0
        %v859 = vadd.f32 0.0, %v858
        %860 = vdwg.mxu0
        %861 = vmatpush.bf16.msra.mxu0 %v769
        %862 = vmatpush.bf16.msra.mxu0 %v765
        %863 = vmatpush.bf16.msra.mxu0 %v761
        %864 = vmatpush.bf16.msra.mxu0 %v757
        %865 = vmatpush.bf16.msra.mxu0 %v753
        %866 = vmatpush.bf16.msra.mxu0 %v749
        %867 = vmatpush.bf16.msra.mxu0 %v745
        %868 = vmatpush.bf16.msra.mxu0 %v741
        %869 = vmatmul.bf16.gmra.mxu0 %v639
        %v870 = vpop.f32.mrf.mxu0
        %v871 = vadd.f32 0.0, %v870
        %v872 = vpop.f32.mrf.mxu0
        %v873 = vadd.f32 0.0, %v872
        %874 = vmatmul.bf16.gmra.mxu0 %v640
        %v875 = vpop.f32.mrf.mxu0
        %v876 = vadd.f32 0.0, %v875
        %v877 = vpop.f32.mrf.mxu0
        %v878 = vadd.f32 0.0, %v877
        %879 = vmatmul.bf16.gmra.mxu0 %v641
        %v880 = vpop.f32.mrf.mxu0
        %v881 = vadd.f32 0.0, %v880
        %v882 = vpop.f32.mrf.mxu0
        %v883 = vadd.f32 0.0, %v882
        %884 = vmatmul.bf16.gmra.mxu0 %v642
        %v885 = vpop.f32.mrf.mxu0
        %v886 = vadd.f32 0.0, %v885
        %v887 = vpop.f32.mrf.mxu0
        %v888 = vadd.f32 0.0, %v887
        %889 = vdwg.mxu0
        %890 = vmatpush.bf16.msra.mxu0 %v770
        %891 = vmatpush.bf16.msra.mxu0 %v766
        %892 = vmatpush.bf16.msra.mxu0 %v762
        %893 = vmatpush.bf16.msra.mxu0 %v758
        %894 = vmatpush.bf16.msra.mxu0 %v754
        %895 = vmatpush.bf16.msra.mxu0 %v750
        %896 = vmatpush.bf16.msra.mxu0 %v746
        %897 = vmatpush.bf16.msra.mxu0 %v742
        %898 = vmatmul.bf16.gmra.mxu0 %v639
        %v899 = vpop.f32.mrf.mxu0
        %v900 = vadd.f32 0.0, %v899
        %v901 = vpop.f32.mrf.mxu0
        %v902 = vadd.f32 0.0, %v901
        %903 = vmatmul.bf16.gmra.mxu0 %v640
        %v904 = vpop.f32.mrf.mxu0
        %v905 = vadd.f32 0.0, %v904
        %v906 = vpop.f32.mrf.mxu0
        %v907 = vadd.f32 0.0, %v906
        %908 = vmatmul.bf16.gmra.mxu0 %v641
        %v909 = vpop.f32.mrf.mxu0
        %v910 = vadd.f32 0.0, %v909
        %v911 = vpop.f32.mrf.mxu0
        %v912 = vadd.f32 0.0, %v911
        %913 = vmatmul.bf16.gmra.mxu0 %v642
        %v914 = vpop.f32.mrf.mxu0
        %v915 = vadd.f32 0.0, %v914
        %v916 = vpop.f32.mrf.mxu0
        %v917 = vadd.f32 0.0, %v916
        %918 = vdwg.mxu0
        %v951 = vrot.slane %v815, 7
        %vm952 = vcmask 1041409
        %v953 = vsel %vm952, %v951, %v813
        %v954 = vrot.slane %v818, 6
        %vm955 = vcmask 1042434
        %v956 = vsel %vm955, %v954, %v953
        %v957 = vrot.slane %v820, 5
        %vm958 = vcmask 1043459
        %v959 = vsel %vm958, %v957, %v956
        %v960 = vrot.slane %v823, 4
        %vm961 = vcmask 1044484
        %v962 = vsel %vm961, %v960, %v959
        %v963 = vrot.slane %v825, 3
        %vm964 = vcmask 1045509
        %v965 = vsel %vm964, %v963, %v962
        %v966 = vrot.slane %v828, 2
        %vm967 = vcmask 1046534
        %v968 = vsel %vm967, %v966, %v965
        %v969 = vrot.slane %v830, 1
        %vm970 = vcmask 1047559
        %v971 = vsel %vm970, %v969, %v968
        %v972 = vrot.slane %v844, 7
        %v973 = vsel %vm952, %v972, %v842
        %v974 = vrot.slane %v847, 6
        %v975 = vsel %vm955, %v974, %v973
        %v976 = vrot.slane %v849, 5
        %v977 = vsel %vm958, %v976, %v975
        %v978 = vrot.slane %v852, 4
        %v979 = vsel %vm961, %v978, %v977
        %v980 = vrot.slane %v854, 3
        %v981 = vsel %vm964, %v980, %v979
        %v982 = vrot.slane %v857, 2
        %v983 = vsel %vm967, %v982, %v981
        %v984 = vrot.slane %v859, 1
        %v985 = vsel %vm970, %v984, %v983
        %v986 = vrot.slane %v873, 7
        %v987 = vsel %vm952, %v986, %v871
        %v988 = vrot.slane %v876, 6
        %v989 = vsel %vm955, %v988, %v987
        %v990 = vrot.slane %v878, 5
        %v991 = vsel %vm958, %v990, %v989
        %v992 = vrot.slane %v881, 4
        %v993 = vsel %vm961, %v992, %v991
        %v994 = vrot.slane %v883, 3
        %v995 = vsel %vm964, %v994, %v993
        %v996 = vrot.slane %v886, 2
        %v997 = vsel %vm967, %v996, %v995
        %v998 = vrot.slane %v888, 1
        %v999 = vsel %vm970, %v998, %v997
        %v1000 = vrot.slane %v902, 7
        %v1001 = vsel %vm952, %v1000, %v900
        %v1002 = vrot.slane %v905, 6
        %v1003 = vsel %vm955, %v1002, %v1001
        %v1004 = vrot.slane %v907, 5
        %v1005 = vsel %vm958, %v1004, %v1003
        %v1006 = vrot.slane %v910, 4
        %v1007 = vsel %vm961, %v1006, %v1005
        %v1008 = vrot.slane %v912, 3
        %v1009 = vsel %vm964, %v1008, %v1007
        %v1010 = vrot.slane %v915, 2
        %v1011 = vsel %vm967, %v1010, %v1009
        %v1012 = vrot.slane %v917, 1
        %v1013 = vsel %vm970, %v1012, %v1011
        %1018 = vst [vmem:[#allocation5] sm:$0xff] %v971
        %1019 = vst [vmem:[#allocation5 + $0x8] sm:$0xff] %v985
        %1020 = vst [vmem:[#allocation5 + $0x10] sm:$0xff] %v999
        %1021 = vst [vmem:[#allocation5 + $0x18] sm:$0xff] %v1013
        %v1022 = vrot.slane %v813, 1
        %v1023 = vsel %vm952, %v815, %v1022
        %v1024 = vrot.slane %v818, 7
        %v1025 = vsel %vm955, %v1024, %v1023
        %v1026 = vrot.slane %v820, 6
        %v1027 = vsel %vm958, %v1026, %v1025
        %v1028 = vrot.slane %v823, 5
        %v1029 = vsel %vm961, %v1028, %v1027
        %v1030 = vrot.slane %v825, 4
        %v1031 = vsel %vm964, %v1030, %v1029
        %v1032 = vrot.slane %v828, 3
        %v1033 = vsel %vm967, %v1032, %v1031
        %v1034 = vrot.slane %v830, 2
        %v1035 = vsel %vm970, %v1034, %v1033
        %v1036 = vrot.slane %v842, 1
        %v1037 = vsel %vm952, %v844, %v1036
        %v1038 = vrot.slane %v847, 7
        %v1039 = vsel %vm955, %v1038, %v1037
        %v1040 = vrot.slane %v849, 6
        %v1041 = vsel %vm958, %v1040, %v1039
        %v1042 = vrot.slane %v852, 5
        %v1043 = vsel %vm961, %v1042, %v1041
        %v1044 = vrot.slane %v854, 4
        %v1045 = vsel %vm964, %v1044, %v1043
        %v1046 = vrot.slane %v857, 3
        %v1047 = vsel %vm967, %v1046, %v1045
        %v1048 = vrot.slane %v859, 2
        %v1049 = vsel %vm970, %v1048, %v1047
        %v1050 = vrot.slane %v871, 1
        %v1051 = vsel %vm952, %v873, %v1050
        %v1052 = vrot.slane %v876, 7
        %v1053 = vsel %vm955, %v1052, %v1051
        %v1054 = vrot.slane %v878, 6
        %v1055 = vsel %vm958, %v1054, %v1053
        %v1056 = vrot.slane %v881, 5
        %v1057 = vsel %vm961, %v1056, %v1055
        %v1058 = vrot.slane %v883, 4
        %v1059 = vsel %vm964, %v1058, %v1057
        %v1060 = vrot.slane %v886, 3
        %v1061 = vsel %vm967, %v1060, %v1059
        %v1062 = vrot.slane %v888, 2
        %v1063 = vsel %vm970, %v1062, %v1061
        %v1064 = vrot.slane %v900, 1
        %v1065 = vsel %vm952, %v902, %v1064
        %v1066 = vrot.slane %v905, 7
        %v1067 = vsel %vm955, %v1066, %v1065
        %v1068 = vrot.slane %v907, 6
        %v1069 = vsel %vm958, %v1068, %v1067
        %v1070 = vrot.slane %v910, 5
        %v1071 = vsel %vm961, %v1070, %v1069
        %v1072 = vrot.slane %v912, 4
        %v1073 = vsel %vm964, %v1072, %v1071
        %v1074 = vrot.slane %v915, 3
        %v1075 = vsel %vm967, %v1074, %v1073
        %v1076 = vrot.slane %v917, 2
        %v1077 = vsel %vm970, %v1076, %v1075
        %s1082 = scalar_lea.vmem [#allocation5], 32
        %1083 = vst [vmem:[%s1082] sm:$0xff] %v1035
        %1084 = vst [vmem:[%s1082 + $0x8] sm:$0xff] %v1049
        %1085 = vst [vmem:[%s1082 + $0x10] sm:$0xff] %v1063
        %1086 = vst [vmem:[%s1082 + $0x18] sm:$0xff] %v1077
        %v1087 = vrot.slane %v813, 2
        %v1088 = vrot.slane %v815, 1
        %v1089 = vsel %vm952, %v1088, %v1087
        %v1090 = vsel %vm955, %v818, %v1089
        %v1091 = vrot.slane %v820, 7
        %v1092 = vsel %vm958, %v1091, %v1090
        %v1093 = vrot.slane %v823, 6
        %v1094 = vsel %vm961, %v1093, %v1092
        %v1095 = vrot.slane %v825, 5
        %v1096 = vsel %vm964, %v1095, %v1094
        %v1097 = vrot.slane %v828, 4
        %v1098 = vsel %vm967, %v1097, %v1096
        %v1099 = vrot.slane %v830, 3
        %v1100 = vsel %vm970, %v1099, %v1098
        %v1101 = vrot.slane %v842, 2
        %v1102 = vrot.slane %v844, 1
        %v1103 = vsel %vm952, %v1102, %v1101
        %v1104 = vsel %vm955, %v847, %v1103
        %v1105 = vrot.slane %v849, 7
        %v1106 = vsel %vm958, %v1105, %v1104
        %v1107 = vrot.slane %v852, 6
        %v1108 = vsel %vm961, %v1107, %v1106
        %v1109 = vrot.slane %v854, 5
        %v1110 = vsel %vm964, %v1109, %v1108
        %v1111 = vrot.slane %v857, 4
        %v1112 = vsel %vm967, %v1111, %v1110
        %v1113 = vrot.slane %v859, 3
        %v1114 = vsel %vm970, %v1113, %v1112
        %v1115 = vrot.slane %v871, 2
        %v1116 = vrot.slane %v873, 1
        %v1117 = vsel %vm952, %v1116, %v1115
        %v1118 = vsel %vm955, %v876, %v1117
        %v1119 = vrot.slane %v878, 7
        %v1120 = vsel %vm958, %v1119, %v1118
        %v1121 = vrot.slane %v881, 6
        %v1122 = vsel %vm961, %v1121, %v1120
        %v1123 = vrot.slane %v883, 5
        %v1124 = vsel %vm964, %v1123, %v1122
        %v1125 = vrot.slane %v886, 4
        %v1126 = vsel %vm967, %v1125, %v1124
        %v1127 = vrot.slane %v888, 3
        %v1128 = vsel %vm970, %v1127, %v1126
        %v1129 = vrot.slane %v900, 2
        %v1130 = vrot.slane %v902, 1
        %v1131 = vsel %vm952, %v1130, %v1129
        %v1132 = vsel %vm955, %v905, %v1131
        %v1133 = vrot.slane %v907, 7
        %v1134 = vsel %vm958, %v1133, %v1132
        %v1135 = vrot.slane %v910, 6
        %v1136 = vsel %vm961, %v1135, %v1134
        %v1137 = vrot.slane %v912, 5
        %v1138 = vsel %vm964, %v1137, %v1136
        %v1139 = vrot.slane %v915, 4
        %v1140 = vsel %vm967, %v1139, %v1138
        %v1141 = vrot.slane %v917, 3
        %v1142 = vsel %vm970, %v1141, %v1140
        %s1147 = scalar_lea.vmem [#allocation5], 64
        %1148 = vst [vmem:[%s1147] sm:$0xff] %v1100
        %1149 = vst [vmem:[%s1147 + $0x8] sm:$0xff] %v1114
        %1150 = vst [vmem:[%s1147 + $0x10] sm:$0xff] %v1128
        %1151 = vst [vmem:[%s1147 + $0x18] sm:$0xff] %v1142
        %v1152 = vrot.slane %v813, 3
        %v1153 = vrot.slane %v815, 2
        %v1154 = vsel %vm952, %v1153, %v1152
        %v1155 = vrot.slane %v818, 1
        %v1156 = vsel %vm955, %v1155, %v1154
        %v1157 = vsel %vm958, %v820, %v1156
        %v1158 = vrot.slane %v823, 7
        %v1159 = vsel %vm961, %v1158, %v1157
        %v1160 = vrot.slane %v825, 6
        %v1161 = vsel %vm964, %v1160, %v1159
        %v1162 = vrot.slane %v828, 5
        %v1163 = vsel %vm967, %v1162, %v1161
        %v1164 = vrot.slane %v830, 4
        %v1165 = vsel %vm970, %v1164, %v1163
        %v1166 = vrot.slane %v842, 3
        %v1167 = vrot.slane %v844, 2
        %v1168 = vsel %vm952, %v1167, %v1166
        %v1169 = vrot.slane %v847, 1
        %v1170 = vsel %vm955, %v1169, %v1168
        %v1171 = vsel %vm958, %v849, %v1170
        %v1172 = vrot.slane %v852, 7
        %v1173 = vsel %vm961, %v1172, %v1171
        %v1174 = vrot.slane %v854, 6
        %v1175 = vsel %vm964, %v1174, %v1173
        %v1176 = vrot.slane %v857, 5
        %v1177 = vsel %vm967, %v1176, %v1175
        %v1178 = vrot.slane %v859, 4
        %v1179 = vsel %vm970, %v1178, %v1177
        %v1180 = vrot.slane %v871, 3
        %v1181 = vrot.slane %v873, 2
        %v1182 = vsel %vm952, %v1181, %v1180
        %v1183 = vrot.slane %v876, 1
        %v1184 = vsel %vm955, %v1183, %v1182
        %v1185 = vsel %vm958, %v878, %v1184
        %v1186 = vrot.slane %v881, 7
        %v1187 = vsel %vm961, %v1186, %v1185
        %v1188 = vrot.slane %v883, 6
        %v1189 = vsel %vm964, %v1188, %v1187
        %v1190 = vrot.slane %v886, 5
        %v1191 = vsel %vm967, %v1190, %v1189
        %v1192 = vrot.slane %v888, 4
        %v1193 = vsel %vm970, %v1192, %v1191
        %v1194 = vrot.slane %v900, 3
        %v1195 = vrot.slane %v902, 2
        %v1196 = vsel %vm952, %v1195, %v1194
        %v1197 = vrot.slane %v905, 1
        %v1198 = vsel %vm955, %v1197, %v1196
        %v1199 = vsel %vm958, %v907, %v1198
        %v1200 = vrot.slane %v910, 7
        %v1201 = vsel %vm961, %v1200, %v1199
        %v1202 = vrot.slane %v912, 6
        %v1203 = vsel %vm964, %v1202, %v1201
        %v1204 = vrot.slane %v915, 5
        %v1205 = vsel %vm967, %v1204, %v1203
        %v1206 = vrot.slane %v917, 4
        %v1207 = vsel %vm970, %v1206, %v1205
        %s1212 = scalar_lea.vmem [#allocation5], 96
        %1213 = vst [vmem:[%s1212] sm:$0xff] %v1165
        %1214 = vst [vmem:[%s1212 + $0x8] sm:$0xff] %v1179
        %1215 = vst [vmem:[%s1212 + $0x10] sm:$0xff] %v1193
        %1216 = vst [vmem:[%s1212 + $0x18] sm:$0xff] %v1207
        %v1217 = vrot.slane %v813, 4
        %v1218 = vrot.slane %v815, 3
        %v1219 = vsel %vm952, %v1218, %v1217
        %v1220 = vrot.slane %v818, 2
        %v1221 = vsel %vm955, %v1220, %v1219
        %v1222 = vrot.slane %v820, 1
        %v1223 = vsel %vm958, %v1222, %v1221
        %v1224 = vsel %vm961, %v823, %v1223
        %v1225 = vrot.slane %v825, 7
        %v1226 = vsel %vm964, %v1225, %v1224
        %v1227 = vrot.slane %v828, 6
        %v1228 = vsel %vm967, %v1227, %v1226
        %v1229 = vrot.slane %v830, 5
        %v1230 = vsel %vm970, %v1229, %v1228
        %v1231 = vrot.slane %v842, 4
        %v1232 = vrot.slane %v844, 3
        %v1233 = vsel %vm952, %v1232, %v1231
        %v1234 = vrot.slane %v847, 2
        %v1235 = vsel %vm955, %v1234, %v1233
        %v1236 = vrot.slane %v849, 1
        %v1237 = vsel %vm958, %v1236, %v1235
        %v1238 = vsel %vm961, %v852, %v1237
        %v1239 = vrot.slane %v854, 7
        %v1240 = vsel %vm964, %v1239, %v1238
        %v1241 = vrot.slane %v857, 6
        %v1242 = vsel %vm967, %v1241, %v1240
        %v1243 = vrot.slane %v859, 5
        %v1244 = vsel %vm970, %v1243, %v1242
        %v1245 = vrot.slane %v871, 4
        %v1246 = vrot.slane %v873, 3
        %v1247 = vsel %vm952, %v1246, %v1245
        %v1248 = vrot.slane %v876, 2
        %v1249 = vsel %vm955, %v1248, %v1247
        %v1250 = vrot.slane %v878, 1
        %v1251 = vsel %vm958, %v1250, %v1249
        %v1252 = vsel %vm961, %v881, %v1251
        %v1253 = vrot.slane %v883, 7
        %v1254 = vsel %vm964, %v1253, %v1252
        %v1255 = vrot.slane %v886, 6
        %v1256 = vsel %vm967, %v1255, %v1254
        %v1257 = vrot.slane %v888, 5
        %v1258 = vsel %vm970, %v1257, %v1256
        %v1259 = vrot.slane %v900, 4
        %v1260 = vrot.slane %v902, 3
        %v1261 = vsel %vm952, %v1260, %v1259
        %v1262 = vrot.slane %v905, 2
        %v1263 = vsel %vm955, %v1262, %v1261
        %v1264 = vrot.slane %v907, 1
        %v1265 = vsel %vm958, %v1264, %v1263
        %v1266 = vsel %vm961, %v910, %v1265
        %v1267 = vrot.slane %v912, 7
        %v1268 = vsel %vm964, %v1267, %v1266
        %v1269 = vrot.slane %v915, 6
        %v1270 = vsel %vm967, %v1269, %v1268
        %v1271 = vrot.slane %v917, 5
        %v1272 = vsel %vm970, %v1271, %v1270
        %s1277 = scalar_lea.vmem [#allocation5], 128
        %1278 = vst [vmem:[%s1277] sm:$0xff] %v1230
        %1279 = vst [vmem:[%s1277 + $0x8] sm:$0xff] %v1244
        %1280 = vst [vmem:[%s1277 + $0x10] sm:$0xff] %v1258
        %1281 = vst [vmem:[%s1277 + $0x18] sm:$0xff] %v1272
        %v1282 = vrot.slane %v813, 5
        %v1283 = vrot.slane %v815, 4
        %v1284 = vsel %vm952, %v1283, %v1282
        %v1285 = vrot.slane %v818, 3
        %v1286 = vsel %vm955, %v1285, %v1284
        %v1287 = vrot.slane %v820, 2
        %v1288 = vsel %vm958, %v1287, %v1286
        %v1289 = vrot.slane %v823, 1
        %v1290 = vsel %vm961, %v1289, %v1288
        %v1291 = vsel %vm964, %v825, %v1290
        %v1292 = vrot.slane %v828, 7
        %v1293 = vsel %vm967, %v1292, %v1291
        %v1294 = vrot.slane %v830, 6
        %v1295 = vsel %vm970, %v1294, %v1293
        %v1296 = vrot.slane %v842, 5
        %v1297 = vrot.slane %v844, 4
        %v1298 = vsel %vm952, %v1297, %v1296
        %v1299 = vrot.slane %v847, 3
        %v1300 = vsel %vm955, %v1299, %v1298
        %v1301 = vrot.slane %v849, 2
        %v1302 = vsel %vm958, %v1301, %v1300
        %v1303 = vrot.slane %v852, 1
        %v1304 = vsel %vm961, %v1303, %v1302
        %v1305 = vsel %vm964, %v854, %v1304
        %v1306 = vrot.slane %v857, 7
        %v1307 = vsel %vm967, %v1306, %v1305
        %v1308 = vrot.slane %v859, 6
        %v1309 = vsel %vm970, %v1308, %v1307
        %v1310 = vrot.slane %v871, 5
        %v1311 = vrot.slane %v873, 4
        %v1312 = vsel %vm952, %v1311, %v1310
        %v1313 = vrot.slane %v876, 3
        %v1314 = vsel %vm955, %v1313, %v1312
        %v1315 = vrot.slane %v878, 2
        %v1316 = vsel %vm958, %v1315, %v1314
        %v1317 = vrot.slane %v881, 1
        %v1318 = vsel %vm961, %v1317, %v1316
        %v1319 = vsel %vm964, %v883, %v1318
        %v1320 = vrot.slane %v886, 7
        %v1321 = vsel %vm967, %v1320, %v1319
        %v1322 = vrot.slane %v888, 6
        %v1323 = vsel %vm970, %v1322, %v1321
        %v1324 = vrot.slane %v900, 5
        %v1325 = vrot.slane %v902, 4
        %v1326 = vsel %vm952, %v1325, %v1324
        %v1327 = vrot.slane %v905, 3
        %v1328 = vsel %vm955, %v1327, %v1326
        %v1329 = vrot.slane %v907, 2
        %v1330 = vsel %vm958, %v1329, %v1328
        %v1331 = vrot.slane %v910, 1
        %v1332 = vsel %vm961, %v1331, %v1330
        %v1333 = vsel %vm964, %v912, %v1332
        %v1334 = vrot.slane %v915, 7
        %v1335 = vsel %vm967, %v1334, %v1333
        %v1336 = vrot.slane %v917, 6
        %v1337 = vsel %vm970, %v1336, %v1335
        %s1342 = scalar_lea.vmem [#allocation5], 160
        %1343 = vst [vmem:[%s1342] sm:$0xff] %v1295
        %1344 = vst [vmem:[%s1342 + $0x8] sm:$0xff] %v1309
        %1345 = vst [vmem:[%s1342 + $0x10] sm:$0xff] %v1323
        %1346 = vst [vmem:[%s1342 + $0x18] sm:$0xff] %v1337
        %v1347 = vrot.slane %v813, 6
        %v1348 = vrot.slane %v815, 5
        %v1349 = vsel %vm952, %v1348, %v1347
        %v1350 = vrot.slane %v818, 4
        %v1351 = vsel %vm955, %v1350, %v1349
        %v1352 = vrot.slane %v820, 3
        %v1353 = vsel %vm958, %v1352, %v1351
        %v1354 = vrot.slane %v823, 2
        %v1355 = vsel %vm961, %v1354, %v1353
        %v1356 = vrot.slane %v825, 1
        %v1357 = vsel %vm964, %v1356, %v1355
        %v1358 = vsel %vm967, %v828, %v1357
        %v1359 = vrot.slane %v830, 7
        %v1360 = vsel %vm970, %v1359, %v1358
        %v1361 = vrot.slane %v842, 6
        %v1362 = vrot.slane %v844, 5
        %v1363 = vsel %vm952, %v1362, %v1361
        %v1364 = vrot.slane %v847, 4
        %v1365 = vsel %vm955, %v1364, %v1363
        %v1366 = vrot.slane %v849, 3
        %v1367 = vsel %vm958, %v1366, %v1365
        %v1368 = vrot.slane %v852, 2
        %v1369 = vsel %vm961, %v1368, %v1367
        %v1370 = vrot.slane %v854, 1
        %v1371 = vsel %vm964, %v1370, %v1369
        %v1372 = vsel %vm967, %v857, %v1371
        %v1373 = vrot.slane %v859, 7
        %v1374 = vsel %vm970, %v1373, %v1372
        %v1375 = vrot.slane %v871, 6
        %v1376 = vrot.slane %v873, 5
        %v1377 = vsel %vm952, %v1376, %v1375
        %v1378 = vrot.slane %v876, 4
        %v1379 = vsel %vm955, %v1378, %v1377
        %v1380 = vrot.slane %v878, 3
        %v1381 = vsel %vm958, %v1380, %v1379
        %v1382 = vrot.slane %v881, 2
        %v1383 = vsel %vm961, %v1382, %v1381
        %v1384 = vrot.slane %v883, 1
        %v1385 = vsel %vm964, %v1384, %v1383
        %v1386 = vsel %vm967, %v886, %v1385
        %v1387 = vrot.slane %v888, 7
        %v1388 = vsel %vm970, %v1387, %v1386
        %v1389 = vrot.slane %v900, 6
        %v1390 = vrot.slane %v902, 5
        %v1391 = vsel %vm952, %v1390, %v1389
        %v1392 = vrot.slane %v905, 4
        %v1393 = vsel %vm955, %v1392, %v1391
        %v1394 = vrot.slane %v907, 3
        %v1395 = vsel %vm958, %v1394, %v1393
        %v1396 = vrot.slane %v910, 2
        %v1397 = vsel %vm961, %v1396, %v1395
        %v1398 = vrot.slane %v912, 1
        %v1399 = vsel %vm964, %v1398, %v1397
        %v1400 = vsel %vm967, %v915, %v1399
        %v1401 = vrot.slane %v917, 7
        %v1402 = vsel %vm970, %v1401, %v1400
        %s1407 = scalar_lea.vmem [#allocation5], 192
        %1408 = vst [vmem:[%s1407] sm:$0xff] %v1360
        %1409 = vst [vmem:[%s1407 + $0x8] sm:$0xff] %v1374
        %1410 = vst [vmem:[%s1407 + $0x10] sm:$0xff] %v1388
        %1411 = vst [vmem:[%s1407 + $0x18] sm:$0xff] %v1402
        %v1412 = vrot.slane %v813, 7
        %v1413 = vrot.slane %v815, 6
        %v1414 = vsel %vm952, %v1413, %v1412
        %v1415 = vrot.slane %v818, 5
        %v1416 = vsel %vm955, %v1415, %v1414
        %v1417 = vrot.slane %v820, 4
        %v1418 = vsel %vm958, %v1417, %v1416
        %v1419 = vrot.slane %v823, 3
        %v1420 = vsel %vm961, %v1419, %v1418
        %v1421 = vrot.slane %v825, 2
        %v1422 = vsel %vm964, %v1421, %v1420
        %v1423 = vrot.slane %v828, 1
        %v1424 = vsel %vm967, %v1423, %v1422
        %v1425 = vsel %vm970, %v830, %v1424
        %v1426 = vrot.slane %v842, 7
        %v1427 = vrot.slane %v844, 6
        %v1428 = vsel %vm952, %v1427, %v1426
        %v1429 = vrot.slane %v847, 5
        %v1430 = vsel %vm955, %v1429, %v1428
        %v1431 = vrot.slane %v849, 4
        %v1432 = vsel %vm958, %v1431, %v1430
        %v1433 = vrot.slane %v852, 3
        %v1434 = vsel %vm961, %v1433, %v1432
        %v1435 = vrot.slane %v854, 2
        %v1436 = vsel %vm964, %v1435, %v1434
        %v1437 = vrot.slane %v857, 1
        %v1438 = vsel %vm967, %v1437, %v1436
        %v1439 = vsel %vm970, %v859, %v1438
        %v1440 = vrot.slane %v871, 7
        %v1441 = vrot.slane %v873, 6
        %v1442 = vsel %vm952, %v1441, %v1440
        %v1443 = vrot.slane %v876, 5
        %v1444 = vsel %vm955, %v1443, %v1442
        %v1445 = vrot.slane %v878, 4
        %v1446 = vsel %vm958, %v1445, %v1444
        %v1447 = vrot.slane %v881, 3
        %v1448 = vsel %vm961, %v1447, %v1446
        %v1449 = vrot.slane %v883, 2
        %v1450 = vsel %vm964, %v1449, %v1448
        %v1451 = vrot.slane %v886, 1
        %v1452 = vsel %vm967, %v1451, %v1450
        %v1453 = vsel %vm970, %v888, %v1452
        %v1454 = vrot.slane %v900, 7
        %v1455 = vrot.slane %v902, 6
        %v1456 = vsel %vm952, %v1455, %v1454
        %v1457 = vrot.slane %v905, 5
        %v1458 = vsel %vm955, %v1457, %v1456
        %v1459 = vrot.slane %v907, 4
        %v1460 = vsel %vm958, %v1459, %v1458
        %v1461 = vrot.slane %v910, 3
        %v1462 = vsel %vm961, %v1461, %v1460
        %v1463 = vrot.slane %v912, 2
        %v1464 = vsel %vm964, %v1463, %v1462
        %v1465 = vrot.slane %v915, 1
        %v1466 = vsel %vm967, %v1465, %v1464
        %v1467 = vsel %vm970, %v917, %v1466
        %s1472 = scalar_lea.vmem [#allocation5], 224
        %1473 = vst [vmem:[%s1472] sm:$0xff] %v1425
        %1474 = vst [vmem:[%s1472 + $0x8] sm:$0xff] %v1439
        %1475 = vst [vmem:[%s1472 + $0x10] sm:$0xff] %v1453
        %1476 = vst [vmem:[%s1472 + $0x18] sm:$0xff] %v1467
        %v1477 = vld [vmem:[#allocation2] sm:$0xff]
        %v1478 = vld [vmem:[#allocation3] sm:$0xff]
        %v1479 = vpack.c.bf16 %v1477, %v1477
        %v1480 = vld [vmem:[#allocation5] sm:$0xff]
        %v1481 = vld [vmem:[#allocation5 + $0x8] sm:$0xff]
        %v1482 = vld [vmem:[#allocation5 + $0x10] sm:$0xff]
        %v1483 = vld [vmem:[#allocation5 + $0x18] sm:$0xff]
        %v1516 = vunpack.c.l.b16 %v589
        %v1517 = vunpack.c.h.b16 %v589
        %v1518 = vunpack.c.l.b16 %v590
        %v1519 = vunpack.c.h.b16 %v590
        %v1520 = vunpack.c.l.b16 %v591
        %v1521 = vunpack.c.h.b16 %v591
        %v1522 = vunpack.c.l.b16 %v592
        %v1523 = vunpack.c.h.b16 %v592
        %v1524 = vunpack.c.l.b16 %v593
        %v1525 = vunpack.c.h.b16 %v593
        %v1526 = vunpack.c.l.b16 %v594
        %v1527 = vunpack.c.h.b16 %v594
        %v1528 = vunpack.c.l.b16 %v595
        %v1529 = vunpack.c.h.b16 %v595
        %v1530 = vunpack.c.l.b16 %v596
        %v1531 = vunpack.c.h.b16 %v596
        %v1532 = vunpack.c.l.b16 %v597
        %v1533 = vunpack.c.h.b16 %v597
        %v1534 = vunpack.c.l.b16 %v598
        %v1535 = vunpack.c.h.b16 %v598
        %v1536 = vunpack.c.l.b16 %v599
        %v1537 = vunpack.c.h.b16 %v599
        %v1538 = vunpack.c.l.b16 %v600
        %v1539 = vunpack.c.h.b16 %v600
        %v1540 = vunpack.c.l.b16 %v601
        %v1541 = vunpack.c.h.b16 %v601
        %v1542 = vunpack.c.l.b16 %v602
        %v1543 = vunpack.c.h.b16 %v602
        %v1544 = vunpack.c.l.b16 %v603
        %v1545 = vunpack.c.h.b16 %v603
        %v1546 = vunpack.c.l.b16 %v604
        %v1547 = vunpack.c.h.b16 %v604
        %v1548 = vunpack.c.l.b16 %v605
        %v1549 = vunpack.c.h.b16 %v605
        %v1550 = vunpack.c.l.b16 %v606
        %v1551 = vunpack.c.h.b16 %v606
        %v1552 = vunpack.c.l.b16 %v607
        %v1553 = vunpack.c.h.b16 %v607
        %v1554 = vunpack.c.l.b16 %v608
        %v1555 = vunpack.c.h.b16 %v608
        %v1556 = vunpack.c.l.b16 %v609
        %v1557 = vunpack.c.h.b16 %v609
        %v1558 = vunpack.c.l.b16 %v610
        %v1559 = vunpack.c.h.b16 %v610
        %v1560 = vunpack.c.l.b16 %v611
        %v1561 = vunpack.c.h.b16 %v611
        %v1562 = vunpack.c.l.b16 %v612
        %v1563 = vunpack.c.h.b16 %v612
        %v1564 = vunpack.c.l.b16 %v613
        %v1565 = vunpack.c.h.b16 %v613
        %v1566 = vunpack.c.l.b16 %v614
        %v1567 = vunpack.c.h.b16 %v614
        %v1568 = vunpack.c.l.b16 %v615
        %v1569 = vunpack.c.h.b16 %v615
        %v1570 = vunpack.c.l.b16 %v616
        %v1571 = vunpack.c.h.b16 %v616
        %v1572 = vunpack.c.l.b16 %v617
        %v1573 = vunpack.c.h.b16 %v617
        %v1574 = vunpack.c.l.b16 %v618
        %v1575 = vunpack.c.h.b16 %v618
        %v1576 = vunpack.c.l.b16 %v619
        %v1577 = vunpack.c.h.b16 %v619
        %v1578 = vunpack.c.l.b16 %v620
        %v1579 = vunpack.c.h.b16 %v620
        %v1580 = vpack.c.b16 %v1520, %v1516
        %v1581 = vpack.c.b16 %v1521, %v1517
        %v1582 = vpack.c.b16 %v1522, %v1518
        %v1583 = vpack.c.b16 %v1523, %v1519
        %v1584 = vpack.c.b16 %v1528, %v1524
        %v1585 = vpack.c.b16 %v1529, %v1525
        %v1586 = vpack.c.b16 %v1530, %v1526
        %v1587 = vpack.c.b16 %v1531, %v1527
        %v1588 = vpack.c.b16 %v1536, %v1532
        %v1589 = vpack.c.b16 %v1537, %v1533
        %v1590 = vpack.c.b16 %v1538, %v1534
        %v1591 = vpack.c.b16 %v1539, %v1535
        %v1592 = vpack.c.b16 %v1544, %v1540
        %v1593 = vpack.c.b16 %v1545, %v1541
        %v1594 = vpack.c.b16 %v1546, %v1542
        %v1595 = vpack.c.b16 %v1547, %v1543
        %v1596 = vpack.c.b16 %v1552, %v1548
        %v1597 = vpack.c.b16 %v1553, %v1549
        %v1598 = vpack.c.b16 %v1554, %v1550
        %v1599 = vpack.c.b16 %v1555, %v1551
        %v1600 = vpack.c.b16 %v1560, %v1556
        %v1601 = vpack.c.b16 %v1561, %v1557
        %v1602 = vpack.c.b16 %v1562, %v1558
        %v1603 = vpack.c.b16 %v1563, %v1559
        %v1604 = vpack.c.b16 %v1568, %v1564
        %v1605 = vpack.c.b16 %v1569, %v1565
        %v1606 = vpack.c.b16 %v1570, %v1566
        %v1607 = vpack.c.b16 %v1571, %v1567
        %v1608 = vpack.c.b16 %v1576, %v1572
        %v1609 = vpack.c.b16 %v1577, %v1573
        %v1610 = vpack.c.b16 %v1578, %v1574
        %v1611 = vpack.c.b16 %v1579, %v1575
        %1644 = vmatpush.bf16.msra.mxu0 %v1608
        %1645 = vmatpush.bf16.msra.mxu0 %v1604
        %1646 = vmatpush.bf16.msra.mxu0 %v1600
        %1647 = vmatpush.bf16.msra.mxu0 %v1596
        %1648 = vmatpush.bf16.msra.mxu0 %v1592
        %1649 = vmatpush.bf16.msra.mxu0 %v1588
        %1650 = vmatpush.bf16.msra.mxu0 %v1584
        %1651 = vmatpush.bf16.msra.mxu0 %v1580
        %1652 = vmatmul.bf16.gmra.mxu0 %v1479
        %v1653 = vpop.f32.mrf.mxu0
        %v1654 = vadd.f32 %v1480, %v1653
        %v1655 = vpop.f32.mrf.mxu0
        %1656 = vdwg.mxu0
        %1657 = vmatpush.bf16.msra.mxu0 %v1609
        %1658 = vmatpush.bf16.msra.mxu0 %v1605
        %1659 = vmatpush.bf16.msra.mxu0 %v1601
        %1660 = vmatpush.bf16.msra.mxu0 %v1597
        %1661 = vmatpush.bf16.msra.mxu0 %v1593
        %1662 = vmatpush.bf16.msra.mxu0 %v1589
        %1663 = vmatpush.bf16.msra.mxu0 %v1585
        %1664 = vmatpush.bf16.msra.mxu0 %v1581
        %1665 = vmatmul.bf16.gmra.mxu0 %v1479
        %v1666 = vpop.f32.mrf.mxu0
        %v1667 = vadd.f32 %v1481, %v1666
        %v1668 = vpop.f32.mrf.mxu0
        %1669 = vdwg.mxu0
        %1670 = vmatpush.bf16.msra.mxu0 %v1610
        %1671 = vmatpush.bf16.msra.mxu0 %v1606
        %1672 = vmatpush.bf16.msra.mxu0 %v1602
        %1673 = vmatpush.bf16.msra.mxu0 %v1598
        %1674 = vmatpush.bf16.msra.mxu0 %v1594
        %1675 = vmatpush.bf16.msra.mxu0 %v1590
        %1676 = vmatpush.bf16.msra.mxu0 %v1586
        %1677 = vmatpush.bf16.msra.mxu0 %v1582
        %1678 = vmatmul.bf16.gmra.mxu0 %v1479
        %v1679 = vpop.f32.mrf.mxu0
        %v1680 = vadd.f32 %v1482, %v1679
        %v1681 = vpop.f32.mrf.mxu0
        %1682 = vdwg.mxu0
        %1683 = vmatpush.bf16.msra.mxu0 %v1611
        %1684 = vmatpush.bf16.msra.mxu0 %v1607
        %1685 = vmatpush.bf16.msra.mxu0 %v1603
        %1686 = vmatpush.bf16.msra.mxu0 %v1599
        %1687 = vmatpush.bf16.msra.mxu0 %v1595
        %1688 = vmatpush.bf16.msra.mxu0 %v1591
        %1689 = vmatpush.bf16.msra.mxu0 %v1587
        %1690 = vmatpush.bf16.msra.mxu0 %v1583
        %1691 = vmatmul.bf16.gmra.mxu0 %v1479
        %v1692 = vpop.f32.mrf.mxu0
        %v1693 = vadd.f32 %v1483, %v1692
        %v1694 = vpop.f32.mrf.mxu0
        %1695 = vdwg.mxu0
        %v1696 = vadd.f32 %v1654, %v623
        %v1697 = vadd.f32 %v1667, %v624
        %v1698 = vadd.f32 %v1680, %v625
        %v1699 = vadd.f32 %v1693, %v626
        %v1700 = vxor.u32 %v1696, 2147483648
        %v1701 = vmul.f32 %v1700, 1.442695
        %v1702 = vpow.pop %v1701
        %v1703 = vadd.f32 %v1702, 1.0
        %v1704 = vrcp.pop %v1703
        %v1705 = vmul.f32 %v1703, %v1704
        %v1706 = vsub.f32 1.0, %v1705
        %v1707 = vmul.f32 %v1704, %v1706
        %v1708 = vadd.f32 %v1704, %v1707
        %vm1709 = vweird.f32 %v1703
        %vm1710 = vweird.f32 %v1704
        %vm1711 = vmor %vm1709, %vm1710
        %v1712 = vsel %vm1711, %v1704, %v1708
        %v1713 = vand.u32 2147483647, %v1703
        %vm1714 = vcmp.eq.f32.partialorder %v1713, 8.507059e+37
        %v1715 = vand.u32 %v1703, 2147483648
        %v1716 = vor.u32 1.1754944e-38, %v1715
        %v1717 = vsel %vm1714, %v1716, %v1712
        %v1718 = vmul.f32 1.0, %v1717
        %v1719 = vxor.u32 %v1697, 2147483648
        %v1720 = vmul.f32 %v1719, 1.442695
        %v1721 = vpow.pop %v1720
        %v1722 = vadd.f32 %v1721, 1.0
        %v1723 = vrcp.pop %v1722
        %v1724 = vmul.f32 %v1722, %v1723
        %v1725 = vsub.f32 1.0, %v1724
        %v1726 = vmul.f32 %v1723, %v1725
        %v1727 = vadd.f32 %v1723, %v1726
        %vm1728 = vweird.f32 %v1722
        %vm1729 = vweird.f32 %v1723
        %vm1730 = vmor %vm1728, %vm1729
        %v1731 = vsel %vm1730, %v1723, %v1727
        %v1732 = vand.u32 2147483647, %v1722
        %vm1733 = vcmp.eq.f32.partialorder %v1732, 8.507059e+37
        %v1734 = vand.u32 %v1722, 2147483648
        %v1735 = vor.u32 1.1754944e-38, %v1734
        %v1736 = vsel %vm1733, %v1735, %v1731
        %v1737 = vmul.f32 1.0, %v1736
        %v1738 = vtanh.pop %v1698
        %v1739 = vxor.u32 %v1699, 2147483648
        %v1740 = vmul.f32 %v1739, 1.442695
        %v1741 = vpow.pop %v1740
        %v1742 = vadd.f32 %v1741, 1.0
        %v1743 = vrcp.pop %v1742
        %v1744 = vmul.f32 %v1742, %v1743
        %v1745 = vsub.f32 1.0, %v1744
        %v1746 = vmul.f32 %v1743, %v1745
        %v1747 = vadd.f32 %v1743, %v1746
        %vm1748 = vweird.f32 %v1742
        %vm1749 = vweird.f32 %v1743
        %vm1750 = vmor %vm1748, %vm1749
        %v1751 = vsel %vm1750, %v1743, %v1747
        %v1752 = vand.u32 2147483647, %v1742
        %vm1753 = vcmp.eq.f32.partialorder %v1752, 8.507059e+37
        %v1754 = vand.u32 %v1742, 2147483648
        %v1755 = vor.u32 1.1754944e-38, %v1754
        %v1756 = vsel %vm1753, %v1755, %v1751
        %v1757 = vmul.f32 1.0, %v1756
        %v1758 = vmul.f32 %v1737, %v1478
        %v1759 = vmul.f32 %v1718, %v1738
        %v1760 = vadd.f32 %v1758, %v1759
        %v1761 = vtanh.pop %v1760
        %v1762 = vmul.f32 %v1757, %v1761
        %1763 = vst [vmem:[#allocation4] sm:$0xff] %v1762
        %v1764 = vpack.c.bf16 %v1762, %v1762
        %v1765 = vld [vmem:[%s1082] sm:$0xff]
        %v1766 = vld [vmem:[%s1082 + $0x8] sm:$0xff]
        %v1767 = vld [vmem:[%s1082 + $0x10] sm:$0xff]
        %v1768 = vld [vmem:[%s1082 + $0x18] sm:$0xff]
        %1769 = vmatpush.bf16.msra.mxu0 %v1608
        %1770 = vmatpush.bf16.msra.mxu0 %v1604
        %1771 = vmatpush.bf16.msra.mxu0 %v1600
        %1772 = vmatpush.bf16.msra.mxu0 %v1596
        %1773 = vmatpush.bf16.msra.mxu0 %v1592
        %1774 = vmatpush.bf16.msra.mxu0 %v1588
        %1775 = vmatpush.bf16.msra.mxu0 %v1584
        %1776 = vmatpush.bf16.msra.mxu0 %v1580
        %1777 = vmatmul.bf16.gmra.mxu0 %v1764
        %v1778 = vpop.f32.mrf.mxu0
        %v1779 = vadd.f32 %v1765, %v1778
        %v1780 = vpop.f32.mrf.mxu0
        %1781 = vdwg.mxu0
        %1782 = vmatpush.bf16.msra.mxu0 %v1609
        %1783 = vmatpush.bf16.msra.mxu0 %v1605
        %1784 = vmatpush.bf16.msra.mxu0 %v1601
        %1785 = vmatpush.bf16.msra.mxu0 %v1597
        %1786 = vmatpush.bf16.msra.mxu0 %v1593
        %1787 = vmatpush.bf16.msra.mxu0 %v1589
        %1788 = vmatpush.bf16.msra.mxu0 %v1585
        %1789 = vmatpush.bf16.msra.mxu0 %v1581
        %1790 = vmatmul.bf16.gmra.mxu0 %v1764
        %v1791 = vpop.f32.mrf.mxu0
        %v1792 = vadd.f32 %v1766, %v1791
        %v1793 = vpop.f32.mrf.mxu0
        %1794 = vdwg.mxu0
        %1795 = vmatpush.bf16.msra.mxu0 %v1610
        %1796 = vmatpush.bf16.msra.mxu0 %v1606
        %1797 = vmatpush.bf16.msra.mxu0 %v1602
        %1798 = vmatpush.bf16.msra.mxu0 %v1598
        %1799 = vmatpush.bf16.msra.mxu0 %v1594
        %1800 = vmatpush.bf16.msra.mxu0 %v1590
        %1801 = vmatpush.bf16.msra.mxu0 %v1586
        %1802 = vmatpush.bf16.msra.mxu0 %v1582
        %1803 = vmatmul.bf16.gmra.mxu0 %v1764
        %v1804 = vpop.f32.mrf.mxu0
        %v1805 = vadd.f32 %v1767, %v1804
        %v1806 = vpop.f32.mrf.mxu0
        %1807 = vdwg.mxu0
        %1808 = vmatpush.bf16.msra.mxu0 %v1611
        %1809 = vmatpush.bf16.msra.mxu0 %v1607
        %1810 = vmatpush.bf16.msra.mxu0 %v1603
        %1811 = vmatpush.bf16.msra.mxu0 %v1599
        %1812 = vmatpush.bf16.msra.mxu0 %v1595
        %1813 = vmatpush.bf16.msra.mxu0 %v1591
        %1814 = vmatpush.bf16.msra.mxu0 %v1587
        %1815 = vmatpush.bf16.msra.mxu0 %v1583
        %1816 = vmatmul.bf16.gmra.mxu0 %v1764
        %v1817 = vpop.f32.mrf.mxu0
        %v1818 = vadd.f32 %v1768, %v1817
        %v1819 = vpop.f32.mrf.mxu0
        %1820 = vdwg.mxu0
        %v1821 = vadd.f32 %v1779, %v623
        %v1822 = vadd.f32 %v1792, %v624
        %v1823 = vadd.f32 %v1805, %v625
        %v1824 = vadd.f32 %v1818, %v626
        %v1825 = vxor.u32 %v1821, 2147483648
        %v1826 = vmul.f32 %v1825, 1.442695
        %v1827 = vpow.pop %v1826
        %v1828 = vadd.f32 %v1827, 1.0
        %v1829 = vrcp.pop %v1828
        %v1830 = vmul.f32 %v1828, %v1829
        %v1831 = vsub.f32 1.0, %v1830
        %v1832 = vmul.f32 %v1829, %v1831
        %v1833 = vadd.f32 %v1829, %v1832
        %vm1834 = vweird.f32 %v1828
        %vm1835 = vweird.f32 %v1829
        %vm1836 = vmor %vm1834, %vm1835
        %v1837 = vsel %vm1836, %v1829, %v1833
        %v1838 = vand.u32 2147483647, %v1828
        %vm1839 = vcmp.eq.f32.partialorder %v1838, 8.507059e+37
        %v1840 = vand.u32 %v1828, 2147483648
        %v1841 = vor.u32 1.1754944e-38, %v1840
        %v1842 = vsel %vm1839, %v1841, %v1837
        %v1843 = vmul.f32 1.0, %v1842
        %v1844 = vxor.u32 %v1822, 2147483648
        %v1845 = vmul.f32 %v1844, 1.442695
        %v1846 = vpow.pop %v1845
        %v1847 = vadd.f32 %v1846, 1.0
        %v1848 = vrcp.pop %v1847
        %v1849 = vmul.f32 %v1847, %v1848
        %v1850 = vsub.f32 1.0, %v1849
        %v1851 = vmul.f32 %v1848, %v1850
        %v1852 = vadd.f32 %v1848, %v1851
        %vm1853 = vweird.f32 %v1847
        %vm1854 = vweird.f32 %v1848
        %vm1855 = vmor %vm1853, %vm1854
        %v1856 = vsel %vm1855, %v1848, %v1852
        %v1857 = vand.u32 2147483647, %v1847
        %vm1858 = vcmp.eq.f32.partialorder %v1857, 8.507059e+37
        %v1859 = vand.u32 %v1847, 2147483648
        %v1860 = vor.u32 1.1754944e-38, %v1859
        %v1861 = vsel %vm1858, %v1860, %v1856
        %v1862 = vmul.f32 1.0, %v1861
        %v1863 = vtanh.pop %v1823
        %v1864 = vxor.u32 %v1824, 2147483648
        %v1865 = vmul.f32 %v1864, 1.442695
        %v1866 = vpow.pop %v1865
        %v1867 = vadd.f32 %v1866, 1.0
        %v1868 = vrcp.pop %v1867
        %v1869 = vmul.f32 %v1867, %v1868
        %v1870 = vsub.f32 1.0, %v1869
        %v1871 = vmul.f32 %v1868, %v1870
        %v1872 = vadd.f32 %v1868, %v1871
        %vm1873 = vweird.f32 %v1867
        %vm1874 = vweird.f32 %v1868
        %vm1875 = vmor %vm1873, %vm1874
        %v1876 = vsel %vm1875, %v1868, %v1872
        %v1877 = vand.u32 2147483647, %v1867
        %vm1878 = vcmp.eq.f32.partialorder %v1877, 8.507059e+37
        %v1879 = vand.u32 %v1867, 2147483648
        %v1880 = vor.u32 1.1754944e-38, %v1879
        %v1881 = vsel %vm1878, %v1880, %v1876
        %v1882 = vmul.f32 1.0, %v1881
        %v1883 = vmul.f32 %v1862, %v1760
        %v1884 = vmul.f32 %v1843, %v1863
        %v1885 = vadd.f32 %v1883, %v1884
        %v1886 = vtanh.pop %v1885
        %v1887 = vmul.f32 %v1882, %v1886
        %s1888 = scalar_lea.vmem [#allocation4], 8
        %1889 = vst [vmem:[%s1888] sm:$0xff] %v1887
        %v1890 = vpack.c.bf16 %v1887, %v1887
        %v1891 = vld [vmem:[%s1147] sm:$0xff]
        %v1892 = vld [vmem:[%s1147 + $0x8] sm:$0xff]
        %v1893 = vld [vmem:[%s1147 + $0x10] sm:$0xff]
        %v1894 = vld [vmem:[%s1147 + $0x18] sm:$0xff]
        %1895 = vmatpush.bf16.msra.mxu0 %v1608
        %1896 = vmatpush.bf16.msra.mxu0 %v1604
        %1897 = vmatpush.bf16.msra.mxu0 %v1600
        %1898 = vmatpush.bf16.msra.mxu0 %v1596
        %1899 = vmatpush.bf16.msra.mxu0 %v1592
        %1900 = vmatpush.bf16.msra.mxu0 %v1588
        %1901 = vmatpush.bf16.msra.mxu0 %v1584
        %1902 = vmatpush.bf16.msra.mxu0 %v1580
        %1903 = vmatmul.bf16.gmra.mxu0 %v1890
        %v1904 = vpop.f32.mrf.mxu0
        %v1905 = vadd.f32 %v1891, %v1904
        %v1906 = vpop.f32.mrf.mxu0
        %1907 = vdwg.mxu0
        %1908 = vmatpush.bf16.msra.mxu0 %v1609
        %1909 = vmatpush.bf16.msra.mxu0 %v1605
        %1910 = vmatpush.bf16.msra.mxu0 %v1601
        %1911 = vmatpush.bf16.msra.mxu0 %v1597
        %1912 = vmatpush.bf16.msra.mxu0 %v1593
        %1913 = vmatpush.bf16.msra.mxu0 %v1589
        %1914 = vmatpush.bf16.msra.mxu0 %v1585
        %1915 = vmatpush.bf16.msra.mxu0 %v1581
        %1916 = vmatmul.bf16.gmra.mxu0 %v1890
        %v1917 = vpop.f32.mrf.mxu0
        %v1918 = vadd.f32 %v1892, %v1917
        %v1919 = vpop.f32.mrf.mxu0
        %1920 = vdwg.mxu0
        %1921 = vmatpush.bf16.msra.mxu0 %v1610
        %1922 = vmatpush.bf16.msra.mxu0 %v1606
        %1923 = vmatpush.bf16.msra.mxu0 %v1602
        %1924 = vmatpush.bf16.msra.mxu0 %v1598
        %1925 = vmatpush.bf16.msra.mxu0 %v1594
        %1926 = vmatpush.bf16.msra.mxu0 %v1590
        %1927 = vmatpush.bf16.msra.mxu0 %v1586
        %1928 = vmatpush.bf16.msra.mxu0 %v1582
        %1929 = vmatmul.bf16.gmra.mxu0 %v1890
        %v1930 = vpop.f32.mrf.mxu0
        %v1931 = vadd.f32 %v1893, %v1930
        %v1932 = vpop.f32.mrf.mxu0
        %1933 = vdwg.mxu0
        %1934 = vmatpush.bf16.msra.mxu0 %v1611
        %1935 = vmatpush.bf16.msra.mxu0 %v1607
        %1936 = vmatpush.bf16.msra.mxu0 %v1603
        %1937 = vmatpush.bf16.msra.mxu0 %v1599
        %1938 = vmatpush.bf16.msra.mxu0 %v1595
        %1939 = vmatpush.bf16.msra.mxu0 %v1591
        %1940 = vmatpush.bf16.msra.mxu0 %v1587
        %1941 = vmatpush.bf16.msra.mxu0 %v1583
        %1942 = vmatmul.bf16.gmra.mxu0 %v1890
        %v1943 = vpop.f32.mrf.mxu0
        %v1944 = vadd.f32 %v1894, %v1943
        %v1945 = vpop.f32.mrf.mxu0
        %1946 = vdwg.mxu0
        %v1947 = vadd.f32 %v1905, %v623
        %v1948 = vadd.f32 %v1918, %v624
        %v1949 = vadd.f32 %v1931, %v625
        %v1950 = vadd.f32 %v1944, %v626
        %v1951 = vxor.u32 %v1947, 2147483648
        %v1952 = vmul.f32 %v1951, 1.442695
        %v1953 = vpow.pop %v1952
        %v1954 = vadd.f32 %v1953, 1.0
        %v1955 = vrcp.pop %v1954
        %v1956 = vmul.f32 %v1954, %v1955
        %v1957 = vsub.f32 1.0, %v1956
        %v1958 = vmul.f32 %v1955, %v1957
        %v1959 = vadd.f32 %v1955, %v1958
        %vm1960 = vweird.f32 %v1954
        %vm1961 = vweird.f32 %v1955
        %vm1962 = vmor %vm1960, %vm1961
        %v1963 = vsel %vm1962, %v1955, %v1959
        %v1964 = vand.u32 2147483647, %v1954
        %vm1965 = vcmp.eq.f32.partialorder %v1964, 8.507059e+37
        %v1966 = vand.u32 %v1954, 2147483648
        %v1967 = vor.u32 1.1754944e-38, %v1966
        %v1968 = vsel %vm1965, %v1967, %v1963
        %v1969 = vmul.f32 1.0, %v1968
        %v1970 = vxor.u32 %v1948, 2147483648
        %v1971 = vmul.f32 %v1970, 1.442695
        %v1972 = vpow.pop %v1971
        %v1973 = vadd.f32 %v1972, 1.0
        %v1974 = vrcp.pop %v1973
        %v1975 = vmul.f32 %v1973, %v1974
        %v1976 = vsub.f32 1.0, %v1975
        %v1977 = vmul.f32 %v1974, %v1976
        %v1978 = vadd.f32 %v1974, %v1977
        %vm1979 = vweird.f32 %v1973
        %vm1980 = vweird.f32 %v1974
        %vm1981 = vmor %vm1979, %vm1980
        %v1982 = vsel %vm1981, %v1974, %v1978
        %v1983 = vand.u32 2147483647, %v1973
        %vm1984 = vcmp.eq.f32.partialorder %v1983, 8.507059e+37
        %v1985 = vand.u32 %v1973, 2147483648
        %v1986 = vor.u32 1.1754944e-38, %v1985
        %v1987 = vsel %vm1984, %v1986, %v1982
        %v1988 = vmul.f32 1.0, %v1987
        %v1989 = vtanh.pop %v1949
        %v1990 = vxor.u32 %v1950, 2147483648
        %v1991 = vmul.f32 %v1990, 1.442695
        %v1992 = vpow.pop %v1991
        %v1993 = vadd.f32 %v1992, 1.0
        %v1994 = vrcp.pop %v1993
        %v1995 = vmul.f32 %v1993, %v1994
        %v1996 = vsub.f32 1.0, %v1995
        %v1997 = vmul.f32 %v1994, %v1996
        %v1998 = vadd.f32 %v1994, %v1997
        %vm1999 = vweird.f32 %v1993
        %vm2000 = vweird.f32 %v1994
        %vm2001 = vmor %vm1999, %vm2000
        %v2002 = vsel %vm2001, %v1994, %v1998
        %v2003 = vand.u32 2147483647, %v1993
        %vm2004 = vcmp.eq.f32.partialorder %v2003, 8.507059e+37
        %v2005 = vand.u32 %v1993, 2147483648
        %v2006 = vor.u32 1.1754944e-38, %v2005
        %v2007 = vsel %vm2004, %v2006, %v2002
        %v2008 = vmul.f32 1.0, %v2007
        %v2009 = vmul.f32 %v1988, %v1885
        %v2010 = vmul.f32 %v1969, %v1989
        %v2011 = vadd.f32 %v2009, %v2010
        %v2012 = vtanh.pop %v2011
        %v2013 = vmul.f32 %v2008, %v2012
        %s2014 = scalar_lea.vmem [#allocation4], 16
        %2015 = vst [vmem:[%s2014] sm:$0xff] %v2013
        %v2016 = vpack.c.bf16 %v2013, %v2013
        %v2017 = vld [vmem:[%s1212] sm:$0xff]
        %v2018 = vld [vmem:[%s1212 + $0x8] sm:$0xff]
        %v2019 = vld [vmem:[%s1212 + $0x10] sm:$0xff]
        %v2020 = vld [vmem:[%s1212 + $0x18] sm:$0xff]
        %2021 = vmatpush.bf16.msra.mxu0 %v1608
        %2022 = vmatpush.bf16.msra.mxu0 %v1604
        %2023 = vmatpush.bf16.msra.mxu0 %v1600
        %2024 = vmatpush.bf16.msra.mxu0 %v1596
        %2025 = vmatpush.bf16.msra.mxu0 %v1592
        %2026 = vmatpush.bf16.msra.mxu0 %v1588
        %2027 = vmatpush.bf16.msra.mxu0 %v1584
        %2028 = vmatpush.bf16.msra.mxu0 %v1580
        %2029 = vmatmul.bf16.gmra.mxu0 %v2016
        %v2030 = vpop.f32.mrf.mxu0
        %v2031 = vadd.f32 %v2017, %v2030
        %v2032 = vpop.f32.mrf.mxu0
        %2033 = vdwg.mxu0
        %2034 = vmatpush.bf16.msra.mxu0 %v1609
        %2035 = vmatpush.bf16.msra.mxu0 %v1605
        %2036 = vmatpush.bf16.msra.mxu0 %v1601
        %2037 = vmatpush.bf16.msra.mxu0 %v1597
        %2038 = vmatpush.bf16.msra.mxu0 %v1593
        %2039 = vmatpush.bf16.msra.mxu0 %v1589
        %2040 = vmatpush.bf16.msra.mxu0 %v1585
        %2041 = vmatpush.bf16.msra.mxu0 %v1581
        %2042 = vmatmul.bf16.gmra.mxu0 %v2016
        %v2043 = vpop.f32.mrf.mxu0
        %v2044 = vadd.f32 %v2018, %v2043
        %v2045 = vpop.f32.mrf.mxu0
        %2046 = vdwg.mxu0
        %2047 = vmatpush.bf16.msra.mxu0 %v1610
        %2048 = vmatpush.bf16.msra.mxu0 %v1606
        %2049 = vmatpush.bf16.msra.mxu0 %v1602
        %2050 = vmatpush.bf16.msra.mxu0 %v1598
        %2051 = vmatpush.bf16.msra.mxu0 %v1594
        %2052 = vmatpush.bf16.msra.mxu0 %v1590
        %2053 = vmatpush.bf16.msra.mxu0 %v1586
        %2054 = vmatpush.bf16.msra.mxu0 %v1582
        %2055 = vmatmul.bf16.gmra.mxu0 %v2016
        %v2056 = vpop.f32.mrf.mxu0
        %v2057 = vadd.f32 %v2019, %v2056
        %v2058 = vpop.f32.mrf.mxu0
        %2059 = vdwg.mxu0
        %2060 = vmatpush.bf16.msra.mxu0 %v1611
        %2061 = vmatpush.bf16.msra.mxu0 %v1607
        %2062 = vmatpush.bf16.msra.mxu0 %v1603
        %2063 = vmatpush.bf16.msra.mxu0 %v1599
        %2064 = vmatpush.bf16.msra.mxu0 %v1595
        %2065 = vmatpush.bf16.msra.mxu0 %v1591
        %2066 = vmatpush.bf16.msra.mxu0 %v1587
        %2067 = vmatpush.bf16.msra.mxu0 %v1583
        %2068 = vmatmul.bf16.gmra.mxu0 %v2016
        %v2069 = vpop.f32.mrf.mxu0
        %v2070 = vadd.f32 %v2020, %v2069
        %v2071 = vpop.f32.mrf.mxu0
        %2072 = vdwg.mxu0
        %v2073 = vadd.f32 %v2031, %v623
        %v2074 = vadd.f32 %v2044, %v624
        %v2075 = vadd.f32 %v2057, %v625
        %v2076 = vadd.f32 %v2070, %v626
        %v2077 = vxor.u32 %v2073, 2147483648
        %v2078 = vmul.f32 %v2077, 1.442695
        %v2079 = vpow.pop %v2078
        %v2080 = vadd.f32 %v2079, 1.0
        %v2081 = vrcp.pop %v2080
        %v2082 = vmul.f32 %v2080, %v2081
        %v2083 = vsub.f32 1.0, %v2082
        %v2084 = vmul.f32 %v2081, %v2083
        %v2085 = vadd.f32 %v2081, %v2084
        %vm2086 = vweird.f32 %v2080
        %vm2087 = vweird.f32 %v2081
        %vm2088 = vmor %vm2086, %vm2087
        %v2089 = vsel %vm2088, %v2081, %v2085
        %v2090 = vand.u32 2147483647, %v2080
        %vm2091 = vcmp.eq.f32.partialorder %v2090, 8.507059e+37
        %v2092 = vand.u32 %v2080, 2147483648
        %v2093 = vor.u32 1.1754944e-38, %v2092
        %v2094 = vsel %vm2091, %v2093, %v2089
        %v2095 = vmul.f32 1.0, %v2094
        %v2096 = vxor.u32 %v2074, 2147483648
        %v2097 = vmul.f32 %v2096, 1.442695
        %v2098 = vpow.pop %v2097
        %v2099 = vadd.f32 %v2098, 1.0
        %v2100 = vrcp.pop %v2099
        %v2101 = vmul.f32 %v2099, %v2100
        %v2102 = vsub.f32 1.0, %v2101
        %v2103 = vmul.f32 %v2100, %v2102
        %v2104 = vadd.f32 %v2100, %v2103
        %vm2105 = vweird.f32 %v2099
        %vm2106 = vweird.f32 %v2100
        %vm2107 = vmor %vm2105, %vm2106
        %v2108 = vsel %vm2107, %v2100, %v2104
        %v2109 = vand.u32 2147483647, %v2099
        %vm2110 = vcmp.eq.f32.partialorder %v2109, 8.507059e+37
        %v2111 = vand.u32 %v2099, 2147483648
        %v2112 = vor.u32 1.1754944e-38, %v2111
        %v2113 = vsel %vm2110, %v2112, %v2108
        %v2114 = vmul.f32 1.0, %v2113
        %v2115 = vtanh.pop %v2075
        %v2116 = vxor.u32 %v2076, 2147483648
        %v2117 = vmul.f32 %v2116, 1.442695
        %v2118 = vpow.pop %v2117
        %v2119 = vadd.f32 %v2118, 1.0
        %v2120 = vrcp.pop %v2119
        %v2121 = vmul.f32 %v2119, %v2120
        %v2122 = vsub.f32 1.0, %v2121
        %v2123 = vmul.f32 %v2120, %v2122
        %v2124 = vadd.f32 %v2120, %v2123
        %vm2125 = vweird.f32 %v2119
        %vm2126 = vweird.f32 %v2120
        %vm2127 = vmor %vm2125, %vm2126
        %v2128 = vsel %vm2127, %v2120, %v2124
        %v2129 = vand.u32 2147483647, %v2119
        %vm2130 = vcmp.eq.f32.partialorder %v2129, 8.507059e+37
        %v2131 = vand.u32 %v2119, 2147483648
        %v2132 = vor.u32 1.1754944e-38, %v2131
        %v2133 = vsel %vm2130, %v2132, %v2128
        %v2134 = vmul.f32 1.0, %v2133
        %v2135 = vmul.f32 %v2114, %v2011
        %v2136 = vmul.f32 %v2095, %v2115
        %v2137 = vadd.f32 %v2135, %v2136
        %v2138 = vtanh.pop %v2137
        %v2139 = vmul.f32 %v2134, %v2138
        %s2140 = scalar_lea.vmem [#allocation4], 24
        %2141 = vst [vmem:[%s2140] sm:$0xff] %v2139
        %v2142 = vpack.c.bf16 %v2139, %v2139
        %v2143 = vld [vmem:[%s1277] sm:$0xff]
        %v2144 = vld [vmem:[%s1277 + $0x8] sm:$0xff]
        %v2145 = vld [vmem:[%s1277 + $0x10] sm:$0xff]
        %v2146 = vld [vmem:[%s1277 + $0x18] sm:$0xff]
        %2147 = vmatpush.bf16.msra.mxu0 %v1608
        %2148 = vmatpush.bf16.msra.mxu0 %v1604
        %2149 = vmatpush.bf16.msra.mxu0 %v1600
        %2150 = vmatpush.bf16.msra.mxu0 %v1596
        %2151 = vmatpush.bf16.msra.mxu0 %v1592
        %2152 = vmatpush.bf16.msra.mxu0 %v1588
        %2153 = vmatpush.bf16.msra.mxu0 %v1584
        %2154 = vmatpush.bf16.msra.mxu0 %v1580
        %2155 = vmatmul.bf16.gmra.mxu0 %v2142
        %v2156 = vpop.f32.mrf.mxu0
        %v2157 = vadd.f32 %v2143, %v2156
        %v2158 = vpop.f32.mrf.mxu0
        %2159 = vdwg.mxu0
        %2160 = vmatpush.bf16.msra.mxu0 %v1609
        %2161 = vmatpush.bf16.msra.mxu0 %v1605
        %2162 = vmatpush.bf16.msra.mxu0 %v1601
        %2163 = vmatpush.bf16.msra.mxu0 %v1597
        %2164 = vmatpush.bf16.msra.mxu0 %v1593
        %2165 = vmatpush.bf16.msra.mxu0 %v1589
        %2166 = vmatpush.bf16.msra.mxu0 %v1585
        %2167 = vmatpush.bf16.msra.mxu0 %v1581
        %2168 = vmatmul.bf16.gmra.mxu0 %v2142
        %v2169 = vpop.f32.mrf.mxu0
        %v2170 = vadd.f32 %v2144, %v2169
        %v2171 = vpop.f32.mrf.mxu0
        %2172 = vdwg.mxu0
        %2173 = vmatpush.bf16.msra.mxu0 %v1610
        %2174 = vmatpush.bf16.msra.mxu0 %v1606
        %2175 = vmatpush.bf16.msra.mxu0 %v1602
        %2176 = vmatpush.bf16.msra.mxu0 %v1598
        %2177 = vmatpush.bf16.msra.mxu0 %v1594
        %2178 = vmatpush.bf16.msra.mxu0 %v1590
        %2179 = vmatpush.bf16.msra.mxu0 %v1586
        %2180 = vmatpush.bf16.msra.mxu0 %v1582
        %2181 = vmatmul.bf16.gmra.mxu0 %v2142
        %v2182 = vpop.f32.mrf.mxu0
        %v2183 = vadd.f32 %v2145, %v2182
        %v2184 = vpop.f32.mrf.mxu0
        %2185 = vdwg.mxu0
        %2186 = vmatpush.bf16.msra.mxu0 %v1611
        %2187 = vmatpush.bf16.msra.mxu0 %v1607
        %2188 = vmatpush.bf16.msra.mxu0 %v1603
        %2189 = vmatpush.bf16.msra.mxu0 %v1599
        %2190 = vmatpush.bf16.msra.mxu0 %v1595
        %2191 = vmatpush.bf16.msra.mxu0 %v1591
        %2192 = vmatpush.bf16.msra.mxu0 %v1587
        %2193 = vmatpush.bf16.msra.mxu0 %v1583
        %2194 = vmatmul.bf16.gmra.mxu0 %v2142
        %v2195 = vpop.f32.mrf.mxu0
        %v2196 = vadd.f32 %v2146, %v2195
        %v2197 = vpop.f32.mrf.mxu0
        %2198 = vdwg.mxu0
        %v2199 = vadd.f32 %v2157, %v623
        %v2200 = vadd.f32 %v2170, %v624
        %v2201 = vadd.f32 %v2183, %v625
        %v2202 = vadd.f32 %v2196, %v626
        %v2203 = vxor.u32 %v2199, 2147483648
        %v2204 = vmul.f32 %v2203, 1.442695
        %v2205 = vpow.pop %v2204
        %v2206 = vadd.f32 %v2205, 1.0
        %v2207 = vrcp.pop %v2206
        %v2208 = vmul.f32 %v2206, %v2207
        %v2209 = vsub.f32 1.0, %v2208
        %v2210 = vmul.f32 %v2207, %v2209
        %v2211 = vadd.f32 %v2207, %v2210
        %vm2212 = vweird.f32 %v2206
        %vm2213 = vweird.f32 %v2207
        %vm2214 = vmor %vm2212, %vm2213
        %v2215 = vsel %vm2214, %v2207, %v2211
        %v2216 = vand.u32 2147483647, %v2206
        %vm2217 = vcmp.eq.f32.partialorder %v2216, 8.507059e+37
        %v2218 = vand.u32 %v2206, 2147483648
        %v2219 = vor.u32 1.1754944e-38, %v2218
        %v2220 = vsel %vm2217, %v2219, %v2215
        %v2221 = vmul.f32 1.0, %v2220
        %v2222 = vxor.u32 %v2200, 2147483648
        %v2223 = vmul.f32 %v2222, 1.442695
        %v2224 = vpow.pop %v2223
        %v2225 = vadd.f32 %v2224, 1.0
        %v2226 = vrcp.pop %v2225
        %v2227 = vmul.f32 %v2225, %v2226
        %v2228 = vsub.f32 1.0, %v2227
        %v2229 = vmul.f32 %v2226, %v2228
        %v2230 = vadd.f32 %v2226, %v2229
        %vm2231 = vweird.f32 %v2225
        %vm2232 = vweird.f32 %v2226
        %vm2233 = vmor %vm2231, %vm2232
        %v2234 = vsel %vm2233, %v2226, %v2230
        %v2235 = vand.u32 2147483647, %v2225
        %vm2236 = vcmp.eq.f32.partialorder %v2235, 8.507059e+37
        %v2237 = vand.u32 %v2225, 2147483648
        %v2238 = vor.u32 1.1754944e-38, %v2237
        %v2239 = vsel %vm2236, %v2238, %v2234
        %v2240 = vmul.f32 1.0, %v2239
        %v2241 = vtanh.pop %v2201
        %v2242 = vxor.u32 %v2202, 2147483648
        %v2243 = vmul.f32 %v2242, 1.442695
        %v2244 = vpow.pop %v2243
        %v2245 = vadd.f32 %v2244, 1.0
        %v2246 = vrcp.pop %v2245
        %v2247 = vmul.f32 %v2245, %v2246
        %v2248 = vsub.f32 1.0, %v2247
        %v2249 = vmul.f32 %v2246, %v2248
        %v2250 = vadd.f32 %v2246, %v2249
        %vm2251 = vweird.f32 %v2245
        %vm2252 = vweird.f32 %v2246
        %vm2253 = vmor %vm2251, %vm2252
        %v2254 = vsel %vm2253, %v2246, %v2250
        %v2255 = vand.u32 2147483647, %v2245
        %vm2256 = vcmp.eq.f32.partialorder %v2255, 8.507059e+37
        %v2257 = vand.u32 %v2245, 2147483648
        %v2258 = vor.u32 1.1754944e-38, %v2257
        %v2259 = vsel %vm2256, %v2258, %v2254
        %v2260 = vmul.f32 1.0, %v2259
        %v2261 = vmul.f32 %v2240, %v2137
        %v2262 = vmul.f32 %v2221, %v2241
        %v2263 = vadd.f32 %v2261, %v2262
        %v2264 = vtanh.pop %v2263
        %v2265 = vmul.f32 %v2260, %v2264
        %s2266 = scalar_lea.vmem [#allocation4], 32
        %2267 = vst [vmem:[%s2266] sm:$0xff] %v2265
        %v2268 = vpack.c.bf16 %v2265, %v2265
        %v2269 = vld [vmem:[%s1342] sm:$0xff]
        %v2270 = vld [vmem:[%s1342 + $0x8] sm:$0xff]
        %v2271 = vld [vmem:[%s1342 + $0x10] sm:$0xff]
        %v2272 = vld [vmem:[%s1342 + $0x18] sm:$0xff]
        %2273 = vmatpush.bf16.msra.mxu0 %v1608
        %2274 = vmatpush.bf16.msra.mxu0 %v1604
        %2275 = vmatpush.bf16.msra.mxu0 %v1600
        %2276 = vmatpush.bf16.msra.mxu0 %v1596
        %2277 = vmatpush.bf16.msra.mxu0 %v1592
        %2278 = vmatpush.bf16.msra.mxu0 %v1588
        %2279 = vmatpush.bf16.msra.mxu0 %v1584
        %2280 = vmatpush.bf16.msra.mxu0 %v1580
        %2281 = vmatmul.bf16.gmra.mxu0 %v2268
        %v2282 = vpop.f32.mrf.mxu0
        %v2283 = vadd.f32 %v2269, %v2282
        %v2284 = vpop.f32.mrf.mxu0
        %2285 = vdwg.mxu0
        %2286 = vmatpush.bf16.msra.mxu0 %v1609
        %2287 = vmatpush.bf16.msra.mxu0 %v1605
        %2288 = vmatpush.bf16.msra.mxu0 %v1601
        %2289 = vmatpush.bf16.msra.mxu0 %v1597
        %2290 = vmatpush.bf16.msra.mxu0 %v1593
        %2291 = vmatpush.bf16.msra.mxu0 %v1589
        %2292 = vmatpush.bf16.msra.mxu0 %v1585
        %2293 = vmatpush.bf16.msra.mxu0 %v1581
        %2294 = vmatmul.bf16.gmra.mxu0 %v2268
        %v2295 = vpop.f32.mrf.mxu0
        %v2296 = vadd.f32 %v2270, %v2295
        %v2297 = vpop.f32.mrf.mxu0
        %2298 = vdwg.mxu0
        %2299 = vmatpush.bf16.msra.mxu0 %v1610
        %2300 = vmatpush.bf16.msra.mxu0 %v1606
        %2301 = vmatpush.bf16.msra.mxu0 %v1602
        %2302 = vmatpush.bf16.msra.mxu0 %v1598
        %2303 = vmatpush.bf16.msra.mxu0 %v1594
        %2304 = vmatpush.bf16.msra.mxu0 %v1590
        %2305 = vmatpush.bf16.msra.mxu0 %v1586
        %2306 = vmatpush.bf16.msra.mxu0 %v1582
        %2307 = vmatmul.bf16.gmra.mxu0 %v2268
        %v2308 = vpop.f32.mrf.mxu0
        %v2309 = vadd.f32 %v2271, %v2308
        %v2310 = vpop.f32.mrf.mxu0
        %2311 = vdwg.mxu0
        %2312 = vmatpush.bf16.msra.mxu0 %v1611
        %2313 = vmatpush.bf16.msra.mxu0 %v1607
        %2314 = vmatpush.bf16.msra.mxu0 %v1603
        %2315 = vmatpush.bf16.msra.mxu0 %v1599
        %2316 = vmatpush.bf16.msra.mxu0 %v1595
        %2317 = vmatpush.bf16.msra.mxu0 %v1591
        %2318 = vmatpush.bf16.msra.mxu0 %v1587
        %2319 = vmatpush.bf16.msra.mxu0 %v1583
        %2320 = vmatmul.bf16.gmra.mxu0 %v2268
        %v2321 = vpop.f32.mrf.mxu0
        %v2322 = vadd.f32 %v2272, %v2321
        %v2323 = vpop.f32.mrf.mxu0
        %2324 = vdwg.mxu0
        %v2325 = vadd.f32 %v2283, %v623
        %v2326 = vadd.f32 %v2296, %v624
        %v2327 = vadd.f32 %v2309, %v625
        %v2328 = vadd.f32 %v2322, %v626
        %v2329 = vxor.u32 %v2325, 2147483648
        %v2330 = vmul.f32 %v2329, 1.442695
        %v2331 = vpow.pop %v2330
        %v2332 = vadd.f32 %v2331, 1.0
        %v2333 = vrcp.pop %v2332
        %v2334 = vmul.f32 %v2332, %v2333
        %v2335 = vsub.f32 1.0, %v2334
        %v2336 = vmul.f32 %v2333, %v2335
        %v2337 = vadd.f32 %v2333, %v2336
        %vm2338 = vweird.f32 %v2332
        %vm2339 = vweird.f32 %v2333
        %vm2340 = vmor %vm2338, %vm2339
        %v2341 = vsel %vm2340, %v2333, %v2337
        %v2342 = vand.u32 2147483647, %v2332
        %vm2343 = vcmp.eq.f32.partialorder %v2342, 8.507059e+37
        %v2344 = vand.u32 %v2332, 2147483648
        %v2345 = vor.u32 1.1754944e-38, %v2344
        %v2346 = vsel %vm2343, %v2345, %v2341
        %v2347 = vmul.f32 1.0, %v2346
        %v2348 = vxor.u32 %v2326, 2147483648
        %v2349 = vmul.f32 %v2348, 1.442695
        %v2350 = vpow.pop %v2349
        %v2351 = vadd.f32 %v2350, 1.0
        %v2352 = vrcp.pop %v2351
        %v2353 = vmul.f32 %v2351, %v2352
        %v2354 = vsub.f32 1.0, %v2353
        %v2355 = vmul.f32 %v2352, %v2354
        %v2356 = vadd.f32 %v2352, %v2355
        %vm2357 = vweird.f32 %v2351
        %vm2358 = vweird.f32 %v2352
        %vm2359 = vmor %vm2357, %vm2358
        %v2360 = vsel %vm2359, %v2352, %v2356
        %v2361 = vand.u32 2147483647, %v2351
        %vm2362 = vcmp.eq.f32.partialorder %v2361, 8.507059e+37
        %v2363 = vand.u32 %v2351, 2147483648
        %v2364 = vor.u32 1.1754944e-38, %v2363
        %v2365 = vsel %vm2362, %v2364, %v2360
        %v2366 = vmul.f32 1.0, %v2365
        %v2367 = vtanh.pop %v2327
        %v2368 = vxor.u32 %v2328, 2147483648
        %v2369 = vmul.f32 %v2368, 1.442695
        %v2370 = vpow.pop %v2369
        %v2371 = vadd.f32 %v2370, 1.0
        %v2372 = vrcp.pop %v2371
        %v2373 = vmul.f32 %v2371, %v2372
        %v2374 = vsub.f32 1.0, %v2373
        %v2375 = vmul.f32 %v2372, %v2374
        %v2376 = vadd.f32 %v2372, %v2375
        %vm2377 = vweird.f32 %v2371
        %vm2378 = vweird.f32 %v2372
        %vm2379 = vmor %vm2377, %vm2378
        %v2380 = vsel %vm2379, %v2372, %v2376
        %v2381 = vand.u32 2147483647, %v2371
        %vm2382 = vcmp.eq.f32.partialorder %v2381, 8.507059e+37
        %v2383 = vand.u32 %v2371, 2147483648
        %v2384 = vor.u32 1.1754944e-38, %v2383
        %v2385 = vsel %vm2382, %v2384, %v2380
        %v2386 = vmul.f32 1.0, %v2385
        %v2387 = vmul.f32 %v2366, %v2263
        %v2388 = vmul.f32 %v2347, %v2367
        %v2389 = vadd.f32 %v2387, %v2388
        %v2390 = vtanh.pop %v2389
        %v2391 = vmul.f32 %v2386, %v2390
        %s2392 = scalar_lea.vmem [#allocation4], 40
        %2393 = vst [vmem:[%s2392] sm:$0xff] %v2391
        %v2394 = vpack.c.bf16 %v2391, %v2391
        %v2395 = vld [vmem:[%s1407] sm:$0xff]
        %v2396 = vld [vmem:[%s1407 + $0x8] sm:$0xff]
        %v2397 = vld [vmem:[%s1407 + $0x10] sm:$0xff]
        %v2398 = vld [vmem:[%s1407 + $0x18] sm:$0xff]
        %2399 = vmatpush.bf16.msra.mxu0 %v1608
        %2400 = vmatpush.bf16.msra.mxu0 %v1604
        %2401 = vmatpush.bf16.msra.mxu0 %v1600
        %2402 = vmatpush.bf16.msra.mxu0 %v1596
        %2403 = vmatpush.bf16.msra.mxu0 %v1592
        %2404 = vmatpush.bf16.msra.mxu0 %v1588
        %2405 = vmatpush.bf16.msra.mxu0 %v1584
        %2406 = vmatpush.bf16.msra.mxu0 %v1580
        %2407 = vmatmul.bf16.gmra.mxu0 %v2394
        %v2408 = vpop.f32.mrf.mxu0
        %v2409 = vadd.f32 %v2395, %v2408
        %v2410 = vpop.f32.mrf.mxu0
        %2411 = vdwg.mxu0
        %2412 = vmatpush.bf16.msra.mxu0 %v1609
        %2413 = vmatpush.bf16.msra.mxu0 %v1605
        %2414 = vmatpush.bf16.msra.mxu0 %v1601
        %2415 = vmatpush.bf16.msra.mxu0 %v1597
        %2416 = vmatpush.bf16.msra.mxu0 %v1593
        %2417 = vmatpush.bf16.msra.mxu0 %v1589
        %2418 = vmatpush.bf16.msra.mxu0 %v1585
        %2419 = vmatpush.bf16.msra.mxu0 %v1581
        %2420 = vmatmul.bf16.gmra.mxu0 %v2394
        %v2421 = vpop.f32.mrf.mxu0
        %v2422 = vadd.f32 %v2396, %v2421
        %v2423 = vpop.f32.mrf.mxu0
        %2424 = vdwg.mxu0
        %2425 = vmatpush.bf16.msra.mxu0 %v1610
        %2426 = vmatpush.bf16.msra.mxu0 %v1606
        %2427 = vmatpush.bf16.msra.mxu0 %v1602
        %2428 = vmatpush.bf16.msra.mxu0 %v1598
        %2429 = vmatpush.bf16.msra.mxu0 %v1594
        %2430 = vmatpush.bf16.msra.mxu0 %v1590
        %2431 = vmatpush.bf16.msra.mxu0 %v1586
        %2432 = vmatpush.bf16.msra.mxu0 %v1582
        %2433 = vmatmul.bf16.gmra.mxu0 %v2394
        %v2434 = vpop.f32.mrf.mxu0
        %v2435 = vadd.f32 %v2397, %v2434
        %v2436 = vpop.f32.mrf.mxu0
        %2437 = vdwg.mxu0
        %2438 = vmatpush.bf16.msra.mxu0 %v1611
        %2439 = vmatpush.bf16.msra.mxu0 %v1607
        %2440 = vmatpush.bf16.msra.mxu0 %v1603
        %2441 = vmatpush.bf16.msra.mxu0 %v1599
        %2442 = vmatpush.bf16.msra.mxu0 %v1595
        %2443 = vmatpush.bf16.msra.mxu0 %v1591
        %2444 = vmatpush.bf16.msra.mxu0 %v1587
        %2445 = vmatpush.bf16.msra.mxu0 %v1583
        %2446 = vmatmul.bf16.gmra.mxu0 %v2394
        %v2447 = vpop.f32.mrf.mxu0
        %v2448 = vadd.f32 %v2398, %v2447
        %v2449 = vpop.f32.mrf.mxu0
        %2450 = vdwg.mxu0
        %v2451 = vadd.f32 %v2409, %v623
        %v2452 = vadd.f32 %v2422, %v624
        %v2453 = vadd.f32 %v2435, %v625
        %v2454 = vadd.f32 %v2448, %v626
        %v2455 = vxor.u32 %v2451, 2147483648
        %v2456 = vmul.f32 %v2455, 1.442695
        %v2457 = vpow.pop %v2456
        %v2458 = vadd.f32 %v2457, 1.0
        %v2459 = vrcp.pop %v2458
        %v2460 = vmul.f32 %v2458, %v2459
        %v2461 = vsub.f32 1.0, %v2460
        %v2462 = vmul.f32 %v2459, %v2461
        %v2463 = vadd.f32 %v2459, %v2462
        %vm2464 = vweird.f32 %v2458
        %vm2465 = vweird.f32 %v2459
        %vm2466 = vmor %vm2464, %vm2465
        %v2467 = vsel %vm2466, %v2459, %v2463
        %v2468 = vand.u32 2147483647, %v2458
        %vm2469 = vcmp.eq.f32.partialorder %v2468, 8.507059e+37
        %v2470 = vand.u32 %v2458, 2147483648
        %v2471 = vor.u32 1.1754944e-38, %v2470
        %v2472 = vsel %vm2469, %v2471, %v2467
        %v2473 = vmul.f32 1.0, %v2472
        %v2474 = vxor.u32 %v2452, 2147483648
        %v2475 = vmul.f32 %v2474, 1.442695
        %v2476 = vpow.pop %v2475
        %v2477 = vadd.f32 %v2476, 1.0
        %v2478 = vrcp.pop %v2477
        %v2479 = vmul.f32 %v2477, %v2478
        %v2480 = vsub.f32 1.0, %v2479
        %v2481 = vmul.f32 %v2478, %v2480
        %v2482 = vadd.f32 %v2478, %v2481
        %vm2483 = vweird.f32 %v2477
        %vm2484 = vweird.f32 %v2478
        %vm2485 = vmor %vm2483, %vm2484
        %v2486 = vsel %vm2485, %v2478, %v2482
        %v2487 = vand.u32 2147483647, %v2477
        %vm2488 = vcmp.eq.f32.partialorder %v2487, 8.507059e+37
        %v2489 = vand.u32 %v2477, 2147483648
        %v2490 = vor.u32 1.1754944e-38, %v2489
        %v2491 = vsel %vm2488, %v2490, %v2486
        %v2492 = vmul.f32 1.0, %v2491
        %v2493 = vtanh.pop %v2453
        %v2494 = vxor.u32 %v2454, 2147483648
        %v2495 = vmul.f32 %v2494, 1.442695
        %v2496 = vpow.pop %v2495
        %v2497 = vadd.f32 %v2496, 1.0
        %v2498 = vrcp.pop %v2497
        %v2499 = vmul.f32 %v2497, %v2498
        %v2500 = vsub.f32 1.0, %v2499
        %v2501 = vmul.f32 %v2498, %v2500
        %v2502 = vadd.f32 %v2498, %v2501
        %vm2503 = vweird.f32 %v2497
        %vm2504 = vweird.f32 %v2498
        %vm2505 = vmor %vm2503, %vm2504
        %v2506 = vsel %vm2505, %v2498, %v2502
        %v2507 = vand.u32 2147483647, %v2497
        %vm2508 = vcmp.eq.f32.partialorder %v2507, 8.507059e+37
        %v2509 = vand.u32 %v2497, 2147483648
        %v2510 = vor.u32 1.1754944e-38, %v2509
        %v2511 = vsel %vm2508, %v2510, %v2506
        %v2512 = vmul.f32 1.0, %v2511
        %v2513 = vmul.f32 %v2492, %v2389
        %v2514 = vmul.f32 %v2473, %v2493
        %v2515 = vadd.f32 %v2513, %v2514
        %v2516 = vtanh.pop %v2515
        %v2517 = vmul.f32 %v2512, %v2516
        %s2518 = scalar_lea.vmem [#allocation4], 48
        %2519 = vst [vmem:[%s2518] sm:$0xff] %v2517
        %v2520 = vpack.c.bf16 %v2517, %v2517
        %v2521 = vld [vmem:[%s1472] sm:$0xff]
        %v2522 = vld [vmem:[%s1472 + $0x8] sm:$0xff]
        %v2523 = vld [vmem:[%s1472 + $0x10] sm:$0xff]
        %v2524 = vld [vmem:[%s1472 + $0x18] sm:$0xff]
        %2525 = vmatpush.bf16.msra.mxu0 %v1608
        %2526 = vmatpush.bf16.msra.mxu0 %v1604
        %2527 = vmatpush.bf16.msra.mxu0 %v1600
        %2528 = vmatpush.bf16.msra.mxu0 %v1596
        %2529 = vmatpush.bf16.msra.mxu0 %v1592
        %2530 = vmatpush.bf16.msra.mxu0 %v1588
        %2531 = vmatpush.bf16.msra.mxu0 %v1584
        %2532 = vmatpush.bf16.msra.mxu0 %v1580
        %2533 = vmatmul.bf16.gmra.mxu0 %v2520
        %v2534 = vpop.f32.mrf.mxu0
        %v2535 = vadd.f32 %v2521, %v2534
        %v2536 = vpop.f32.mrf.mxu0
        %2537 = vdwg.mxu0
        %2538 = vmatpush.bf16.msra.mxu0 %v1609
        %2539 = vmatpush.bf16.msra.mxu0 %v1605
        %2540 = vmatpush.bf16.msra.mxu0 %v1601
        %2541 = vmatpush.bf16.msra.mxu0 %v1597
        %2542 = vmatpush.bf16.msra.mxu0 %v1593
        %2543 = vmatpush.bf16.msra.mxu0 %v1589
        %2544 = vmatpush.bf16.msra.mxu0 %v1585
        %2545 = vmatpush.bf16.msra.mxu0 %v1581
        %2546 = vmatmul.bf16.gmra.mxu0 %v2520
        %v2547 = vpop.f32.mrf.mxu0
        %v2548 = vadd.f32 %v2522, %v2547
        %v2549 = vpop.f32.mrf.mxu0
        %2550 = vdwg.mxu0
        %2551 = vmatpush.bf16.msra.mxu0 %v1610
        %2552 = vmatpush.bf16.msra.mxu0 %v1606
        %2553 = vmatpush.bf16.msra.mxu0 %v1602
        %2554 = vmatpush.bf16.msra.mxu0 %v1598
        %2555 = vmatpush.bf16.msra.mxu0 %v1594
        %2556 = vmatpush.bf16.msra.mxu0 %v1590
        %2557 = vmatpush.bf16.msra.mxu0 %v1586
        %2558 = vmatpush.bf16.msra.mxu0 %v1582
        %2559 = vmatmul.bf16.gmra.mxu0 %v2520
        %v2560 = vpop.f32.mrf.mxu0
        %v2561 = vadd.f32 %v2523, %v2560
        %v2562 = vpop.f32.mrf.mxu0
        %2563 = vdwg.mxu0
        %2564 = vmatpush.bf16.msra.mxu0 %v1611
        %2565 = vmatpush.bf16.msra.mxu0 %v1607
        %2566 = vmatpush.bf16.msra.mxu0 %v1603
        %2567 = vmatpush.bf16.msra.mxu0 %v1599
        %2568 = vmatpush.bf16.msra.mxu0 %v1595
        %2569 = vmatpush.bf16.msra.mxu0 %v1591
        %2570 = vmatpush.bf16.msra.mxu0 %v1587
        %2571 = vmatpush.bf16.msra.mxu0 %v1583
        %2572 = vmatmul.bf16.gmra.mxu0 %v2520
        %v2573 = vpop.f32.mrf.mxu0
        %v2574 = vadd.f32 %v2524, %v2573
        %v2575 = vpop.f32.mrf.mxu0
        %2576 = vdwg.mxu0
        %v2577 = vadd.f32 %v2535, %v623
        %v2578 = vadd.f32 %v2548, %v624
        %v2579 = vadd.f32 %v2561, %v625
        %v2580 = vadd.f32 %v2574, %v626
        %v2581 = vxor.u32 %v2577, 2147483648
        %v2582 = vmul.f32 %v2581, 1.442695
        %v2583 = vpow.pop %v2582
        %v2584 = vadd.f32 %v2583, 1.0
        %v2585 = vrcp.pop %v2584
        %v2586 = vmul.f32 %v2584, %v2585
        %v2587 = vsub.f32 1.0, %v2586
        %v2588 = vmul.f32 %v2585, %v2587
        %v2589 = vadd.f32 %v2585, %v2588
        %vm2590 = vweird.f32 %v2584
        %vm2591 = vweird.f32 %v2585
        %vm2592 = vmor %vm2590, %vm2591
        %v2593 = vsel %vm2592, %v2585, %v2589
        %v2594 = vand.u32 2147483647, %v2584
        %vm2595 = vcmp.eq.f32.partialorder %v2594, 8.507059e+37
        %v2596 = vand.u32 %v2584, 2147483648
        %v2597 = vor.u32 1.1754944e-38, %v2596
        %v2598 = vsel %vm2595, %v2597, %v2593
        %v2599 = vmul.f32 1.0, %v2598
        %v2600 = vxor.u32 %v2578, 2147483648
        %v2601 = vmul.f32 %v2600, 1.442695
        %v2602 = vpow.pop %v2601
        %v2603 = vadd.f32 %v2602, 1.0
        %v2604 = vrcp.pop %v2603
        %v2605 = vmul.f32 %v2603, %v2604
        %v2606 = vsub.f32 1.0, %v2605
        %v2607 = vmul.f32 %v2604, %v2606
        %v2608 = vadd.f32 %v2604, %v2607
        %vm2609 = vweird.f32 %v2603
        %vm2610 = vweird.f32 %v2604
        %vm2611 = vmor %vm2609, %vm2610
        %v2612 = vsel %vm2611, %v2604, %v2608
        %v2613 = vand.u32 2147483647, %v2603
        %vm2614 = vcmp.eq.f32.partialorder %v2613, 8.507059e+37
        %v2615 = vand.u32 %v2603, 2147483648
        %v2616 = vor.u32 1.1754944e-38, %v2615
        %v2617 = vsel %vm2614, %v2616, %v2612
        %v2618 = vmul.f32 1.0, %v2617
        %v2619 = vtanh.pop %v2579
        %v2620 = vxor.u32 %v2580, 2147483648
        %v2621 = vmul.f32 %v2620, 1.442695
        %v2622 = vpow.pop %v2621
        %v2623 = vadd.f32 %v2622, 1.0
        %v2624 = vrcp.pop %v2623
        %v2625 = vmul.f32 %v2623, %v2624
        %v2626 = vsub.f32 1.0, %v2625
        %v2627 = vmul.f32 %v2624, %v2626
        %v2628 = vadd.f32 %v2624, %v2627
        %vm2629 = vweird.f32 %v2623
        %vm2630 = vweird.f32 %v2624
        %vm2631 = vmor %vm2629, %vm2630
        %v2632 = vsel %vm2631, %v2624, %v2628
        %v2633 = vand.u32 2147483647, %v2623
        %vm2634 = vcmp.eq.f32.partialorder %v2633, 8.507059e+37
        %v2635 = vand.u32 %v2623, 2147483648
        %v2636 = vor.u32 1.1754944e-38, %v2635
        %v2637 = vsel %vm2634, %v2636, %v2632
        %v2638 = vmul.f32 1.0, %v2637
        %v2639 = vmul.f32 %v2618, %v2515
        %v2640 = vmul.f32 %v2599, %v2619
        %v2641 = vadd.f32 %v2639, %v2640
        %v2642 = vtanh.pop %v2641
        %v2643 = vmul.f32 %v2638, %v2642
        %s2644 = scalar_lea.vmem [#allocation4], 56
        %2645 = vst [vmem:[%s2644] sm:$0xff] %v2643
        %2646 = vst [vmem:[#allocation2] sm:$0xff] %v2643
        %2647 = vst [vmem:[#allocation3] sm:$0xff] %v2641
        %v2648 = vld [vmem:[#allocation14] sm:$0xff]
        %v2649 = vld [vmem:[#allocation14 + $0x8] sm:$0xff]
        %v2650 = vld [vmem:[#allocation14 + $0x10] sm:$0xff]
        %v2651 = vld [vmem:[#allocation14 + $0x18] sm:$0xff]
        %v2652 = vld [vmem:[#allocation14 + $0x20] sm:$0xff]
        %v2653 = vld [vmem:[#allocation14 + $0x28] sm:$0xff]
        %v2654 = vld [vmem:[#allocation14 + $0x30] sm:$0xff]
        %v2655 = vld [vmem:[#allocation14 + $0x38] sm:$0xff]
        %v2656 = vld [vmem:[#allocation14 + $0x40] sm:$0xff]
        %v2657 = vld [vmem:[#allocation14 + $0x48] sm:$0xff]
        %v2658 = vld [vmem:[#allocation14 + $0x50] sm:$0xff]
        %v2659 = vld [vmem:[#allocation14 + $0x58] sm:$0xff]
        %v2660 = vld [vmem:[#allocation14 + $0x60] sm:$0xff]
        %v2661 = vld [vmem:[#allocation14 + $0x68] sm:$0xff]
        %v2662 = vld [vmem:[#allocation14 + $0x70] sm:$0xff]
        %v2663 = vld [vmem:[#allocation14 + $0x78] sm:$0xff]
        %v2664 = vld [vmem:[#allocation14 + $0x80] sm:$0xff]
        %v2665 = vld [vmem:[#allocation14 + $0x88] sm:$0xff]
        %v2666 = vld [vmem:[#allocation14 + $0x90] sm:$0xff]
        %v2667 = vld [vmem:[#allocation14 + $0x98] sm:$0xff]
        %v2668 = vld [vmem:[#allocation14 + $0xa0] sm:$0xff]
        %v2669 = vld [vmem:[#allocation14 + $0xa8] sm:$0xff]
        %v2670 = vld [vmem:[#allocation14 + $0xb0] sm:$0xff]
        %v2671 = vld [vmem:[#allocation14 + $0xb8] sm:$0xff]
        %v2672 = vld [vmem:[#allocation14 + $0xc0] sm:$0xff]
        %v2673 = vld [vmem:[#allocation14 + $0xc8] sm:$0xff]
        %v2674 = vld [vmem:[#allocation14 + $0xd0] sm:$0xff]
        %v2675 = vld [vmem:[#allocation14 + $0xd8] sm:$0xff]
        %v2676 = vld [vmem:[#allocation14 + $0xe0] sm:$0xff]
        %v2677 = vld [vmem:[#allocation14 + $0xe8] sm:$0xff]
        %v2678 = vld [vmem:[#allocation14 + $0xf0] sm:$0xff]
        %v2679 = vld [vmem:[#allocation14 + $0xf8] sm:$0xff]
        %v2680 = vld [vmem:[#allocation15] sm:$0xff]
        %v2681 = vld [vmem:[#allocation15 + $0x8] sm:$0xff]
        %v2682 = vld [vmem:[#allocation15 + $0x10] sm:$0xff]
        %v2683 = vld [vmem:[#allocation15 + $0x18] sm:$0xff]
        %v2684 = vld [vmem:[#allocation15 + $0x20] sm:$0xff]
        %v2685 = vld [vmem:[#allocation15 + $0x28] sm:$0xff]
        %v2686 = vld [vmem:[#allocation15 + $0x30] sm:$0xff]
        %v2687 = vld [vmem:[#allocation15 + $0x38] sm:$0xff]
        %v2688 = vld [vmem:[#allocation15 + $0x40] sm:$0xff]
        %v2689 = vld [vmem:[#allocation15 + $0x48] sm:$0xff]
        %v2690 = vld [vmem:[#allocation15 + $0x50] sm:$0xff]
        %v2691 = vld [vmem:[#allocation15 + $0x58] sm:$0xff]
        %v2692 = vld [vmem:[#allocation15 + $0x60] sm:$0xff]
        %v2693 = vld [vmem:[#allocation15 + $0x68] sm:$0xff]
        %v2694 = vld [vmem:[#allocation15 + $0x70] sm:$0xff]
        %v2695 = vld [vmem:[#allocation15 + $0x78] sm:$0xff]
        %v2696 = vld [vmem:[#allocation15 + $0x80] sm:$0xff]
        %v2697 = vld [vmem:[#allocation15 + $0x88] sm:$0xff]
        %v2698 = vld [vmem:[#allocation15 + $0x90] sm:$0xff]
        %v2699 = vld [vmem:[#allocation15 + $0x98] sm:$0xff]
        %v2700 = vld [vmem:[#allocation15 + $0xa0] sm:$0xff]
        %v2701 = vld [vmem:[#allocation15 + $0xa8] sm:$0xff]
        %v2702 = vld [vmem:[#allocation15 + $0xb0] sm:$0xff]
        %v2703 = vld [vmem:[#allocation15 + $0xb8] sm:$0xff]
        %v2704 = vld [vmem:[#allocation15 + $0xc0] sm:$0xff]
        %v2705 = vld [vmem:[#allocation15 + $0xc8] sm:$0xff]
        %v2706 = vld [vmem:[#allocation15 + $0xd0] sm:$0xff]
        %v2707 = vld [vmem:[#allocation15 + $0xd8] sm:$0xff]
        %v2708 = vld [vmem:[#allocation15 + $0xe0] sm:$0xff]
        %v2709 = vld [vmem:[#allocation15 + $0xe8] sm:$0xff]
        %v2710 = vld [vmem:[#allocation15 + $0xf0] sm:$0xff]
        %v2711 = vld [vmem:[#allocation15 + $0xf8] sm:$0xff]
        %v2712 = vld [vmem:[#allocation17] sm:$0xf]
        %v2714 = vperm.slane %v2712, 0
        %v2715 = vperm.slane %v2712, 1
        %v2716 = vperm.slane %v2712, 2
        %v2717 = vperm.slane %v2712, 3
        %v2722 = vld [vmem:[#allocation4] sm:$0xff]
        %v2723 = vld [vmem:[#allocation4 + $0x8] sm:$0xff]
        %v2724 = vld [vmem:[#allocation4 + $0x10] sm:$0xff]
        %v2725 = vld [vmem:[#allocation4 + $0x18] sm:$0xff]
        %v2726 = vld [vmem:[#allocation4 + $0x20] sm:$0xff]
        %v2727 = vld [vmem:[#allocation4 + $0x28] sm:$0xff]
        %v2728 = vld [vmem:[#allocation4 + $0x30] sm:$0xff]
        %v2729 = vld [vmem:[#allocation4 + $0x38] sm:$0xff]
        %v2730 = vpack.c.bf16 %v2723, %v2722
        %v2731 = vpack.c.bf16 %v2725, %v2724
        %v2732 = vpack.c.bf16 %v2727, %v2726
        %v2733 = vpack.c.bf16 %v2729, %v2728
        %v2766 = vunpack.c.l.b16 %v2648
        %v2767 = vunpack.c.h.b16 %v2648
        %v2768 = vunpack.c.l.b16 %v2649
        %v2769 = vunpack.c.h.b16 %v2649
        %v2770 = vunpack.c.l.b16 %v2650
        %v2771 = vunpack.c.h.b16 %v2650
        %v2772 = vunpack.c.l.b16 %v2651
        %v2773 = vunpack.c.h.b16 %v2651
        %v2774 = vunpack.c.l.b16 %v2652
        %v2775 = vunpack.c.h.b16 %v2652
        %v2776 = vunpack.c.l.b16 %v2653
        %v2777 = vunpack.c.h.b16 %v2653
        %v2778 = vunpack.c.l.b16 %v2654
        %v2779 = vunpack.c.h.b16 %v2654
        %v2780 = vunpack.c.l.b16 %v2655
        %v2781 = vunpack.c.h.b16 %v2655
        %v2782 = vunpack.c.l.b16 %v2656
        %v2783 = vunpack.c.h.b16 %v2656
        %v2784 = vunpack.c.l.b16 %v2657
        %v2785 = vunpack.c.h.b16 %v2657
        %v2786 = vunpack.c.l.b16 %v2658
        %v2787 = vunpack.c.h.b16 %v2658
        %v2788 = vunpack.c.l.b16 %v2659
        %v2789 = vunpack.c.h.b16 %v2659
        %v2790 = vunpack.c.l.b16 %v2660
        %v2791 = vunpack.c.h.b16 %v2660
        %v2792 = vunpack.c.l.b16 %v2661
        %v2793 = vunpack.c.h.b16 %v2661
        %v2794 = vunpack.c.l.b16 %v2662
        %v2795 = vunpack.c.h.b16 %v2662
        %v2796 = vunpack.c.l.b16 %v2663
        %v2797 = vunpack.c.h.b16 %v2663
        %v2798 = vunpack.c.l.b16 %v2664
        %v2799 = vunpack.c.h.b16 %v2664
        %v2800 = vunpack.c.l.b16 %v2665
        %v2801 = vunpack.c.h.b16 %v2665
        %v2802 = vunpack.c.l.b16 %v2666
        %v2803 = vunpack.c.h.b16 %v2666
        %v2804 = vunpack.c.l.b16 %v2667
        %v2805 = vunpack.c.h.b16 %v2667
        %v2806 = vunpack.c.l.b16 %v2668
        %v2807 = vunpack.c.h.b16 %v2668
        %v2808 = vunpack.c.l.b16 %v2669
        %v2809 = vunpack.c.h.b16 %v2669
        %v2810 = vunpack.c.l.b16 %v2670
        %v2811 = vunpack.c.h.b16 %v2670
        %v2812 = vunpack.c.l.b16 %v2671
        %v2813 = vunpack.c.h.b16 %v2671
        %v2814 = vunpack.c.l.b16 %v2672
        %v2815 = vunpack.c.h.b16 %v2672
        %v2816 = vunpack.c.l.b16 %v2673
        %v2817 = vunpack.c.h.b16 %v2673
        %v2818 = vunpack.c.l.b16 %v2674
        %v2819 = vunpack.c.h.b16 %v2674
        %v2820 = vunpack.c.l.b16 %v2675
        %v2821 = vunpack.c.h.b16 %v2675
        %v2822 = vunpack.c.l.b16 %v2676
        %v2823 = vunpack.c.h.b16 %v2676
        %v2824 = vunpack.c.l.b16 %v2677
        %v2825 = vunpack.c.h.b16 %v2677
        %v2826 = vunpack.c.l.b16 %v2678
        %v2827 = vunpack.c.h.b16 %v2678
        %v2828 = vunpack.c.l.b16 %v2679
        %v2829 = vunpack.c.h.b16 %v2679
        %v2830 = vpack.c.b16 %v2770, %v2766
        %v2831 = vpack.c.b16 %v2771, %v2767
        %v2832 = vpack.c.b16 %v2772, %v2768
        %v2833 = vpack.c.b16 %v2773, %v2769
        %v2834 = vpack.c.b16 %v2778, %v2774
        %v2835 = vpack.c.b16 %v2779, %v2775
        %v2836 = vpack.c.b16 %v2780, %v2776
        %v2837 = vpack.c.b16 %v2781, %v2777
        %v2838 = vpack.c.b16 %v2786, %v2782
        %v2839 = vpack.c.b16 %v2787, %v2783
        %v2840 = vpack.c.b16 %v2788, %v2784
        %v2841 = vpack.c.b16 %v2789, %v2785
        %v2842 = vpack.c.b16 %v2794, %v2790
        %v2843 = vpack.c.b16 %v2795, %v2791
        %v2844 = vpack.c.b16 %v2796, %v2792
        %v2845 = vpack.c.b16 %v2797, %v2793
        %v2846 = vpack.c.b16 %v2802, %v2798
        %v2847 = vpack.c.b16 %v2803, %v2799
        %v2848 = vpack.c.b16 %v2804, %v2800
        %v2849 = vpack.c.b16 %v2805, %v2801
        %v2850 = vpack.c.b16 %v2810, %v2806
        %v2851 = vpack.c.b16 %v2811, %v2807
        %v2852 = vpack.c.b16 %v2812, %v2808
        %v2853 = vpack.c.b16 %v2813, %v2809
        %v2854 = vpack.c.b16 %v2818, %v2814
        %v2855 = vpack.c.b16 %v2819, %v2815
        %v2856 = vpack.c.b16 %v2820, %v2816
        %v2857 = vpack.c.b16 %v2821, %v2817
        %v2858 = vpack.c.b16 %v2826, %v2822
        %v2859 = vpack.c.b16 %v2827, %v2823
        %v2860 = vpack.c.b16 %v2828, %v2824
        %v2861 = vpack.c.b16 %v2829, %v2825
        %2894 = vmatpush.bf16.msra.mxu0 %v2858
        %2895 = vmatpush.bf16.msra.mxu0 %v2854
        %2896 = vmatpush.bf16.msra.mxu0 %v2850
        %2897 = vmatpush.bf16.msra.mxu0 %v2846
        %2898 = vmatpush.bf16.msra.mxu0 %v2842
        %2899 = vmatpush.bf16.msra.mxu0 %v2838
        %2900 = vmatpush.bf16.msra.mxu0 %v2834
        %2901 = vmatpush.bf16.msra.mxu0 %v2830
        %2902 = vmatmul.bf16.gmra.mxu0 %v2730
        %v2903 = vpop.f32.mrf.mxu0
        %v2904 = vadd.f32 0.0, %v2903
        %v2905 = vpop.f32.mrf.mxu0
        %v2906 = vadd.f32 0.0, %v2905
        %2907 = vmatmul.bf16.gmra.mxu0 %v2731
        %v2908 = vpop.f32.mrf.mxu0
        %v2909 = vadd.f32 0.0, %v2908
        %v2910 = vpop.f32.mrf.mxu0
        %v2911 = vadd.f32 0.0, %v2910
        %2912 = vmatmul.bf16.gmra.mxu0 %v2732
        %v2913 = vpop.f32.mrf.mxu0
        %v2914 = vadd.f32 0.0, %v2913
        %v2915 = vpop.f32.mrf.mxu0
        %v2916 = vadd.f32 0.0, %v2915
        %2917 = vmatmul.bf16.gmra.mxu0 %v2733
        %v2918 = vpop.f32.mrf.mxu0
        %v2919 = vadd.f32 0.0, %v2918
        %v2920 = vpop.f32.mrf.mxu0
        %v2921 = vadd.f32 0.0, %v2920
        %2922 = vdwg.mxu0
        %2923 = vmatpush.bf16.msra.mxu0 %v2859
        %2924 = vmatpush.bf16.msra.mxu0 %v2855
        %2925 = vmatpush.bf16.msra.mxu0 %v2851
        %2926 = vmatpush.bf16.msra.mxu0 %v2847
        %2927 = vmatpush.bf16.msra.mxu0 %v2843
        %2928 = vmatpush.bf16.msra.mxu0 %v2839
        %2929 = vmatpush.bf16.msra.mxu0 %v2835
        %2930 = vmatpush.bf16.msra.mxu0 %v2831
        %2931 = vmatmul.bf16.gmra.mxu0 %v2730
        %v2932 = vpop.f32.mrf.mxu0
        %v2933 = vadd.f32 0.0, %v2932
        %v2934 = vpop.f32.mrf.mxu0
        %v2935 = vadd.f32 0.0, %v2934
        %2936 = vmatmul.bf16.gmra.mxu0 %v2731
        %v2937 = vpop.f32.mrf.mxu0
        %v2938 = vadd.f32 0.0, %v2937
        %v2939 = vpop.f32.mrf.mxu0
        %v2940 = vadd.f32 0.0, %v2939
        %2941 = vmatmul.bf16.gmra.mxu0 %v2732
        %v2942 = vpop.f32.mrf.mxu0
        %v2943 = vadd.f32 0.0, %v2942
        %v2944 = vpop.f32.mrf.mxu0
        %v2945 = vadd.f32 0.0, %v2944
        %2946 = vmatmul.bf16.gmra.mxu0 %v2733
        %v2947 = vpop.f32.mrf.mxu0
        %v2948 = vadd.f32 0.0, %v2947
        %v2949 = vpop.f32.mrf.mxu0
        %v2950 = vadd.f32 0.0, %v2949
        %2951 = vdwg.mxu0
        %2952 = vmatpush.bf16.msra.mxu0 %v2860
        %2953 = vmatpush.bf16.msra.mxu0 %v2856
        %2954 = vmatpush.bf16.msra.mxu0 %v2852
        %2955 = vmatpush.bf16.msra.mxu0 %v2848
        %2956 = vmatpush.bf16.msra.mxu0 %v2844
        %2957 = vmatpush.bf16.msra.mxu0 %v2840
        %2958 = vmatpush.bf16.msra.mxu0 %v2836
        %2959 = vmatpush.bf16.msra.mxu0 %v2832
        %2960 = vmatmul.bf16.gmra.mxu0 %v2730
        %v2961 = vpop.f32.mrf.mxu0
        %v2962 = vadd.f32 0.0, %v2961
        %v2963 = vpop.f32.mrf.mxu0
        %v2964 = vadd.f32 0.0, %v2963
        %2965 = vmatmul.bf16.gmra.mxu0 %v2731
        %v2966 = vpop.f32.mrf.mxu0
        %v2967 = vadd.f32 0.0, %v2966
        %v2968 = vpop.f32.mrf.mxu0
        %v2969 = vadd.f32 0.0, %v2968
        %2970 = vmatmul.bf16.gmra.mxu0 %v2732
        %v2971 = vpop.f32.mrf.mxu0
        %v2972 = vadd.f32 0.0, %v2971
        %v2973 = vpop.f32.mrf.mxu0
        %v2974 = vadd.f32 0.0, %v2973
        %2975 = vmatmul.bf16.gmra.mxu0 %v2733
        %v2976 = vpop.f32.mrf.mxu0
        %v2977 = vadd.f32 0.0, %v2976
        %v2978 = vpop.f32.mrf.mxu0
        %v2979 = vadd.f32 0.0, %v2978
        %2980 = vdwg.mxu0
        %2981 = vmatpush.bf16.msra.mxu0 %v2861
        %2982 = vmatpush.bf16.msra.mxu0 %v2857
        %2983 = vmatpush.bf16.msra.mxu0 %v2853
        %2984 = vmatpush.bf16.msra.mxu0 %v2849
        %2985 = vmatpush.bf16.msra.mxu0 %v2845
        %2986 = vmatpush.bf16.msra.mxu0 %v2841
        %2987 = vmatpush.bf16.msra.mxu0 %v2837
        %2988 = vmatpush.bf16.msra.mxu0 %v2833
        %2989 = vmatmul.bf16.gmra.mxu0 %v2730
        %v2990 = vpop.f32.mrf.mxu0
        %v2991 = vadd.f32 0.0, %v2990
        %v2992 = vpop.f32.mrf.mxu0
        %v2993 = vadd.f32 0.0, %v2992
        %2994 = vmatmul.bf16.gmra.mxu0 %v2731
        %v2995 = vpop.f32.mrf.mxu0
        %v2996 = vadd.f32 0.0, %v2995
        %v2997 = vpop.f32.mrf.mxu0
        %v2998 = vadd.f32 0.0, %v2997
        %2999 = vmatmul.bf16.gmra.mxu0 %v2732
        %v3000 = vpop.f32.mrf.mxu0
        %v3001 = vadd.f32 0.0, %v3000
        %v3002 = vpop.f32.mrf.mxu0
        %v3003 = vadd.f32 0.0, %v3002
        %3004 = vmatmul.bf16.gmra.mxu0 %v2733
        %v3005 = vpop.f32.mrf.mxu0
        %v3006 = vadd.f32 0.0, %v3005
        %v3007 = vpop.f32.mrf.mxu0
        %v3008 = vadd.f32 0.0, %v3007
        %3009 = vdwg.mxu0
        %3010 = vst [vmem:[#allocation5] sm:$0xff] %v2904
        %3011 = vst [vmem:[#allocation5 + $0x8] sm:$0xff] %v2933
        %3012 = vst [vmem:[#allocation5 + $0x10] sm:$0xff] %v2962
        %3013 = vst [vmem:[#allocation5 + $0x18] sm:$0xff] %v2991
        %3014 = vst [vmem:[#allocation5 + $0x20] sm:$0xff] %v2906
        %3015 = vst [vmem:[#allocation5 + $0x28] sm:$0xff] %v2935
        %3016 = vst [vmem:[#allocation5 + $0x30] sm:$0xff] %v2964
        %3017 = vst [vmem:[#allocation5 + $0x38] sm:$0xff] %v2993
        %3018 = vst [vmem:[#allocation5 + $0x40] sm:$0xff] %v2909
        %3019 = vst [vmem:[#allocation5 + $0x48] sm:$0xff] %v2938
        %3020 = vst [vmem:[#allocation5 + $0x50] sm:$0xff] %v2967
        %3021 = vst [vmem:[#allocation5 + $0x58] sm:$0xff] %v2996
        %3022 = vst [vmem:[#allocation5 + $0x60] sm:$0xff] %v2911
        %3023 = vst [vmem:[#allocation5 + $0x68] sm:$0xff] %v2940
        %3024 = vst [vmem:[#allocation5 + $0x70] sm:$0xff] %v2969
        %3025 = vst [vmem:[#allocation5 + $0x78] sm:$0xff] %v2998
        %3026 = vst [vmem:[#allocation5 + $0x80] sm:$0xff] %v2914
        %3027 = vst [vmem:[#allocation5 + $0x88] sm:$0xff] %v2943
        %3028 = vst [vmem:[#allocation5 + $0x90] sm:$0xff] %v2972
        %3029 = vst [vmem:[#allocation5 + $0x98] sm:$0xff] %v3001
        %3030 = vst [vmem:[#allocation5 + $0xa0] sm:$0xff] %v2916
        %3031 = vst [vmem:[#allocation5 + $0xa8] sm:$0xff] %v2945
        %3032 = vst [vmem:[#allocation5 + $0xb0] sm:$0xff] %v2974
        %3033 = vst [vmem:[#allocation5 + $0xb8] sm:$0xff] %v3003
        %3034 = vst [vmem:[#allocation5 + $0xc0] sm:$0xff] %v2919
        %3035 = vst [vmem:[#allocation5 + $0xc8] sm:$0xff] %v2948
        %3036 = vst [vmem:[#allocation5 + $0xd0] sm:$0xff] %v2977
        %3037 = vst [vmem:[#allocation5 + $0xd8] sm:$0xff] %v3006
        %3038 = vst [vmem:[#allocation5 + $0xe0] sm:$0xff] %v2921
        %3039 = vst [vmem:[#allocation5 + $0xe8] sm:$0xff] %v2950
        %3040 = vst [vmem:[#allocation5 + $0xf0] sm:$0xff] %v2979
        %3041 = vst [vmem:[#allocation5 + $0xf8] sm:$0xff] %v3008
        %s3042 = scalar_lea.vmem [#allocation2], 8
        %v3043 = vld [vmem:[%s3042] sm:$0xff]
        %s3044 = scalar_lea.vmem [#allocation3], 8
        %v3045 = vld [vmem:[%s3044] sm:$0xff]
        %v3046 = vpack.c.bf16 %v3043, %v3043
        %v3047 = vld [vmem:[#allocation5] sm:$0xff]
        %v3048 = vld [vmem:[#allocation5 + $0x8] sm:$0xff]
        %v3049 = vld [vmem:[#allocation5 + $0x10] sm:$0xff]
        %v3050 = vld [vmem:[#allocation5 + $0x18] sm:$0xff]
        %v3083 = vunpack.c.l.b16 %v2680
        %v3084 = vunpack.c.h.b16 %v2680
        %v3085 = vunpack.c.l.b16 %v2681
        %v3086 = vunpack.c.h.b16 %v2681
        %v3087 = vunpack.c.l.b16 %v2682
        %v3088 = vunpack.c.h.b16 %v2682
        %v3089 = vunpack.c.l.b16 %v2683
        %v3090 = vunpack.c.h.b16 %v2683
        %v3091 = vunpack.c.l.b16 %v2684
        %v3092 = vunpack.c.h.b16 %v2684
        %v3093 = vunpack.c.l.b16 %v2685
        %v3094 = vunpack.c.h.b16 %v2685
        %v3095 = vunpack.c.l.b16 %v2686
        %v3096 = vunpack.c.h.b16 %v2686
        %v3097 = vunpack.c.l.b16 %v2687
        %v3098 = vunpack.c.h.b16 %v2687
        %v3099 = vunpack.c.l.b16 %v2688
        %v3100 = vunpack.c.h.b16 %v2688
        %v3101 = vunpack.c.l.b16 %v2689
        %v3102 = vunpack.c.h.b16 %v2689
        %v3103 = vunpack.c.l.b16 %v2690
        %v3104 = vunpack.c.h.b16 %v2690
        %v3105 = vunpack.c.l.b16 %v2691
        %v3106 = vunpack.c.h.b16 %v2691
        %v3107 = vunpack.c.l.b16 %v2692
        %v3108 = vunpack.c.h.b16 %v2692
        %v3109 = vunpack.c.l.b16 %v2693
        %v3110 = vunpack.c.h.b16 %v2693
        %v3111 = vunpack.c.l.b16 %v2694
        %v3112 = vunpack.c.h.b16 %v2694
        %v3113 = vunpack.c.l.b16 %v2695
        %v3114 = vunpack.c.h.b16 %v2695
        %v3115 = vunpack.c.l.b16 %v2696
        %v3116 = vunpack.c.h.b16 %v2696
        %v3117 = vunpack.c.l.b16 %v2697
        %v3118 = vunpack.c.h.b16 %v2697
        %v3119 = vunpack.c.l.b16 %v2698
        %v3120 = vunpack.c.h.b16 %v2698
        %v3121 = vunpack.c.l.b16 %v2699
        %v3122 = vunpack.c.h.b16 %v2699
        %v3123 = vunpack.c.l.b16 %v2700
        %v3124 = vunpack.c.h.b16 %v2700
        %v3125 = vunpack.c.l.b16 %v2701
        %v3126 = vunpack.c.h.b16 %v2701
        %v3127 = vunpack.c.l.b16 %v2702
        %v3128 = vunpack.c.h.b16 %v2702
        %v3129 = vunpack.c.l.b16 %v2703
        %v3130 = vunpack.c.h.b16 %v2703
        %v3131 = vunpack.c.l.b16 %v2704
        %v3132 = vunpack.c.h.b16 %v2704
        %v3133 = vunpack.c.l.b16 %v2705
        %v3134 = vunpack.c.h.b16 %v2705
        %v3135 = vunpack.c.l.b16 %v2706
        %v3136 = vunpack.c.h.b16 %v2706
        %v3137 = vunpack.c.l.b16 %v2707
        %v3138 = vunpack.c.h.b16 %v2707
        %v3139 = vunpack.c.l.b16 %v2708
        %v3140 = vunpack.c.h.b16 %v2708
        %v3141 = vunpack.c.l.b16 %v2709
        %v3142 = vunpack.c.h.b16 %v2709
        %v3143 = vunpack.c.l.b16 %v2710
        %v3144 = vunpack.c.h.b16 %v2710
        %v3145 = vunpack.c.l.b16 %v2711
        %v3146 = vunpack.c.h.b16 %v2711
        %v3147 = vpack.c.b16 %v3087, %v3083
        %v3148 = vpack.c.b16 %v3088, %v3084
        %v3149 = vpack.c.b16 %v3089, %v3085
        %v3150 = vpack.c.b16 %v3090, %v3086
        %v3151 = vpack.c.b16 %v3095, %v3091
        %v3152 = vpack.c.b16 %v3096, %v3092
        %v3153 = vpack.c.b16 %v3097, %v3093
        %v3154 = vpack.c.b16 %v3098, %v3094
        %v3155 = vpack.c.b16 %v3103, %v3099
        %v3156 = vpack.c.b16 %v3104, %v3100
        %v3157 = vpack.c.b16 %v3105, %v3101
        %v3158 = vpack.c.b16 %v3106, %v3102
        %v3159 = vpack.c.b16 %v3111, %v3107
        %v3160 = vpack.c.b16 %v3112, %v3108
        %v3161 = vpack.c.b16 %v3113, %v3109
        %v3162 = vpack.c.b16 %v3114, %v3110
        %v3163 = vpack.c.b16 %v3119, %v3115
        %v3164 = vpack.c.b16 %v3120, %v3116
        %v3165 = vpack.c.b16 %v3121, %v3117
        %v3166 = vpack.c.b16 %v3122, %v3118
        %v3167 = vpack.c.b16 %v3127, %v3123
        %v3168 = vpack.c.b16 %v3128, %v3124
        %v3169 = vpack.c.b16 %v3129, %v3125
        %v3170 = vpack.c.b16 %v3130, %v3126
        %v3171 = vpack.c.b16 %v3135, %v3131
        %v3172 = vpack.c.b16 %v3136, %v3132
        %v3173 = vpack.c.b16 %v3137, %v3133
        %v3174 = vpack.c.b16 %v3138, %v3134
        %v3175 = vpack.c.b16 %v3143, %v3139
        %v3176 = vpack.c.b16 %v3144, %v3140
        %v3177 = vpack.c.b16 %v3145, %v3141
        %v3178 = vpack.c.b16 %v3146, %v3142
        %3211 = vmatpush.bf16.msra.mxu0 %v3175
        %3212 = vmatpush.bf16.msra.mxu0 %v3171
        %3213 = vmatpush.bf16.msra.mxu0 %v3167
        %3214 = vmatpush.bf16.msra.mxu0 %v3163
        %3215 = vmatpush.bf16.msra.mxu0 %v3159
        %3216 = vmatpush.bf16.msra.mxu0 %v3155
        %3217 = vmatpush.bf16.msra.mxu0 %v3151
        %3218 = vmatpush.bf16.msra.mxu0 %v3147
        %3219 = vmatmul.bf16.gmra.mxu0 %v3046
        %v3220 = vpop.f32.mrf.mxu0
        %v3221 = vadd.f32 %v3047, %v3220
        %v3222 = vpop.f32.mrf.mxu0
        %3223 = vdwg.mxu0
        %3224 = vmatpush.bf16.msra.mxu0 %v3176
        %3225 = vmatpush.bf16.msra.mxu0 %v3172
        %3226 = vmatpush.bf16.msra.mxu0 %v3168
        %3227 = vmatpush.bf16.msra.mxu0 %v3164
        %3228 = vmatpush.bf16.msra.mxu0 %v3160
        %3229 = vmatpush.bf16.msra.mxu0 %v3156
        %3230 = vmatpush.bf16.msra.mxu0 %v3152
        %3231 = vmatpush.bf16.msra.mxu0 %v3148
        %3232 = vmatmul.bf16.gmra.mxu0 %v3046
        %v3233 = vpop.f32.mrf.mxu0
        %v3234 = vadd.f32 %v3048, %v3233
        %v3235 = vpop.f32.mrf.mxu0
        %3236 = vdwg.mxu0
        %3237 = vmatpush.bf16.msra.mxu0 %v3177
        %3238 = vmatpush.bf16.msra.mxu0 %v3173
        %3239 = vmatpush.bf16.msra.mxu0 %v3169
        %3240 = vmatpush.bf16.msra.mxu0 %v3165
        %3241 = vmatpush.bf16.msra.mxu0 %v3161
        %3242 = vmatpush.bf16.msra.mxu0 %v3157
        %3243 = vmatpush.bf16.msra.mxu0 %v3153
        %3244 = vmatpush.bf16.msra.mxu0 %v3149
        %3245 = vmatmul.bf16.gmra.mxu0 %v3046
        %v3246 = vpop.f32.mrf.mxu0
        %v3247 = vadd.f32 %v3049, %v3246
        %v3248 = vpop.f32.mrf.mxu0
        %3249 = vdwg.mxu0
        %3250 = vmatpush.bf16.msra.mxu0 %v3178
        %3251 = vmatpush.bf16.msra.mxu0 %v3174
        %3252 = vmatpush.bf16.msra.mxu0 %v3170
        %3253 = vmatpush.bf16.msra.mxu0 %v3166
        %3254 = vmatpush.bf16.msra.mxu0 %v3162
        %3255 = vmatpush.bf16.msra.mxu0 %v3158
        %3256 = vmatpush.bf16.msra.mxu0 %v3154
        %3257 = vmatpush.bf16.msra.mxu0 %v3150
        %3258 = vmatmul.bf16.gmra.mxu0 %v3046
        %v3259 = vpop.f32.mrf.mxu0
        %v3260 = vadd.f32 %v3050, %v3259
        %v3261 = vpop.f32.mrf.mxu0
        %3262 = vdwg.mxu0
        %v3263 = vadd.f32 %v3221, %v2714
        %v3264 = vadd.f32 %v3234, %v2715
        %v3265 = vadd.f32 %v3247, %v2716
        %v3266 = vadd.f32 %v3260, %v2717
        %v3267 = vxor.u32 %v3263, 2147483648
        %v3268 = vmul.f32 %v3267, 1.442695
        %v3269 = vpow.pop %v3268
        %v3270 = vadd.f32 %v3269, 1.0
        %v3271 = vrcp.pop %v3270
        %v3272 = vmul.f32 %v3270, %v3271
        %v3273 = vsub.f32 1.0, %v3272
        %v3274 = vmul.f32 %v3271, %v3273
        %v3275 = vadd.f32 %v3271, %v3274
        %vm3276 = vweird.f32 %v3270
        %vm3277 = vweird.f32 %v3271
        %vm3278 = vmor %vm3276, %vm3277
        %v3279 = vsel %vm3278, %v3271, %v3275
        %v3280 = vand.u32 2147483647, %v3270
        %vm3281 = vcmp.eq.f32.partialorder %v3280, 8.507059e+37
        %v3282 = vand.u32 %v3270, 2147483648
        %v3283 = vor.u32 1.1754944e-38, %v3282
        %v3284 = vsel %vm3281, %v3283, %v3279
        %v3285 = vmul.f32 1.0, %v3284
        %v3286 = vxor.u32 %v3264, 2147483648
        %v3287 = vmul.f32 %v3286, 1.442695
        %v3288 = vpow.pop %v3287
        %v3289 = vadd.f32 %v3288, 1.0
        %v3290 = vrcp.pop %v3289
        %v3291 = vmul.f32 %v3289, %v3290
        %v3292 = vsub.f32 1.0, %v3291
        %v3293 = vmul.f32 %v3290, %v3292
        %v3294 = vadd.f32 %v3290, %v3293
        %vm3295 = vweird.f32 %v3289
        %vm3296 = vweird.f32 %v3290
        %vm3297 = vmor %vm3295, %vm3296
        %v3298 = vsel %vm3297, %v3290, %v3294
        %v3299 = vand.u32 2147483647, %v3289
        %vm3300 = vcmp.eq.f32.partialorder %v3299, 8.507059e+37
        %v3301 = vand.u32 %v3289, 2147483648
        %v3302 = vor.u32 1.1754944e-38, %v3301
        %v3303 = vsel %vm3300, %v3302, %v3298
        %v3304 = vmul.f32 1.0, %v3303
        %v3305 = vtanh.pop %v3265
        %v3306 = vxor.u32 %v3266, 2147483648
        %v3307 = vmul.f32 %v3306, 1.442695
        %v3308 = vpow.pop %v3307
        %v3309 = vadd.f32 %v3308, 1.0
        %v3310 = vrcp.pop %v3309
        %v3311 = vmul.f32 %v3309, %v3310
        %v3312 = vsub.f32 1.0, %v3311
        %v3313 = vmul.f32 %v3310, %v3312
        %v3314 = vadd.f32 %v3310, %v3313
        %vm3315 = vweird.f32 %v3309
        %vm3316 = vweird.f32 %v3310
        %vm3317 = vmor %vm3315, %vm3316
        %v3318 = vsel %vm3317, %v3310, %v3314
        %v3319 = vand.u32 2147483647, %v3309
        %vm3320 = vcmp.eq.f32.partialorder %v3319, 8.507059e+37
        %v3321 = vand.u32 %v3309, 2147483648
        %v3322 = vor.u32 1.1754944e-38, %v3321
        %v3323 = vsel %vm3320, %v3322, %v3318
        %v3324 = vmul.f32 1.0, %v3323
        %v3325 = vmul.f32 %v3304, %v3045
        %v3326 = vmul.f32 %v3285, %v3305
        %v3327 = vadd.f32 %v3325, %v3326
        %v3328 = vtanh.pop %v3327
        %v3329 = vmul.f32 %v3324, %v3328
        %v3330 = vpack.c.bf16 %v3329, %v3329
        %v3331 = vld [vmem:[%s1082] sm:$0xff]
        %v3332 = vld [vmem:[%s1082 + $0x8] sm:$0xff]
        %v3333 = vld [vmem:[%s1082 + $0x10] sm:$0xff]
        %v3334 = vld [vmem:[%s1082 + $0x18] sm:$0xff]
        %3335 = vmatpush.bf16.msra.mxu0 %v3175
        %3336 = vmatpush.bf16.msra.mxu0 %v3171
        %3337 = vmatpush.bf16.msra.mxu0 %v3167
        %3338 = vmatpush.bf16.msra.mxu0 %v3163
        %3339 = vmatpush.bf16.msra.mxu0 %v3159
        %3340 = vmatpush.bf16.msra.mxu0 %v3155
        %3341 = vmatpush.bf16.msra.mxu0 %v3151
        %3342 = vmatpush.bf16.msra.mxu0 %v3147
        %3343 = vmatmul.bf16.gmra.mxu0 %v3330
        %v3344 = vpop.f32.mrf.mxu0
        %v3345 = vadd.f32 %v3331, %v3344
        %v3346 = vpop.f32.mrf.mxu0
        %3347 = vdwg.mxu0
        %3348 = vmatpush.bf16.msra.mxu0 %v3176
        %3349 = vmatpush.bf16.msra.mxu0 %v3172
        %3350 = vmatpush.bf16.msra.mxu0 %v3168
        %3351 = vmatpush.bf16.msra.mxu0 %v3164
        %3352 = vmatpush.bf16.msra.mxu0 %v3160
        %3353 = vmatpush.bf16.msra.mxu0 %v3156
        %3354 = vmatpush.bf16.msra.mxu0 %v3152
        %3355 = vmatpush.bf16.msra.mxu0 %v3148
        %3356 = vmatmul.bf16.gmra.mxu0 %v3330
        %v3357 = vpop.f32.mrf.mxu0
        %v3358 = vadd.f32 %v3332, %v3357
        %v3359 = vpop.f32.mrf.mxu0
        %3360 = vdwg.mxu0
        %3361 = vmatpush.bf16.msra.mxu0 %v3177
        %3362 = vmatpush.bf16.msra.mxu0 %v3173
        %3363 = vmatpush.bf16.msra.mxu0 %v3169
        %3364 = vmatpush.bf16.msra.mxu0 %v3165
        %3365 = vmatpush.bf16.msra.mxu0 %v3161
        %3366 = vmatpush.bf16.msra.mxu0 %v3157
        %3367 = vmatpush.bf16.msra.mxu0 %v3153
        %3368 = vmatpush.bf16.msra.mxu0 %v3149
        %3369 = vmatmul.bf16.gmra.mxu0 %v3330
        %v3370 = vpop.f32.mrf.mxu0
        %v3371 = vadd.f32 %v3333, %v3370
        %v3372 = vpop.f32.mrf.mxu0
        %3373 = vdwg.mxu0
        %3374 = vmatpush.bf16.msra.mxu0 %v3178
        %3375 = vmatpush.bf16.msra.mxu0 %v3174
        %3376 = vmatpush.bf16.msra.mxu0 %v3170
        %3377 = vmatpush.bf16.msra.mxu0 %v3166
        %3378 = vmatpush.bf16.msra.mxu0 %v3162
        %3379 = vmatpush.bf16.msra.mxu0 %v3158
        %3380 = vmatpush.bf16.msra.mxu0 %v3154
        %3381 = vmatpush.bf16.msra.mxu0 %v3150
        %3382 = vmatmul.bf16.gmra.mxu0 %v3330
        %v3383 = vpop.f32.mrf.mxu0
        %v3384 = vadd.f32 %v3334, %v3383
        %v3385 = vpop.f32.mrf.mxu0
        %3386 = vdwg.mxu0
        %v3387 = vadd.f32 %v3345, %v2714
        %v3388 = vadd.f32 %v3358, %v2715
        %v3389 = vadd.f32 %v3371, %v2716
        %v3390 = vadd.f32 %v3384, %v2717
        %v3391 = vxor.u32 %v3387, 2147483648
        %v3392 = vmul.f32 %v3391, 1.442695
        %v3393 = vpow.pop %v3392
        %v3394 = vadd.f32 %v3393, 1.0
        %v3395 = vrcp.pop %v3394
        %v3396 = vmul.f32 %v3394, %v3395
        %v3397 = vsub.f32 1.0, %v3396
        %v3398 = vmul.f32 %v3395, %v3397
        %v3399 = vadd.f32 %v3395, %v3398
        %vm3400 = vweird.f32 %v3394
        %vm3401 = vweird.f32 %v3395
        %vm3402 = vmor %vm3400, %vm3401
        %v3403 = vsel %vm3402, %v3395, %v3399
        %v3404 = vand.u32 2147483647, %v3394
        %vm3405 = vcmp.eq.f32.partialorder %v3404, 8.507059e+37
        %v3406 = vand.u32 %v3394, 2147483648
        %v3407 = vor.u32 1.1754944e-38, %v3406
        %v3408 = vsel %vm3405, %v3407, %v3403
        %v3409 = vmul.f32 1.0, %v3408
        %v3410 = vxor.u32 %v3388, 2147483648
        %v3411 = vmul.f32 %v3410, 1.442695
        %v3412 = vpow.pop %v3411
        %v3413 = vadd.f32 %v3412, 1.0
        %v3414 = vrcp.pop %v3413
        %v3415 = vmul.f32 %v3413, %v3414
        %v3416 = vsub.f32 1.0, %v3415
        %v3417 = vmul.f32 %v3414, %v3416
        %v3418 = vadd.f32 %v3414, %v3417
        %vm3419 = vweird.f32 %v3413
        %vm3420 = vweird.f32 %v3414
        %vm3421 = vmor %vm3419, %vm3420
        %v3422 = vsel %vm3421, %v3414, %v3418
        %v3423 = vand.u32 2147483647, %v3413
        %vm3424 = vcmp.eq.f32.partialorder %v3423, 8.507059e+37
        %v3425 = vand.u32 %v3413, 2147483648
        %v3426 = vor.u32 1.1754944e-38, %v3425
        %v3427 = vsel %vm3424, %v3426, %v3422
        %v3428 = vmul.f32 1.0, %v3427
        %v3429 = vtanh.pop %v3389
        %v3430 = vxor.u32 %v3390, 2147483648
        %v3431 = vmul.f32 %v3430, 1.442695
        %v3432 = vpow.pop %v3431
        %v3433 = vadd.f32 %v3432, 1.0
        %v3434 = vrcp.pop %v3433
        %v3435 = vmul.f32 %v3433, %v3434
        %v3436 = vsub.f32 1.0, %v3435
        %v3437 = vmul.f32 %v3434, %v3436
        %v3438 = vadd.f32 %v3434, %v3437
        %vm3439 = vweird.f32 %v3433
        %vm3440 = vweird.f32 %v3434
        %vm3441 = vmor %vm3439, %vm3440
        %v3442 = vsel %vm3441, %v3434, %v3438
        %v3443 = vand.u32 2147483647, %v3433
        %vm3444 = vcmp.eq.f32.partialorder %v3443, 8.507059e+37
        %v3445 = vand.u32 %v3433, 2147483648
        %v3446 = vor.u32 1.1754944e-38, %v3445
        %v3447 = vsel %vm3444, %v3446, %v3442
        %v3448 = vmul.f32 1.0, %v3447
        %v3449 = vmul.f32 %v3428, %v3327
        %v3450 = vmul.f32 %v3409, %v3429
        %v3451 = vadd.f32 %v3449, %v3450
        %v3452 = vtanh.pop %v3451
        %v3453 = vmul.f32 %v3448, %v3452
        %v3454 = vpack.c.bf16 %v3453, %v3453
        %v3455 = vld [vmem:[%s1147] sm:$0xff]
        %v3456 = vld [vmem:[%s1147 + $0x8] sm:$0xff]
        %v3457 = vld [vmem:[%s1147 + $0x10] sm:$0xff]
        %v3458 = vld [vmem:[%s1147 + $0x18] sm:$0xff]
        %3459 = vmatpush.bf16.msra.mxu0 %v3175
        %3460 = vmatpush.bf16.msra.mxu0 %v3171
        %3461 = vmatpush.bf16.msra.mxu0 %v3167
        %3462 = vmatpush.bf16.msra.mxu0 %v3163
        %3463 = vmatpush.bf16.msra.mxu0 %v3159
        %3464 = vmatpush.bf16.msra.mxu0 %v3155
        %3465 = vmatpush.bf16.msra.mxu0 %v3151
        %3466 = vmatpush.bf16.msra.mxu0 %v3147
        %3467 = vmatmul.bf16.gmra.mxu0 %v3454
        %v3468 = vpop.f32.mrf.mxu0
        %v3469 = vadd.f32 %v3455, %v3468
        %v3470 = vpop.f32.mrf.mxu0
        %3471 = vdwg.mxu0
        %3472 = vmatpush.bf16.msra.mxu0 %v3176
        %3473 = vmatpush.bf16.msra.mxu0 %v3172
        %3474 = vmatpush.bf16.msra.mxu0 %v3168
        %3475 = vmatpush.bf16.msra.mxu0 %v3164
        %3476 = vmatpush.bf16.msra.mxu0 %v3160
        %3477 = vmatpush.bf16.msra.mxu0 %v3156
        %3478 = vmatpush.bf16.msra.mxu0 %v3152
        %3479 = vmatpush.bf16.msra.mxu0 %v3148
        %3480 = vmatmul.bf16.gmra.mxu0 %v3454
        %v3481 = vpop.f32.mrf.mxu0
        %v3482 = vadd.f32 %v3456, %v3481
        %v3483 = vpop.f32.mrf.mxu0
        %3484 = vdwg.mxu0
        %3485 = vmatpush.bf16.msra.mxu0 %v3177
        %3486 = vmatpush.bf16.msra.mxu0 %v3173
        %3487 = vmatpush.bf16.msra.mxu0 %v3169
        %3488 = vmatpush.bf16.msra.mxu0 %v3165
        %3489 = vmatpush.bf16.msra.mxu0 %v3161
        %3490 = vmatpush.bf16.msra.mxu0 %v3157
        %3491 = vmatpush.bf16.msra.mxu0 %v3153
        %3492 = vmatpush.bf16.msra.mxu0 %v3149
        %3493 = vmatmul.bf16.gmra.mxu0 %v3454
        %v3494 = vpop.f32.mrf.mxu0
        %v3495 = vadd.f32 %v3457, %v3494
        %v3496 = vpop.f32.mrf.mxu0
        %3497 = vdwg.mxu0
        %3498 = vmatpush.bf16.msra.mxu0 %v3178
        %3499 = vmatpush.bf16.msra.mxu0 %v3174
        %3500 = vmatpush.bf16.msra.mxu0 %v3170
        %3501 = vmatpush.bf16.msra.mxu0 %v3166
        %3502 = vmatpush.bf16.msra.mxu0 %v3162
        %3503 = vmatpush.bf16.msra.mxu0 %v3158
        %3504 = vmatpush.bf16.msra.mxu0 %v3154
        %3505 = vmatpush.bf16.msra.mxu0 %v3150
        %3506 = vmatmul.bf16.gmra.mxu0 %v3454
        %v3507 = vpop.f32.mrf.mxu0
        %v3508 = vadd.f32 %v3458, %v3507
        %v3509 = vpop.f32.mrf.mxu0
        %3510 = vdwg.mxu0
        %v3511 = vadd.f32 %v3469, %v2714
        %v3512 = vadd.f32 %v3482, %v2715
        %v3513 = vadd.f32 %v3495, %v2716
        %v3514 = vadd.f32 %v3508, %v2717
        %v3515 = vxor.u32 %v3511, 2147483648
        %v3516 = vmul.f32 %v3515, 1.442695
        %v3517 = vpow.pop %v3516
        %v3518 = vadd.f32 %v3517, 1.0
        %v3519 = vrcp.pop %v3518
        %v3520 = vmul.f32 %v3518, %v3519
        %v3521 = vsub.f32 1.0, %v3520
        %v3522 = vmul.f32 %v3519, %v3521
        %v3523 = vadd.f32 %v3519, %v3522
        %vm3524 = vweird.f32 %v3518
        %vm3525 = vweird.f32 %v3519
        %vm3526 = vmor %vm3524, %vm3525
        %v3527 = vsel %vm3526, %v3519, %v3523
        %v3528 = vand.u32 2147483647, %v3518
        %vm3529 = vcmp.eq.f32.partialorder %v3528, 8.507059e+37
        %v3530 = vand.u32 %v3518, 2147483648
        %v3531 = vor.u32 1.1754944e-38, %v3530
        %v3532 = vsel %vm3529, %v3531, %v3527
        %v3533 = vmul.f32 1.0, %v3532
        %v3534 = vxor.u32 %v3512, 2147483648
        %v3535 = vmul.f32 %v3534, 1.442695
        %v3536 = vpow.pop %v3535
        %v3537 = vadd.f32 %v3536, 1.0
        %v3538 = vrcp.pop %v3537
        %v3539 = vmul.f32 %v3537, %v3538
        %v3540 = vsub.f32 1.0, %v3539
        %v3541 = vmul.f32 %v3538, %v3540
        %v3542 = vadd.f32 %v3538, %v3541
        %vm3543 = vweird.f32 %v3537
        %vm3544 = vweird.f32 %v3538
        %vm3545 = vmor %vm3543, %vm3544
        %v3546 = vsel %vm3545, %v3538, %v3542
        %v3547 = vand.u32 2147483647, %v3537
        %vm3548 = vcmp.eq.f32.partialorder %v3547, 8.507059e+37
        %v3549 = vand.u32 %v3537, 2147483648
        %v3550 = vor.u32 1.1754944e-38, %v3549
        %v3551 = vsel %vm3548, %v3550, %v3546
        %v3552 = vmul.f32 1.0, %v3551
        %v3553 = vtanh.pop %v3513
        %v3554 = vxor.u32 %v3514, 2147483648
        %v3555 = vmul.f32 %v3554, 1.442695
        %v3556 = vpow.pop %v3555
        %v3557 = vadd.f32 %v3556, 1.0
        %v3558 = vrcp.pop %v3557
        %v3559 = vmul.f32 %v3557, %v3558
        %v3560 = vsub.f32 1.0, %v3559
        %v3561 = vmul.f32 %v3558, %v3560
        %v3562 = vadd.f32 %v3558, %v3561
        %vm3563 = vweird.f32 %v3557
        %vm3564 = vweird.f32 %v3558
        %vm3565 = vmor %vm3563, %vm3564
        %v3566 = vsel %vm3565, %v3558, %v3562
        %v3567 = vand.u32 2147483647, %v3557
        %vm3568 = vcmp.eq.f32.partialorder %v3567, 8.507059e+37
        %v3569 = vand.u32 %v3557, 2147483648
        %v3570 = vor.u32 1.1754944e-38, %v3569
        %v3571 = vsel %vm3568, %v3570, %v3566
        %v3572 = vmul.f32 1.0, %v3571
        %v3573 = vmul.f32 %v3552, %v3451
        %v3574 = vmul.f32 %v3533, %v3553
        %v3575 = vadd.f32 %v3573, %v3574
        %v3576 = vtanh.pop %v3575
        %v3577 = vmul.f32 %v3572, %v3576
        %v3578 = vpack.c.bf16 %v3577, %v3577
        %v3579 = vld [vmem:[%s1212] sm:$0xff]
        %v3580 = vld [vmem:[%s1212 + $0x8] sm:$0xff]
        %v3581 = vld [vmem:[%s1212 + $0x10] sm:$0xff]
        %v3582 = vld [vmem:[%s1212 + $0x18] sm:$0xff]
        %3583 = vmatpush.bf16.msra.mxu0 %v3175
        %3584 = vmatpush.bf16.msra.mxu0 %v3171
        %3585 = vmatpush.bf16.msra.mxu0 %v3167
        %3586 = vmatpush.bf16.msra.mxu0 %v3163
        %3587 = vmatpush.bf16.msra.mxu0 %v3159
        %3588 = vmatpush.bf16.msra.mxu0 %v3155
        %3589 = vmatpush.bf16.msra.mxu0 %v3151
        %3590 = vmatpush.bf16.msra.mxu0 %v3147
        %3591 = vmatmul.bf16.gmra.mxu0 %v3578
        %v3592 = vpop.f32.mrf.mxu0
        %v3593 = vadd.f32 %v3579, %v3592
        %v3594 = vpop.f32.mrf.mxu0
        %3595 = vdwg.mxu0
        %3596 = vmatpush.bf16.msra.mxu0 %v3176
        %3597 = vmatpush.bf16.msra.mxu0 %v3172
        %3598 = vmatpush.bf16.msra.mxu0 %v3168
        %3599 = vmatpush.bf16.msra.mxu0 %v3164
        %3600 = vmatpush.bf16.msra.mxu0 %v3160
        %3601 = vmatpush.bf16.msra.mxu0 %v3156
        %3602 = vmatpush.bf16.msra.mxu0 %v3152
        %3603 = vmatpush.bf16.msra.mxu0 %v3148
        %3604 = vmatmul.bf16.gmra.mxu0 %v3578
        %v3605 = vpop.f32.mrf.mxu0
        %v3606 = vadd.f32 %v3580, %v3605
        %v3607 = vpop.f32.mrf.mxu0
        %3608 = vdwg.mxu0
        %3609 = vmatpush.bf16.msra.mxu0 %v3177
        %3610 = vmatpush.bf16.msra.mxu0 %v3173
        %3611 = vmatpush.bf16.msra.mxu0 %v3169
        %3612 = vmatpush.bf16.msra.mxu0 %v3165
        %3613 = vmatpush.bf16.msra.mxu0 %v3161
        %3614 = vmatpush.bf16.msra.mxu0 %v3157
        %3615 = vmatpush.bf16.msra.mxu0 %v3153
        %3616 = vmatpush.bf16.msra.mxu0 %v3149
        %3617 = vmatmul.bf16.gmra.mxu0 %v3578
        %v3618 = vpop.f32.mrf.mxu0
        %v3619 = vadd.f32 %v3581, %v3618
        %v3620 = vpop.f32.mrf.mxu0
        %3621 = vdwg.mxu0
        %3622 = vmatpush.bf16.msra.mxu0 %v3178
        %3623 = vmatpush.bf16.msra.mxu0 %v3174
        %3624 = vmatpush.bf16.msra.mxu0 %v3170
        %3625 = vmatpush.bf16.msra.mxu0 %v3166
        %3626 = vmatpush.bf16.msra.mxu0 %v3162
        %3627 = vmatpush.bf16.msra.mxu0 %v3158
        %3628 = vmatpush.bf16.msra.mxu0 %v3154
        %3629 = vmatpush.bf16.msra.mxu0 %v3150
        %3630 = vmatmul.bf16.gmra.mxu0 %v3578
        %v3631 = vpop.f32.mrf.mxu0
        %v3632 = vadd.f32 %v3582, %v3631
        %v3633 = vpop.f32.mrf.mxu0
        %3634 = vdwg.mxu0
        %v3635 = vadd.f32 %v3593, %v2714
        %v3636 = vadd.f32 %v3606, %v2715
        %v3637 = vadd.f32 %v3619, %v2716
        %v3638 = vadd.f32 %v3632, %v2717
        %v3639 = vxor.u32 %v3635, 2147483648
        %v3640 = vmul.f32 %v3639, 1.442695
        %v3641 = vpow.pop %v3640
        %v3642 = vadd.f32 %v3641, 1.0
        %v3643 = vrcp.pop %v3642
        %v3644 = vmul.f32 %v3642, %v3643
        %v3645 = vsub.f32 1.0, %v3644
        %v3646 = vmul.f32 %v3643, %v3645
        %v3647 = vadd.f32 %v3643, %v3646
        %vm3648 = vweird.f32 %v3642
        %vm3649 = vweird.f32 %v3643
        %vm3650 = vmor %vm3648, %vm3649
        %v3651 = vsel %vm3650, %v3643, %v3647
        %v3652 = vand.u32 2147483647, %v3642
        %vm3653 = vcmp.eq.f32.partialorder %v3652, 8.507059e+37
        %v3654 = vand.u32 %v3642, 2147483648
        %v3655 = vor.u32 1.1754944e-38, %v3654
        %v3656 = vsel %vm3653, %v3655, %v3651
        %v3657 = vmul.f32 1.0, %v3656
        %v3658 = vxor.u32 %v3636, 2147483648
        %v3659 = vmul.f32 %v3658, 1.442695
        %v3660 = vpow.pop %v3659
        %v3661 = vadd.f32 %v3660, 1.0
        %v3662 = vrcp.pop %v3661
        %v3663 = vmul.f32 %v3661, %v3662
        %v3664 = vsub.f32 1.0, %v3663
        %v3665 = vmul.f32 %v3662, %v3664
        %v3666 = vadd.f32 %v3662, %v3665
        %vm3667 = vweird.f32 %v3661
        %vm3668 = vweird.f32 %v3662
        %vm3669 = vmor %vm3667, %vm3668
        %v3670 = vsel %vm3669, %v3662, %v3666
        %v3671 = vand.u32 2147483647, %v3661
        %vm3672 = vcmp.eq.f32.partialorder %v3671, 8.507059e+37
        %v3673 = vand.u32 %v3661, 2147483648
        %v3674 = vor.u32 1.1754944e-38, %v3673
        %v3675 = vsel %vm3672, %v3674, %v3670
        %v3676 = vmul.f32 1.0, %v3675
        %v3677 = vtanh.pop %v3637
        %v3678 = vxor.u32 %v3638, 2147483648
        %v3679 = vmul.f32 %v3678, 1.442695
        %v3680 = vpow.pop %v3679
        %v3681 = vadd.f32 %v3680, 1.0
        %v3682 = vrcp.pop %v3681
        %v3683 = vmul.f32 %v3681, %v3682
        %v3684 = vsub.f32 1.0, %v3683
        %v3685 = vmul.f32 %v3682, %v3684
        %v3686 = vadd.f32 %v3682, %v3685
        %vm3687 = vweird.f32 %v3681
        %vm3688 = vweird.f32 %v3682
        %vm3689 = vmor %vm3687, %vm3688
        %v3690 = vsel %vm3689, %v3682, %v3686
        %v3691 = vand.u32 2147483647, %v3681
        %vm3692 = vcmp.eq.f32.partialorder %v3691, 8.507059e+37
        %v3693 = vand.u32 %v3681, 2147483648
        %v3694 = vor.u32 1.1754944e-38, %v3693
        %v3695 = vsel %vm3692, %v3694, %v3690
        %v3696 = vmul.f32 1.0, %v3695
        %v3697 = vmul.f32 %v3676, %v3575
        %v3698 = vmul.f32 %v3657, %v3677
        %v3699 = vadd.f32 %v3697, %v3698
        %v3700 = vtanh.pop %v3699
        %v3701 = vmul.f32 %v3696, %v3700
        %v3702 = vpack.c.bf16 %v3701, %v3701
        %v3703 = vld [vmem:[%s1277] sm:$0xff]
        %v3704 = vld [vmem:[%s1277 + $0x8] sm:$0xff]
        %v3705 = vld [vmem:[%s1277 + $0x10] sm:$0xff]
        %v3706 = vld [vmem:[%s1277 + $0x18] sm:$0xff]
        %3707 = vmatpush.bf16.msra.mxu0 %v3175
        %3708 = vmatpush.bf16.msra.mxu0 %v3171
        %3709 = vmatpush.bf16.msra.mxu0 %v3167
        %3710 = vmatpush.bf16.msra.mxu0 %v3163
        %3711 = vmatpush.bf16.msra.mxu0 %v3159
        %3712 = vmatpush.bf16.msra.mxu0 %v3155
        %3713 = vmatpush.bf16.msra.mxu0 %v3151
        %3714 = vmatpush.bf16.msra.mxu0 %v3147
        %3715 = vmatmul.bf16.gmra.mxu0 %v3702
        %v3716 = vpop.f32.mrf.mxu0
        %v3717 = vadd.f32 %v3703, %v3716
        %v3718 = vpop.f32.mrf.mxu0
        %3719 = vdwg.mxu0
        %3720 = vmatpush.bf16.msra.mxu0 %v3176
        %3721 = vmatpush.bf16.msra.mxu0 %v3172
        %3722 = vmatpush.bf16.msra.mxu0 %v3168
        %3723 = vmatpush.bf16.msra.mxu0 %v3164
        %3724 = vmatpush.bf16.msra.mxu0 %v3160
        %3725 = vmatpush.bf16.msra.mxu0 %v3156
        %3726 = vmatpush.bf16.msra.mxu0 %v3152
        %3727 = vmatpush.bf16.msra.mxu0 %v3148
        %3728 = vmatmul.bf16.gmra.mxu0 %v3702
        %v3729 = vpop.f32.mrf.mxu0
        %v3730 = vadd.f32 %v3704, %v3729
        %v3731 = vpop.f32.mrf.mxu0
        %3732 = vdwg.mxu0
        %3733 = vmatpush.bf16.msra.mxu0 %v3177
        %3734 = vmatpush.bf16.msra.mxu0 %v3173
        %3735 = vmatpush.bf16.msra.mxu0 %v3169
        %3736 = vmatpush.bf16.msra.mxu0 %v3165
        %3737 = vmatpush.bf16.msra.mxu0 %v3161
        %3738 = vmatpush.bf16.msra.mxu0 %v3157
        %3739 = vmatpush.bf16.msra.mxu0 %v3153
        %3740 = vmatpush.bf16.msra.mxu0 %v3149
        %3741 = vmatmul.bf16.gmra.mxu0 %v3702
        %v3742 = vpop.f32.mrf.mxu0
        %v3743 = vadd.f32 %v3705, %v3742
        %v3744 = vpop.f32.mrf.mxu0
        %3745 = vdwg.mxu0
        %3746 = vmatpush.bf16.msra.mxu0 %v3178
        %3747 = vmatpush.bf16.msra.mxu0 %v3174
        %3748 = vmatpush.bf16.msra.mxu0 %v3170
        %3749 = vmatpush.bf16.msra.mxu0 %v3166
        %3750 = vmatpush.bf16.msra.mxu0 %v3162
        %3751 = vmatpush.bf16.msra.mxu0 %v3158
        %3752 = vmatpush.bf16.msra.mxu0 %v3154
        %3753 = vmatpush.bf16.msra.mxu0 %v3150
        %3754 = vmatmul.bf16.gmra.mxu0 %v3702
        %v3755 = vpop.f32.mrf.mxu0
        %v3756 = vadd.f32 %v3706, %v3755
        %v3757 = vpop.f32.mrf.mxu0
        %3758 = vdwg.mxu0
        %v3759 = vadd.f32 %v3717, %v2714
        %v3760 = vadd.f32 %v3730, %v2715
        %v3761 = vadd.f32 %v3743, %v2716
        %v3762 = vadd.f32 %v3756, %v2717
        %v3763 = vxor.u32 %v3759, 2147483648
        %v3764 = vmul.f32 %v3763, 1.442695
        %v3765 = vpow.pop %v3764
        %v3766 = vadd.f32 %v3765, 1.0
        %v3767 = vrcp.pop %v3766
        %v3768 = vmul.f32 %v3766, %v3767
        %v3769 = vsub.f32 1.0, %v3768
        %v3770 = vmul.f32 %v3767, %v3769
        %v3771 = vadd.f32 %v3767, %v3770
        %vm3772 = vweird.f32 %v3766
        %vm3773 = vweird.f32 %v3767
        %vm3774 = vmor %vm3772, %vm3773
        %v3775 = vsel %vm3774, %v3767, %v3771
        %v3776 = vand.u32 2147483647, %v3766
        %vm3777 = vcmp.eq.f32.partialorder %v3776, 8.507059e+37
        %v3778 = vand.u32 %v3766, 2147483648
        %v3779 = vor.u32 1.1754944e-38, %v3778
        %v3780 = vsel %vm3777, %v3779, %v3775
        %v3781 = vmul.f32 1.0, %v3780
        %v3782 = vxor.u32 %v3760, 2147483648
        %v3783 = vmul.f32 %v3782, 1.442695
        %v3784 = vpow.pop %v3783
        %v3785 = vadd.f32 %v3784, 1.0
        %v3786 = vrcp.pop %v3785
        %v3787 = vmul.f32 %v3785, %v3786
        %v3788 = vsub.f32 1.0, %v3787
        %v3789 = vmul.f32 %v3786, %v3788
        %v3790 = vadd.f32 %v3786, %v3789
        %vm3791 = vweird.f32 %v3785
        %vm3792 = vweird.f32 %v3786
        %vm3793 = vmor %vm3791, %vm3792
        %v3794 = vsel %vm3793, %v3786, %v3790
        %v3795 = vand.u32 2147483647, %v3785
        %vm3796 = vcmp.eq.f32.partialorder %v3795, 8.507059e+37
        %v3797 = vand.u32 %v3785, 2147483648
        %v3798 = vor.u32 1.1754944e-38, %v3797
        %v3799 = vsel %vm3796, %v3798, %v3794
        %v3800 = vmul.f32 1.0, %v3799
        %v3801 = vtanh.pop %v3761
        %v3802 = vxor.u32 %v3762, 2147483648
        %v3803 = vmul.f32 %v3802, 1.442695
        %v3804 = vpow.pop %v3803
        %v3805 = vadd.f32 %v3804, 1.0
        %v3806 = vrcp.pop %v3805
        %v3807 = vmul.f32 %v3805, %v3806
        %v3808 = vsub.f32 1.0, %v3807
        %v3809 = vmul.f32 %v3806, %v3808
        %v3810 = vadd.f32 %v3806, %v3809
        %vm3811 = vweird.f32 %v3805
        %vm3812 = vweird.f32 %v3806
        %vm3813 = vmor %vm3811, %vm3812
        %v3814 = vsel %vm3813, %v3806, %v3810
        %v3815 = vand.u32 2147483647, %v3805
        %vm3816 = vcmp.eq.f32.partialorder %v3815, 8.507059e+37
        %v3817 = vand.u32 %v3805, 2147483648
        %v3818 = vor.u32 1.1754944e-38, %v3817
        %v3819 = vsel %vm3816, %v3818, %v3814
        %v3820 = vmul.f32 1.0, %v3819
        %v3821 = vmul.f32 %v3800, %v3699
        %v3822 = vmul.f32 %v3781, %v3801
        %v3823 = vadd.f32 %v3821, %v3822
        %v3824 = vtanh.pop %v3823
        %v3825 = vmul.f32 %v3820, %v3824
        %v3826 = vpack.c.bf16 %v3825, %v3825
        %v3827 = vld [vmem:[%s1342] sm:$0xff]
        %v3828 = vld [vmem:[%s1342 + $0x8] sm:$0xff]
        %v3829 = vld [vmem:[%s1342 + $0x10] sm:$0xff]
        %v3830 = vld [vmem:[%s1342 + $0x18] sm:$0xff]
        %3831 = vmatpush.bf16.msra.mxu0 %v3175
        %3832 = vmatpush.bf16.msra.mxu0 %v3171
        %3833 = vmatpush.bf16.msra.mxu0 %v3167
        %3834 = vmatpush.bf16.msra.mxu0 %v3163
        %3835 = vmatpush.bf16.msra.mxu0 %v3159
        %3836 = vmatpush.bf16.msra.mxu0 %v3155
        %3837 = vmatpush.bf16.msra.mxu0 %v3151
        %3838 = vmatpush.bf16.msra.mxu0 %v3147
        %3839 = vmatmul.bf16.gmra.mxu0 %v3826
        %v3840 = vpop.f32.mrf.mxu0
        %v3841 = vadd.f32 %v3827, %v3840
        %v3842 = vpop.f32.mrf.mxu0
        %3843 = vdwg.mxu0
        %3844 = vmatpush.bf16.msra.mxu0 %v3176
        %3845 = vmatpush.bf16.msra.mxu0 %v3172
        %3846 = vmatpush.bf16.msra.mxu0 %v3168
        %3847 = vmatpush.bf16.msra.mxu0 %v3164
        %3848 = vmatpush.bf16.msra.mxu0 %v3160
        %3849 = vmatpush.bf16.msra.mxu0 %v3156
        %3850 = vmatpush.bf16.msra.mxu0 %v3152
        %3851 = vmatpush.bf16.msra.mxu0 %v3148
        %3852 = vmatmul.bf16.gmra.mxu0 %v3826
        %v3853 = vpop.f32.mrf.mxu0
        %v3854 = vadd.f32 %v3828, %v3853
        %v3855 = vpop.f32.mrf.mxu0
        %3856 = vdwg.mxu0
        %3857 = vmatpush.bf16.msra.mxu0 %v3177
        %3858 = vmatpush.bf16.msra.mxu0 %v3173
        %3859 = vmatpush.bf16.msra.mxu0 %v3169
        %3860 = vmatpush.bf16.msra.mxu0 %v3165
        %3861 = vmatpush.bf16.msra.mxu0 %v3161
        %3862 = vmatpush.bf16.msra.mxu0 %v3157
        %3863 = vmatpush.bf16.msra.mxu0 %v3153
        %3864 = vmatpush.bf16.msra.mxu0 %v3149
        %3865 = vmatmul.bf16.gmra.mxu0 %v3826
        %v3866 = vpop.f32.mrf.mxu0
        %v3867 = vadd.f32 %v3829, %v3866
        %v3868 = vpop.f32.mrf.mxu0
        %3869 = vdwg.mxu0
        %3870 = vmatpush.bf16.msra.mxu0 %v3178
        %3871 = vmatpush.bf16.msra.mxu0 %v3174
        %3872 = vmatpush.bf16.msra.mxu0 %v3170
        %3873 = vmatpush.bf16.msra.mxu0 %v3166
        %3874 = vmatpush.bf16.msra.mxu0 %v3162
        %3875 = vmatpush.bf16.msra.mxu0 %v3158
        %3876 = vmatpush.bf16.msra.mxu0 %v3154
        %3877 = vmatpush.bf16.msra.mxu0 %v3150
        %3878 = vmatmul.bf16.gmra.mxu0 %v3826
        %v3879 = vpop.f32.mrf.mxu0
        %v3880 = vadd.f32 %v3830, %v3879
        %v3881 = vpop.f32.mrf.mxu0
        %3882 = vdwg.mxu0
        %v3883 = vadd.f32 %v3841, %v2714
        %v3884 = vadd.f32 %v3854, %v2715
        %v3885 = vadd.f32 %v3867, %v2716
        %v3886 = vadd.f32 %v3880, %v2717
        %v3887 = vxor.u32 %v3883, 2147483648
        %v3888 = vmul.f32 %v3887, 1.442695
        %v3889 = vpow.pop %v3888
        %v3890 = vadd.f32 %v3889, 1.0
        %v3891 = vrcp.pop %v3890
        %v3892 = vmul.f32 %v3890, %v3891
        %v3893 = vsub.f32 1.0, %v3892
        %v3894 = vmul.f32 %v3891, %v3893
        %v3895 = vadd.f32 %v3891, %v3894
        %vm3896 = vweird.f32 %v3890
        %vm3897 = vweird.f32 %v3891
        %vm3898 = vmor %vm3896, %vm3897
        %v3899 = vsel %vm3898, %v3891, %v3895
        %v3900 = vand.u32 2147483647, %v3890
        %vm3901 = vcmp.eq.f32.partialorder %v3900, 8.507059e+37
        %v3902 = vand.u32 %v3890, 2147483648
        %v3903 = vor.u32 1.1754944e-38, %v3902
        %v3904 = vsel %vm3901, %v3903, %v3899
        %v3905 = vmul.f32 1.0, %v3904
        %v3906 = vxor.u32 %v3884, 2147483648
        %v3907 = vmul.f32 %v3906, 1.442695
        %v3908 = vpow.pop %v3907
        %v3909 = vadd.f32 %v3908, 1.0
        %v3910 = vrcp.pop %v3909
        %v3911 = vmul.f32 %v3909, %v3910
        %v3912 = vsub.f32 1.0, %v3911
        %v3913 = vmul.f32 %v3910, %v3912
        %v3914 = vadd.f32 %v3910, %v3913
        %vm3915 = vweird.f32 %v3909
        %vm3916 = vweird.f32 %v3910
        %vm3917 = vmor %vm3915, %vm3916
        %v3918 = vsel %vm3917, %v3910, %v3914
        %v3919 = vand.u32 2147483647, %v3909
        %vm3920 = vcmp.eq.f32.partialorder %v3919, 8.507059e+37
        %v3921 = vand.u32 %v3909, 2147483648
        %v3922 = vor.u32 1.1754944e-38, %v3921
        %v3923 = vsel %vm3920, %v3922, %v3918
        %v3924 = vmul.f32 1.0, %v3923
        %v3925 = vtanh.pop %v3885
        %v3926 = vxor.u32 %v3886, 2147483648
        %v3927 = vmul.f32 %v3926, 1.442695
        %v3928 = vpow.pop %v3927
        %v3929 = vadd.f32 %v3928, 1.0
        %v3930 = vrcp.pop %v3929
        %v3931 = vmul.f32 %v3929, %v3930
        %v3932 = vsub.f32 1.0, %v3931
        %v3933 = vmul.f32 %v3930, %v3932
        %v3934 = vadd.f32 %v3930, %v3933
        %vm3935 = vweird.f32 %v3929
        %vm3936 = vweird.f32 %v3930
        %vm3937 = vmor %vm3935, %vm3936
        %v3938 = vsel %vm3937, %v3930, %v3934
        %v3939 = vand.u32 2147483647, %v3929
        %vm3940 = vcmp.eq.f32.partialorder %v3939, 8.507059e+37
        %v3941 = vand.u32 %v3929, 2147483648
        %v3942 = vor.u32 1.1754944e-38, %v3941
        %v3943 = vsel %vm3940, %v3942, %v3938
        %v3944 = vmul.f32 1.0, %v3943
        %v3945 = vmul.f32 %v3924, %v3823
        %v3946 = vmul.f32 %v3905, %v3925
        %v3947 = vadd.f32 %v3945, %v3946
        %v3948 = vtanh.pop %v3947
        %v3949 = vmul.f32 %v3944, %v3948
        %v3950 = vpack.c.bf16 %v3949, %v3949
        %v3951 = vld [vmem:[%s1407] sm:$0xff]
        %v3952 = vld [vmem:[%s1407 + $0x8] sm:$0xff]
        %v3953 = vld [vmem:[%s1407 + $0x10] sm:$0xff]
        %v3954 = vld [vmem:[%s1407 + $0x18] sm:$0xff]
        %3955 = vmatpush.bf16.msra.mxu0 %v3175
        %3956 = vmatpush.bf16.msra.mxu0 %v3171
        %3957 = vmatpush.bf16.msra.mxu0 %v3167
        %3958 = vmatpush.bf16.msra.mxu0 %v3163
        %3959 = vmatpush.bf16.msra.mxu0 %v3159
        %3960 = vmatpush.bf16.msra.mxu0 %v3155
        %3961 = vmatpush.bf16.msra.mxu0 %v3151
        %3962 = vmatpush.bf16.msra.mxu0 %v3147
        %3963 = vmatmul.bf16.gmra.mxu0 %v3950
        %v3964 = vpop.f32.mrf.mxu0
        %v3965 = vadd.f32 %v3951, %v3964
        %v3966 = vpop.f32.mrf.mxu0
        %3967 = vdwg.mxu0
        %3968 = vmatpush.bf16.msra.mxu0 %v3176
        %3969 = vmatpush.bf16.msra.mxu0 %v3172
        %3970 = vmatpush.bf16.msra.mxu0 %v3168
        %3971 = vmatpush.bf16.msra.mxu0 %v3164
        %3972 = vmatpush.bf16.msra.mxu0 %v3160
        %3973 = vmatpush.bf16.msra.mxu0 %v3156
        %3974 = vmatpush.bf16.msra.mxu0 %v3152
        %3975 = vmatpush.bf16.msra.mxu0 %v3148
        %3976 = vmatmul.bf16.gmra.mxu0 %v3950
        %v3977 = vpop.f32.mrf.mxu0
        %v3978 = vadd.f32 %v3952, %v3977
        %v3979 = vpop.f32.mrf.mxu0
        %3980 = vdwg.mxu0
        %3981 = vmatpush.bf16.msra.mxu0 %v3177
        %3982 = vmatpush.bf16.msra.mxu0 %v3173
        %3983 = vmatpush.bf16.msra.mxu0 %v3169
        %3984 = vmatpush.bf16.msra.mxu0 %v3165
        %3985 = vmatpush.bf16.msra.mxu0 %v3161
        %3986 = vmatpush.bf16.msra.mxu0 %v3157
        %3987 = vmatpush.bf16.msra.mxu0 %v3153
        %3988 = vmatpush.bf16.msra.mxu0 %v3149
        %3989 = vmatmul.bf16.gmra.mxu0 %v3950
        %v3990 = vpop.f32.mrf.mxu0
        %v3991 = vadd.f32 %v3953, %v3990
        %v3992 = vpop.f32.mrf.mxu0
        %3993 = vdwg.mxu0
        %3994 = vmatpush.bf16.msra.mxu0 %v3178
        %3995 = vmatpush.bf16.msra.mxu0 %v3174
        %3996 = vmatpush.bf16.msra.mxu0 %v3170
        %3997 = vmatpush.bf16.msra.mxu0 %v3166
        %3998 = vmatpush.bf16.msra.mxu0 %v3162
        %3999 = vmatpush.bf16.msra.mxu0 %v3158
        %4000 = vmatpush.bf16.msra.mxu0 %v3154
        %4001 = vmatpush.bf16.msra.mxu0 %v3150
        %4002 = vmatmul.bf16.gmra.mxu0 %v3950
        %v4003 = vpop.f32.mrf.mxu0
        %v4004 = vadd.f32 %v3954, %v4003
        %v4005 = vpop.f32.mrf.mxu0
        %4006 = vdwg.mxu0
        %v4007 = vadd.f32 %v3965, %v2714
        %v4008 = vadd.f32 %v3978, %v2715
        %v4009 = vadd.f32 %v3991, %v2716
        %v4010 = vadd.f32 %v4004, %v2717
        %v4011 = vxor.u32 %v4007, 2147483648
        %v4012 = vmul.f32 %v4011, 1.442695
        %v4013 = vpow.pop %v4012
        %v4014 = vadd.f32 %v4013, 1.0
        %v4015 = vrcp.pop %v4014
        %v4016 = vmul.f32 %v4014, %v4015
        %v4017 = vsub.f32 1.0, %v4016
        %v4018 = vmul.f32 %v4015, %v4017
        %v4019 = vadd.f32 %v4015, %v4018
        %vm4020 = vweird.f32 %v4014
        %vm4021 = vweird.f32 %v4015
        %vm4022 = vmor %vm4020, %vm4021
        %v4023 = vsel %vm4022, %v4015, %v4019
        %v4024 = vand.u32 2147483647, %v4014
        %vm4025 = vcmp.eq.f32.partialorder %v4024, 8.507059e+37
        %v4026 = vand.u32 %v4014, 2147483648
        %v4027 = vor.u32 1.1754944e-38, %v4026
        %v4028 = vsel %vm4025, %v4027, %v4023
        %v4029 = vmul.f32 1.0, %v4028
        %v4030 = vxor.u32 %v4008, 2147483648
        %v4031 = vmul.f32 %v4030, 1.442695
        %v4032 = vpow.pop %v4031
        %v4033 = vadd.f32 %v4032, 1.0
        %v4034 = vrcp.pop %v4033
        %v4035 = vmul.f32 %v4033, %v4034
        %v4036 = vsub.f32 1.0, %v4035
        %v4037 = vmul.f32 %v4034, %v4036
        %v4038 = vadd.f32 %v4034, %v4037
        %vm4039 = vweird.f32 %v4033
        %vm4040 = vweird.f32 %v4034
        %vm4041 = vmor %vm4039, %vm4040
        %v4042 = vsel %vm4041, %v4034, %v4038
        %v4043 = vand.u32 2147483647, %v4033
        %vm4044 = vcmp.eq.f32.partialorder %v4043, 8.507059e+37
        %v4045 = vand.u32 %v4033, 2147483648
        %v4046 = vor.u32 1.1754944e-38, %v4045
        %v4047 = vsel %vm4044, %v4046, %v4042
        %v4048 = vmul.f32 1.0, %v4047
        %v4049 = vtanh.pop %v4009
        %v4050 = vxor.u32 %v4010, 2147483648
        %v4051 = vmul.f32 %v4050, 1.442695
        %v4052 = vpow.pop %v4051
        %v4053 = vadd.f32 %v4052, 1.0
        %v4054 = vrcp.pop %v4053
        %v4055 = vmul.f32 %v4053, %v4054
        %v4056 = vsub.f32 1.0, %v4055
        %v4057 = vmul.f32 %v4054, %v4056
        %v4058 = vadd.f32 %v4054, %v4057
        %vm4059 = vweird.f32 %v4053
        %vm4060 = vweird.f32 %v4054
        %vm4061 = vmor %vm4059, %vm4060
        %v4062 = vsel %vm4061, %v4054, %v4058
        %v4063 = vand.u32 2147483647, %v4053
        %vm4064 = vcmp.eq.f32.partialorder %v4063, 8.507059e+37
        %v4065 = vand.u32 %v4053, 2147483648
        %v4066 = vor.u32 1.1754944e-38, %v4065
        %v4067 = vsel %vm4064, %v4066, %v4062
        %v4068 = vmul.f32 1.0, %v4067
        %v4069 = vmul.f32 %v4048, %v3947
        %v4070 = vmul.f32 %v4029, %v4049
        %v4071 = vadd.f32 %v4069, %v4070
        %v4072 = vtanh.pop %v4071
        %v4073 = vmul.f32 %v4068, %v4072
        %v4074 = vpack.c.bf16 %v4073, %v4073
        %v4075 = vld [vmem:[%s1472] sm:$0xff]
        %v4076 = vld [vmem:[%s1472 + $0x8] sm:$0xff]
        %v4077 = vld [vmem:[%s1472 + $0x10] sm:$0xff]
        %v4078 = vld [vmem:[%s1472 + $0x18] sm:$0xff]
        %4079 = vmatpush.bf16.msra.mxu0 %v3175
        %4080 = vmatpush.bf16.msra.mxu0 %v3171
        %4081 = vmatpush.bf16.msra.mxu0 %v3167
        %4082 = vmatpush.bf16.msra.mxu0 %v3163
        %4083 = vmatpush.bf16.msra.mxu0 %v3159
        %4084 = vmatpush.bf16.msra.mxu0 %v3155
        %4085 = vmatpush.bf16.msra.mxu0 %v3151
        %4086 = vmatpush.bf16.msra.mxu0 %v3147
        %4087 = vmatmul.bf16.gmra.mxu0 %v4074
        %v4088 = vpop.f32.mrf.mxu0
        %v4089 = vadd.f32 %v4075, %v4088
        %v4090 = vpop.f32.mrf.mxu0
        %4091 = vdwg.mxu0
        %4092 = vmatpush.bf16.msra.mxu0 %v3176
        %4093 = vmatpush.bf16.msra.mxu0 %v3172
        %4094 = vmatpush.bf16.msra.mxu0 %v3168
        %4095 = vmatpush.bf16.msra.mxu0 %v3164
        %4096 = vmatpush.bf16.msra.mxu0 %v3160
        %4097 = vmatpush.bf16.msra.mxu0 %v3156
        %4098 = vmatpush.bf16.msra.mxu0 %v3152
        %4099 = vmatpush.bf16.msra.mxu0 %v3148
        %4100 = vmatmul.bf16.gmra.mxu0 %v4074
        %v4101 = vpop.f32.mrf.mxu0
        %v4102 = vadd.f32 %v4076, %v4101
        %v4103 = vpop.f32.mrf.mxu0
        %4104 = vdwg.mxu0
        %4105 = vmatpush.bf16.msra.mxu0 %v3177
        %4106 = vmatpush.bf16.msra.mxu0 %v3173
        %4107 = vmatpush.bf16.msra.mxu0 %v3169
        %4108 = vmatpush.bf16.msra.mxu0 %v3165
        %4109 = vmatpush.bf16.msra.mxu0 %v3161
        %4110 = vmatpush.bf16.msra.mxu0 %v3157
        %4111 = vmatpush.bf16.msra.mxu0 %v3153
        %4112 = vmatpush.bf16.msra.mxu0 %v3149
        %4113 = vmatmul.bf16.gmra.mxu0 %v4074
        %v4114 = vpop.f32.mrf.mxu0
        %v4115 = vadd.f32 %v4077, %v4114
        %v4116 = vpop.f32.mrf.mxu0
        %4117 = vdwg.mxu0
        %4118 = vmatpush.bf16.msra.mxu0 %v3178
        %4119 = vmatpush.bf16.msra.mxu0 %v3174
        %4120 = vmatpush.bf16.msra.mxu0 %v3170
        %4121 = vmatpush.bf16.msra.mxu0 %v3166
        %4122 = vmatpush.bf16.msra.mxu0 %v3162
        %4123 = vmatpush.bf16.msra.mxu0 %v3158
        %4124 = vmatpush.bf16.msra.mxu0 %v3154
        %4125 = vmatpush.bf16.msra.mxu0 %v3150
        %4126 = vmatmul.bf16.gmra.mxu0 %v4074
        %v4127 = vpop.f32.mrf.mxu0
        %v4128 = vadd.f32 %v4078, %v4127
        %v4129 = vpop.f32.mrf.mxu0
        %4130 = vdwg.mxu0
        %v4131 = vadd.f32 %v4089, %v2714
        %v4132 = vadd.f32 %v4102, %v2715
        %v4133 = vadd.f32 %v4115, %v2716
        %v4134 = vadd.f32 %v4128, %v2717
        %v4135 = vxor.u32 %v4131, 2147483648
        %v4136 = vmul.f32 %v4135, 1.442695
        %v4137 = vpow.pop %v4136
        %v4138 = vadd.f32 %v4137, 1.0
        %v4139 = vrcp.pop %v4138
        %v4140 = vmul.f32 %v4138, %v4139
        %v4141 = vsub.f32 1.0, %v4140
        %v4142 = vmul.f32 %v4139, %v4141
        %v4143 = vadd.f32 %v4139, %v4142
        %vm4144 = vweird.f32 %v4138
        %vm4145 = vweird.f32 %v4139
        %vm4146 = vmor %vm4144, %vm4145
        %v4147 = vsel %vm4146, %v4139, %v4143
        %v4148 = vand.u32 2147483647, %v4138
        %vm4149 = vcmp.eq.f32.partialorder %v4148, 8.507059e+37
        %v4150 = vand.u32 %v4138, 2147483648
        %v4151 = vor.u32 1.1754944e-38, %v4150
        %v4152 = vsel %vm4149, %v4151, %v4147
        %v4153 = vmul.f32 1.0, %v4152
        %v4154 = vxor.u32 %v4132, 2147483648
        %v4155 = vmul.f32 %v4154, 1.442695
        %v4156 = vpow.pop %v4155
        %v4157 = vadd.f32 %v4156, 1.0
        %v4158 = vrcp.pop %v4157
        %v4159 = vmul.f32 %v4157, %v4158
        %v4160 = vsub.f32 1.0, %v4159
        %v4161 = vmul.f32 %v4158, %v4160
        %v4162 = vadd.f32 %v4158, %v4161
        %vm4163 = vweird.f32 %v4157
        %vm4164 = vweird.f32 %v4158
        %vm4165 = vmor %vm4163, %vm4164
        %v4166 = vsel %vm4165, %v4158, %v4162
        %v4167 = vand.u32 2147483647, %v4157
        %vm4168 = vcmp.eq.f32.partialorder %v4167, 8.507059e+37
        %v4169 = vand.u32 %v4157, 2147483648
        %v4170 = vor.u32 1.1754944e-38, %v4169
        %v4171 = vsel %vm4168, %v4170, %v4166
        %v4172 = vmul.f32 1.0, %v4171
        %v4173 = vtanh.pop %v4133
        %v4174 = vxor.u32 %v4134, 2147483648
        %v4175 = vmul.f32 %v4174, 1.442695
        %v4176 = vpow.pop %v4175
        %v4177 = vadd.f32 %v4176, 1.0
        %v4178 = vrcp.pop %v4177
        %v4179 = vmul.f32 %v4177, %v4178
        %v4180 = vsub.f32 1.0, %v4179
        %v4181 = vmul.f32 %v4178, %v4180
        %v4182 = vadd.f32 %v4178, %v4181
        %vm4183 = vweird.f32 %v4177
        %vm4184 = vweird.f32 %v4178
        %vm4185 = vmor %vm4183, %vm4184
        %v4186 = vsel %vm4185, %v4178, %v4182
        %v4187 = vand.u32 2147483647, %v4177
        %vm4188 = vcmp.eq.f32.partialorder %v4187, 8.507059e+37
        %v4189 = vand.u32 %v4177, 2147483648
        %v4190 = vor.u32 1.1754944e-38, %v4189
        %v4191 = vsel %vm4188, %v4190, %v4186
        %v4192 = vmul.f32 1.0, %v4191
        %v4193 = vmul.f32 %v4172, %v4071
        %v4194 = vmul.f32 %v4153, %v4173
        %v4195 = vadd.f32 %v4193, %v4194
        %v4196 = vtanh.pop %v4195
        %v4197 = vmul.f32 %v4192, %v4196
        %4198 = vst [vmem:[%s3042] sm:$0xff] %v4197
        %4199 = vst [vmem:[%s3044] sm:$0xff] %v4195
        %p4200 = scmp.eq.s32.totalorder %s31, 1
        // Predicated region
        $region109: #{tpu_custom_call.1} parent=67 // pred_check
          %p4201 = pneg %p4200
        $region110: #{tpu_custom_call.1} parent=67 // pred_check_branch
          %4203 = sbr.rel (%p4201) target = $region112
        $region111: #{tpu_custom_call.1} parent=67 // pred_region
          %v4204 = vld [vmem:[%s3042] sm:$0xff]
          %v4205 = vpack.c.bf16 %v4204, %v4204
          %v4206 = vld [vmem:[#allocation18] sm:$0xf]
          %v4207 = vld [vmem:[#allocation18 + $0x4] sm:$0xf]
          %v4208 = vld [vmem:[#allocation18 + $0x8] sm:$0xf]
          %v4209 = vld [vmem:[#allocation18 + $0xc] sm:$0xf]
          %v4210 = vld [vmem:[#allocation18 + $0x10] sm:$0xf]
          %v4211 = vld [vmem:[#allocation18 + $0x14] sm:$0xf]
          %v4212 = vld [vmem:[#allocation18 + $0x18] sm:$0xf]
          %v4213 = vld [vmem:[#allocation18 + $0x1c] sm:$0xf]
          %v4214 = vld [vmem:[#allocation18 + $0x20] sm:$0xf]
          %v4215 = vld [vmem:[#allocation18 + $0x24] sm:$0xf]
          %v4216 = vld [vmem:[#allocation18 + $0x28] sm:$0xf]
          %v4217 = vld [vmem:[#allocation18 + $0x2c] sm:$0xf]
          %v4218 = vld [vmem:[#allocation18 + $0x30] sm:$0xf]
          %v4219 = vld [vmem:[#allocation18 + $0x34] sm:$0xf]
          %v4220 = vld [vmem:[#allocation18 + $0x38] sm:$0xf]
          %v4221 = vld [vmem:[#allocation18 + $0x3c] sm:$0xf]
          %v4222 = vld [vmem:[%s8] sm:$0x1]
          %v4224 = vperm.slane %v4222, 0
          %v4242 = vunpack.c.l.b16 %v4206
          %v4243 = vunpack.c.l.b16 %v4207
          %v4244 = vunpack.c.l.b16 %v4208
          %v4245 = vunpack.c.l.b16 %v4209
          %v4246 = vunpack.c.l.b16 %v4210
          %v4247 = vunpack.c.l.b16 %v4211
          %v4248 = vunpack.c.l.b16 %v4212
          %v4249 = vunpack.c.l.b16 %v4213
          %v4250 = vunpack.c.l.b16 %v4214
          %v4251 = vunpack.c.l.b16 %v4215
          %v4252 = vunpack.c.l.b16 %v4216
          %v4253 = vunpack.c.l.b16 %v4217
          %v4254 = vunpack.c.l.b16 %v4218
          %v4255 = vunpack.c.l.b16 %v4219
          %v4256 = vunpack.c.l.b16 %v4220
          %v4257 = vunpack.c.l.b16 %v4221
          %v4258 = vpack.c.b16 %v4243, %v4242
          %v4259 = vpack.c.b16 %v4245, %v4244
          %v4260 = vpack.c.b16 %v4247, %v4246
          %v4261 = vpack.c.b16 %v4249, %v4248
          %v4262 = vpack.c.b16 %v4251, %v4250
          %v4263 = vpack.c.b16 %v4253, %v4252
          %v4264 = vpack.c.b16 %v4255, %v4254
          %v4265 = vpack.c.b16 %v4257, %v4256
          %4274 = vmatpush.bf16.msra.mxu0 %v4265
          %4275 = vmatpush.bf16.msra.mxu0 %v4264
          %4276 = vmatpush.bf16.msra.mxu0 %v4263
          %4277 = vmatpush.bf16.msra.mxu0 %v4262
          %4278 = vmatpush.bf16.msra.mxu0 %v4261
          %4279 = vmatpush.bf16.msra.mxu0 %v4260
          %4280 = vmatpush.bf16.msra.mxu0 %v4259
          %4281 = vmatpush.bf16.msra.mxu0 %v4258
          %4282 = vmatmul.bf16.gmra.mxu0 %v4205
          %v4283 = vpop.f32.mrf.mxu0
          %v4284 = vadd.f32 %v4224, %v4283
          %v4285 = vpop.f32.mrf.mxu0
          %4286 = vdwg.mxu0
          %v4287 = vmax.f32 %v4284, 0.0
          %v4288 = vld [vmem:[%s11] sm:$0xff]
          %v4289 = vmul.f32 %v4287, %v4288
          %v4290 = vpack.c.bf16 %v4289, %v4289
          %v4291 = vld [vmem:[#allocation20] sm:$0xf]
          %v4292 = vld [vmem:[#allocation20 + $0x4] sm:$0xf]
          %v4293 = vld [vmem:[#allocation20 + $0x8] sm:$0xf]
          %v4294 = vld [vmem:[#allocation20 + $0xc] sm:$0xf]
          %v4295 = vld [vmem:[#allocation20 + $0x10] sm:$0xf]
          %v4296 = vld [vmem:[#allocation20 + $0x14] sm:$0xf]
          %v4297 = vld [vmem:[#allocation20 + $0x18] sm:$0xf]
          %v4298 = vld [vmem:[#allocation20 + $0x1c] sm:$0xf]
          %v4299 = vld [vmem:[#allocation20 + $0x20] sm:$0xf]
          %v4300 = vld [vmem:[#allocation20 + $0x24] sm:$0xf]
          %v4301 = vld [vmem:[#allocation20 + $0x28] sm:$0xf]
          %v4302 = vld [vmem:[#allocation20 + $0x2c] sm:$0xf]
          %v4303 = vld [vmem:[#allocation20 + $0x30] sm:$0xf]
          %v4304 = vld [vmem:[#allocation20 + $0x34] sm:$0xf]
          %v4305 = vld [vmem:[#allocation20 + $0x38] sm:$0xf]
          %v4306 = vld [vmem:[#allocation20 + $0x3c] sm:$0xf]
          %v4307 = vld [vmem:[%s10] sm:$0x1]
          %v4309 = vperm.slane %v4307, 0
          %v4327 = vunpack.c.l.b16 %v4291
          %v4328 = vunpack.c.l.b16 %v4292
          %v4329 = vunpack.c.l.b16 %v4293
          %v4330 = vunpack.c.l.b16 %v4294
          %v4331 = vunpack.c.l.b16 %v4295
          %v4332 = vunpack.c.l.b16 %v4296
          %v4333 = vunpack.c.l.b16 %v4297
          %v4334 = vunpack.c.l.b16 %v4298
          %v4335 = vunpack.c.l.b16 %v4299
          %v4336 = vunpack.c.l.b16 %v4300
          %v4337 = vunpack.c.l.b16 %v4301
          %v4338 = vunpack.c.l.b16 %v4302
          %v4339 = vunpack.c.l.b16 %v4303
          %v4340 = vunpack.c.l.b16 %v4304
          %v4341 = vunpack.c.l.b16 %v4305
          %v4342 = vunpack.c.l.b16 %v4306
          %v4343 = vpack.c.b16 %v4328, %v4327
          %v4344 = vpack.c.b16 %v4330, %v4329
          %v4345 = vpack.c.b16 %v4332, %v4331
          %v4346 = vpack.c.b16 %v4334, %v4333
          %v4347 = vpack.c.b16 %v4336, %v4335
          %v4348 = vpack.c.b16 %v4338, %v4337
          %v4349 = vpack.c.b16 %v4340, %v4339
          %v4350 = vpack.c.b16 %v4342, %v4341
          %4359 = vmatpush.bf16.msra.mxu0 %v4350
          %4360 = vmatpush.bf16.msra.mxu0 %v4349
          %4361 = vmatpush.bf16.msra.mxu0 %v4348
          %4362 = vmatpush.bf16.msra.mxu0 %v4347
          %4363 = vmatpush.bf16.msra.mxu0 %v4346
          %4364 = vmatpush.bf16.msra.mxu0 %v4345
          %4365 = vmatpush.bf16.msra.mxu0 %v4344
          %4366 = vmatpush.bf16.msra.mxu0 %v4343
          %4367 = vmatmul.bf16.gmra.mxu0 %v4290
          %v4368 = vpop.f32.mrf.mxu0
          %v4369 = vadd.f32 %v4309, %v4368
          %v4370 = vpop.f32.mrf.mxu0
          %4371 = vdwg.mxu0
          %4372 = vst [vmem:[#allocation21] sm:$0xff] %v4369
        $region112: #{tpu_custom_call.1} parent=67 // pred_fallthru
          _
        // Predicated region
        $region113: #{tpu_custom_call.1} parent=67 // pred_check
          %p4373 = pneg %p301
        $region114: #{tpu_custom_call.1} parent=67 // pred_check_branch
          %4375 = sbr.rel (%p4373) target = $region116
        $region115: #{tpu_custom_call.1} parent=67 // pred_region
          %4377 = vsyncadd [#allocation8], 0
          %s4379 = sshll.u32 [#allocation21], 4
          %s4380 = int_to_ptr.vmem [resolvable:$true] %s4379
          %s4381 = sshll.u32 %s12, 4
          %s4382 = int_to_ptr.hbm [resolvable:$true] %s4381
          %4384 = dma.vmem_to_hbm [thread:$0]  %s4380, 128, %s4382, [#allocation8]
        $region116: #{tpu_custom_call.1} parent=67 // pred_fallthru
          _
        // Predicated region
        $region117: #{tpu_custom_call.1} parent=67 // pred_check
          %p4385 = pneg %p301
        $region118: #{tpu_custom_call.1} parent=67 // pred_check_branch
          %4387 = sbr.rel (%p4385) target = $region120
        $region119: #{tpu_custom_call.1} parent=67 // pred_region
          %4389 = dma.done [#allocation8], 128
        $region120: #{tpu_custom_call.1} parent=67 // pred_fallthru
          _
      $region68: #{tpu_custom_call.1} parent=5 // pred_fallthru
        _
      %p4390 = scmp.le.s32.totalorder 2, %s26
      // Predicated region
      $region121: #{tpu_custom_call.1} parent=5 // pred_check
        %p4391 = pneg %p4390
      $region122: #{tpu_custom_call.1} parent=5 // pred_check_branch
        %4393 = sbr.rel (%p4391) target = $region124
      $region123: #{tpu_custom_call.1} parent=5 // pred_region
        %s4394 = ssub.s32 %s26, 2
      $region124: #{tpu_custom_call.1} parent=5 // pred_fallthru
        _
    $region6: #{tpu_custom_call.1} parent=1 // loop_footer
      %s30 = sadd.s32 1, %s26
    $region7: #{tpu_custom_call.1} parent=1 // loop_footer_branch
      %25 = sbr.rel target = $region3
    $region8: #{tpu_custom_call.1} parent=1 // loop_exit
      _
    %4395 = vsyncpa [#allocation7], 1
    %s4396 = scalar_lea.sflag [#allocation7], 1
    %4397 = vsyncpa %s4396, 1
    %4398 = vsyncpa [#allocation10], 1
    %4399 = vsyncpa [#allocation13], 1
    %4400 = vsyncpa [#allocation16], 1
    %4401 = vsyncpa [#allocation19], 1
    %4402 = vsyncpa [#allocation8], 1
    %s4403 = scalar_lea.sflag [#allocation8], 1
    %4404 = vsyncpa %s4403, 1

</llo_original>
